<compile_context>
chip_gen: v7x
topology: tpu7x:2x2x1
jax: 0.10.0
libtpu: 0.0.40
codegen_flags: <defaults>
</compile_context>

<pallas_src>
import math

import numpy as np
import jax
import jax.numpy as jnp
from jax.experimental import pallas as pl
from jax.experimental.pallas import tpu as pltpu

# --- model dims --------------------------------------------------------------
X_DIM = 16      # x_shape (state dim)
Y_DIM = 8       # y_dim (action dim)
EMBED = 32      # embed_dim
HID   = 32      # n_hidden
OUT   = Y_DIM   # output_dim defaults to y_dim

GROUP = 8                     # original Model_mlp batch: BN couples these 8 rows
ROW_BLOCK = 128               # rows per grid block = 16 stacked groups (v5e MXU tile)

NE       = 3 * EMBED          # 96  = width of fused embedding output
ACT_W    = 32                 # packed activation width: [x | y | t | cm | pad]
CM_COL   = X_DIM + Y_DIM + 1  # 25  = column of the context mask in act
YT_COLS  = 2 * HID + OUT      # 72  = fused (y,t)-contrib width (fc2|fc3|fc4)
C_YT     = 128                # lane-aligned start of the yt cols in the fused act output
W_COLS   = C_YT + YT_COLS     # 200
INV_1414 = 1.0 / 1.414

# --- weight-slab row offsets (every segment starts on a multiple of 8) -------
R_ACT  = 0      # 32 rows : fused act weights (embed layer-1 block-diag + yt parts)
R_EMB2 = 32     # 96 rows : block-diag second Linear of x/y/t
R_F1   = 128    # 96 rows : fc1 Linear
R_F2H  = 224    # 32 rows : fc2 Linear, hidden part
R_F3H  = 256    # 32 rows : fc3 Linear, hidden part
R_F4H  = 288    # 32 rows : fc4 Linear, hidden part
W_ROWS = 320

# --- vector-slab rows (biases / BN params), width W_COLS ---------------------
(V_BACT, V_BE2, V_F1B, V_F1G, V_F1BE,
 V_F2G, V_F2BE, V_F3G, V_F3BE) = range(9)
V_ROWS = 16


# --- in-kernel helpers --------------------------------------------------------
def _gelu(v):
    # exact GELU, matching torch.nn.GELU() default
    return 0.5 * v * (1.0 + jax.lax.erf(v * (1.0 / math.sqrt(2.0))))


def _leaky_relu(v):
    # torch.nn.LeakyReLU default negative_slope = 0.01
    return jnp.where(v >= 0, v, 0.01 * v)


# --- the kernel: fc forward for one block of ROW_BLOCK rows -------------------
def model_mlp_fc_kernel(act_ref, w_ref, v_ref, gavg_ref, out_ref):
    act = act_ref[...]                                   # [RB, 32] = [x|y|t|cm|0]
    gavg = gavg_ref[...]                                 # [RB, RB] group-averaging matrix
    cm = act[:, CM_COL:CM_COL + 1]                       # [RB, 1]

    dot = lambda a, w: jnp.dot(a, w, preferred_element_type=jnp.float32)
    col = jax.lax.broadcasted_iota(jnp.int32, (1, NE), 1)   # column index 0..95

    # --- one fused act matmul: embedding layer-1 (cols 0:96, block-diagonal)
    #     and the (y,t) contributions + biases of fc2/fc3/fc4 (cols 128:200).
    z = dot(act, w_ref[R_ACT:R_ACT + ACT_W, :]) + v_ref[V_BACT:V_BACT + 1, :]

    # embedding branch: LeakyReLU on x/y slices (cols 0:64), sin on TimeSiren (64:96)
    h = z[:, 0:NE]
    h = jnp.where(col < 2 * EMBED, _leaky_relu(h), jnp.sin(h))
    # second Linears (block-diagonal) -> already the concatenated [x_e|y_e|t_e]
    e = dot(h, w_ref[R_EMB2:R_EMB2 + NE, 0:NE]) + v_ref[V_BE2:V_BE2 + 1, 0:NE]
    # context mask on the x_e slice only:  x_e *= (cm - 1) == -1*(1 - cm)
    net_in = e * jnp.where(col < EMBED, cm - 1.0, jnp.float32(1.0))

    def bn(a, row_g, row_b):
        # nn.BatchNorm1d in training mode, statistics per original GROUP-row
        # batch.  Per-group mean / biased variance are computed with the
        # constant group-averaging matmul (MXU) rather than sublane reduces.
        mu = dot(gavg, a)
        d = a - mu
        var = dot(gavg, d * d)
        g = v_ref[row_g:row_g + 1, 0:HID]
        b = v_ref[row_b:row_b + 1, 0:HID]
        return d * jax.lax.rsqrt(var + 1e-5) * g + b

    # --- fc1: Linear + BatchNorm1d + GELU ---
    a1 = dot(net_in, w_ref[R_F1:R_F1 + NE, 0:HID]) + v_ref[V_F1B:V_F1B + 1, 0:HID]
    nn1 = _gelu(bn(a1, V_F1G, V_F1BE))

    # --- fc2 block with residual / 1.414 (scale hoisted) ---
    nn1_s = nn1 * INV_1414
    a2 = dot(nn1_s, w_ref[R_F2H:R_F2H + HID, 0:HID]) + z[:, C_YT:C_YT + HID]
    nn2 = _gelu(bn(a2, V_F2G, V_F2BE)) + nn1_s

    # --- fc3 block with residual / 1.414 ---
    nn2_s = nn2 * INV_1414
    a3 = dot(nn2_s, w_ref[R_F3H:R_F3H + HID, 0:HID]) + z[:, C_YT + HID:C_YT + 2 * HID]
    nn3 = _gelu(bn(a3, V_F3G, V_F3BE)) + nn2_s

    # --- fc4: plain Linear to output_dim ---
    out_ref[...] = (dot(nn3, w_ref[R_F4H:R_F4H + HID, 0:OUT])
                    + z[:, C_YT + 2 * HID:C_YT + 2 * HID + OUT])


# --- parameter init (deterministic, PyTorch-Linear-style uniform) ------------
def _linear_params(key, fan_in, fan_out, bias=True):
    kw, kb = jax.random.split(key)
    bound = 1.0 / math.sqrt(fan_in)
    w = jax.random.uniform(kw, (fan_in, fan_out), jnp.float32, -bound, bound)
    if not bias:
        return [w]
    b = jax.random.uniform(kb, (1, fan_out), jnp.float32, -bound, bound)
    return [w, b]


def init_raw_params(key):
    keys = jax.random.split(key, 10)
    p = []
    # x_embed_nn: Linear(16,32), Linear(32,32)
    p += _linear_params(keys[0], X_DIM, EMBED)
    p += _linear_params(keys[1], EMBED, EMBED)
    # y_embed_nn: Linear(8,32), Linear(32,32)
    p += _linear_params(keys[2], Y_DIM, EMBED)
    p += _linear_params(keys[3], EMBED, EMBED)
    # t_embed_nn (TimeSiren): lin1 (no bias), lin2
    p += _linear_params(keys[4], 1, EMBED, bias=False)
    p += _linear_params(keys[5], EMBED, EMBED)
    # fc1 (FCBlock): Linear(96,32) + BN(gamma=1, beta=0)
    p += _linear_params(keys[6], 3 * EMBED, HID)
    p += [jnp.ones((1, HID), jnp.float32), jnp.zeros((1, HID), jnp.float32)]
    # fc2 (FCBlock): Linear(41,32) + BN
    p += _linear_params(keys[7], HID + Y_DIM + 1, HID)
    p += [jnp.ones((1, HID), jnp.float32), jnp.zeros((1, HID), jnp.float32)]
    # fc3 (FCBlock): Linear(41,32) + BN
    p += _linear_params(keys[8], HID + Y_DIM + 1, HID)
    p += [jnp.ones((1, HID), jnp.float32), jnp.zeros((1, HID), jnp.float32)]
    # fc4: Linear(41,8)
    p += _linear_params(keys[9], HID + Y_DIM + 1, OUT)
    return p


def pack_params(raw):
    (xw1, xb1, xw2, xb2,
     yw1, yb1, yw2, yb2,
     tw1, tw2, tb2,
     f1w, f1b, f1g, f1be,
     f2w, f2b, f2g, f2be,
     f3w, f3b, f3g, f3be,
     f4w, f4b) = raw

    w = jnp.zeros((W_ROWS, W_COLS), jnp.float32)
    # fused act weights: block-diag first Linears (rows follow act columns)
    w = w.at[R_ACT:R_ACT + X_DIM, 0:EMBED].set(xw1)
    w = w.at[R_ACT + X_DIM:R_ACT + X_DIM + Y_DIM, EMBED:2 * EMBED].set(yw1)
    w = w.at[R_ACT + X_DIM + Y_DIM, 2 * EMBED:3 * EMBED].set(tw1[0])
    # fused (y, t) parts of fc2/fc3/fc4 (same LHS rows, lane-aligned at C_YT)
    r0 = R_ACT + X_DIM
    w = w.at[r0:r0 + Y_DIM + 1, C_YT:C_YT + HID].set(f2w[HID:, :])
    w = w.at[r0:r0 + Y_DIM + 1, C_YT + HID:C_YT + 2 * HID].set(f3w[HID:, :])
    w = w.at[r0:r0 + Y_DIM + 1, C_YT + 2 * HID:C_YT + 2 * HID + OUT].set(f4w[HID:, :])
    # block-diag second Linears
    w = w.at[R_EMB2:R_EMB2 + EMBED, 0:EMBED].set(xw2)
    w = w.at[R_EMB2 + EMBED:R_EMB2 + 2 * EMBED, EMBED:2 * EMBED].set(yw2)
    w = w.at[R_EMB2 + 2 * EMBED:R_EMB2 + 3 * EMBED, 2 * EMBED:3 * EMBED].set(tw2)
    # fc1
    w = w.at[R_F1:R_F1 + NE, 0:HID].set(f1w)
    # fc2/fc3/fc4 hidden-input parts
    w = w.at[R_F2H:R_F2H + HID, 0:HID].set(f2w[0:HID, :])
    w = w.at[R_F3H:R_F3H + HID, 0:HID].set(f3w[0:HID, :])
    w = w.at[R_F4H:R_F4H + HID, 0:OUT].set(f4w[0:HID, :])

    v = jnp.zeros((V_ROWS, W_COLS), jnp.float32)
    # fused act bias row: embed layer-1 biases + fc2/fc3/fc4 biases folded in
    v = v.at[V_BACT, 0:EMBED].set(xb1[0])
    v = v.at[V_BACT, EMBED:2 * EMBED].set(yb1[0])           # t lin1 has no bias
    v = v.at[V_BACT, C_YT:C_YT + HID].set(f2b[0])
    v = v.at[V_BACT, C_YT + HID:C_YT + 2 * HID].set(f3b[0])
    v = v.at[V_BACT, C_YT + 2 * HID:C_YT + 2 * HID + OUT].set(f4b[0])
    # embed layer-2 biases
    v = v.at[V_BE2, 0:EMBED].set(xb2[0])
    v = v.at[V_BE2, EMBED:2 * EMBED].set(yb2[0])
    v = v.at[V_BE2, 2 * EMBED:3 * EMBED].set(tb2[0])
    # fc1 bias + BN params, fc2/fc3 BN params
    v = v.at[V_F1B, 0:HID].set(f1b[0])
    v = v.at[V_F1G, 0:HID].set(f1g[0])
    v = v.at[V_F1BE, 0:HID].set(f1be[0])
    v = v.at[V_F2G, 0:HID].set(f2g[0])
    v = v.at[V_F2BE, 0:HID].set(f2be[0])
    v = v.at[V_F3G, 0:HID].set(f3g[0])
    v = v.at[V_F3BE, 0:HID].set(f3be[0])
    return w, v


def make_group_avg(row_block=ROW_BLOCK, group=GROUP):
    # Block-diagonal group-averaging matrix: gavg @ a == per-8-row-group mean
    # of `a`, broadcast back to the rows of that group.
    idx = np.arange(row_block)
    m = (idx[:, None] // group == idx[None, :] // group).astype(np.float32) / group
    return jnp.asarray(m)


# --- wrapper ------------------------------------------------------------------
@jax.jit
def model_mlp_forward(y, x, t, context_mask, w_slab, v_slab, group_avg):
    n = y.shape[0]                      # n = (#independent 8-row forward calls) * 8
    pad_w = ACT_W - (X_DIM + Y_DIM + 2)
    act = jnp.concatenate(
        [x, y, t, context_mask, jnp.zeros((n, pad_w), jnp.float32)], axis=1)  # [n, 32]

    n_blocks = -(-n // ROW_BLOCK)       # cdiv
    n_pad = n_blocks * ROW_BLOCK
    if n_pad != n:
        act = jnp.pad(act, ((0, n_pad - n), (0, 0)))

    out = pl.pallas_call(
        model_mlp_fc_kernel,
        out_shape=jax.ShapeDtypeStruct((n_pad, OUT), jnp.float32),
        grid=(n_blocks,),
        in_specs=[
            # streaming activation block
            pl.BlockSpec((ROW_BLOCK, ACT_W), lambda i: (i, 0)),
            # resident parameter slabs / group-averaging matrix: constant block
            # index -> DMA'd into VMEM once, reused across all grid steps
            pl.BlockSpec((W_ROWS, W_COLS), lambda i: (0, 0)),
            pl.BlockSpec((V_ROWS, W_COLS), lambda i: (0, 0)),
            pl.BlockSpec((ROW_BLOCK, ROW_BLOCK), lambda i: (0, 0)),
        ],
        out_specs=pl.BlockSpec((ROW_BLOCK, OUT), lambda i: (i, 0)),
        compiler_params=pltpu.CompilerParams(
            dimension_semantics=("parallel",)),     # v7x: shard across both TCs
    )(act, w_slab, v_slab, group_avg)
    return out[:n]


# --- plain-JAX reference (mirrors the PyTorch graph for one 8-row call) ------
def reference_forward(y, x, t, cm, raw):
    (xw1, xb1, xw2, xb2, yw1, yb1, yw2, yb2, tw1, tw2, tb2,
     f1w, f1b, f1g, f1be, f2w, f2b, f2g, f2be, f3w, f3b, f3g, f3be,
     f4w, f4b) = raw
    hp = jax.lax.Precision.HIGHEST
    dot = lambda a, w: jnp.dot(a, w, precision=hp)
    leaky = lambda v: jnp.where(v >= 0, v, 0.01 * v)
    gelu = lambda v: 0.5 * v * (1.0 + jax.lax.erf(v * (1.0 / math.sqrt(2.0))))

    def bn(v, g, b):
        mu = jnp.mean(v, axis=0, keepdims=True)
        var = jnp.mean((v - mu) ** 2, axis=0, keepdims=True)
        return (v - mu) * jax.lax.rsqrt(var + 1e-5) * g + b

    x_e = dot(leaky(dot(x, xw1) + xb1), xw2) + xb2
    y_e = dot(leaky(dot(y, yw1) + yb1), yw2) + yb2
    t_e = dot(jnp.sin(t * tw1), tw2) + tb2
    x_e = x_e * (-1.0 * (1.0 - cm))
    net_in = jnp.concatenate([x_e, y_e, t_e], axis=1)
    nn1 = gelu(bn(dot(net_in, f1w) + f1b, f1g, f1be))
    nn2 = gelu(bn(dot(jnp.concatenate([nn1 / 1.414, y, t], axis=1), f2w) + f2b,
                  f2g, f2be)) + nn1 / 1.414
    nn3 = gelu(bn(dot(jnp.concatenate([nn2 / 1.414, y, t], axis=1), f3w) + f3b,
                  f3g, f3be)) + nn2 / 1.414
    return dot(jnp.concatenate([nn3, y, t], axis=1), f4w) + f4b


if __name__ == "__main__":
    key = jax.random.PRNGKey(0)
    k_y, k_x, k_t, k_m, k_p = jax.random.split(key, 5)

    n_calls = 64                 # independent forward calls (e.g. diffusion steps)
    n = n_calls * GROUP          # 512 rows total, 4 grid blocks of 128

    y = jax.random.normal(k_y, (n, Y_DIM), jnp.float32)
    x = jax.random.normal(k_x, (n, X_DIM), jnp.float32)
    t = jax.random.uniform(k_t, (n, 1), jnp.float32)
    context_mask = jax.random.bernoulli(k_m, 0.5, (n, 1)).astype(jnp.float32)

    raw = init_raw_params(k_p)
    w_slab, v_slab = pack_params(raw)
    group_avg = make_group_avg()

    out = model_mlp_forward(y, x, t, context_mask, w_slab, v_slab, group_avg)
    out = jax.block_until_ready(out)

    assert out.shape == (n, OUT)
    assert bool(jnp.all(jnp.isfinite(out)))

    # reference: one training-mode-BN forward per independent 8-row call
    ref = jax.vmap(lambda yg, xg, tg, cg: reference_forward(yg, xg, tg, cg, raw))(
        y.reshape(-1, GROUP, Y_DIM), x.reshape(-1, GROUP, X_DIM),
        t.reshape(-1, GROUP, 1), context_mask.reshape(-1, GROUP, 1),
    ).reshape(n, OUT)
    np.testing.assert_allclose(np.asarray(out), np.asarray(ref), rtol=2e-2, atol=2e-2)

    print("KERNEL_OK")
</pallas_src>

<mosaic_0001>
module attributes {stable_mosaic.version = 11 : i64} {
  func.func @model_mlp_fc_kernel(%arg0: i32, %arg1: memref<128x32xf32, #tpu.memory_space<vmem>>, %arg2: memref<320x200xf32, #tpu.memory_space<vmem>>, %arg3: memref<16x200xf32, #tpu.memory_space<vmem>>, %arg4: memref<128x128xf32, #tpu.memory_space<vmem>>, %arg5: memref<128x8xf32, #tpu.memory_space<vmem>>) attributes {dimension_semantics = [#tpu.dimension_semantics<parallel>], iteration_bounds = array<i64: 4>, scalar_prefetch = 0 : i64, scratch_operands = 0 : i64, tpu.core_type = #tpu.core_type<tc>, window_params = [{transform_indices = @transform_0, window_bounds = array<i64: 128, 32>}, {pipeline_mode = #tpu.pipeline_mode<synchronous>, transform_indices = @transform_1, window_bounds = array<i64: 320, 200>}, {pipeline_mode = #tpu.pipeline_mode<synchronous>, transform_indices = @transform_2, window_bounds = array<i64: 16, 200>}, {pipeline_mode = #tpu.pipeline_mode<synchronous>, transform_indices = @transform_3, window_bounds = array<i64: 128, 128>}, {transform_indices = @transform_4, window_bounds = array<i64: 128, 8>}]} {
    %c0 = arith.constant 0 : index
    %c0_0 = arith.constant 0 : index
    %0 = vector.load %arg1[%c0, %c0_0] : memref<128x32xf32, #tpu.memory_space<vmem>>, vector<128x32xf32>
    %c0_1 = arith.constant 0 : index
    %c0_2 = arith.constant 0 : index
    %1 = vector.load %arg4[%c0_1, %c0_2] : memref<128x128xf32, #tpu.memory_space<vmem>>, vector<128x128xf32>
    %2 = vector.extract_strided_slice %0 {offsets = [0, 25], sizes = [128, 1], strides = [1, 1]} : vector<128x32xf32> to vector<128x1xf32>
    %3 = tpu.iota {dimensions = array<i32: 1>} : vector<1x96xi32>
    %c0_3 = arith.constant 0 : index
    %c0_4 = arith.constant 0 : index
    %4 = vector.load %arg2[%c0_3, %c0_4] : memref<320x200xf32, #tpu.memory_space<vmem>>, vector<32x200xf32>
    %cst = arith.constant dense<0.000000e+00> : vector<128x200xf32>
    %5 = tpu.matmul %0, %4, %cst {dimension_numbers = #tpu.dot_dimension_numbers<[1], [0], [0], [1], [0, 0, 1, 1], [], []>} : vector<128x32xf32>, vector<32x200xf32>, vector<128x200xf32> -> vector<128x200xf32>
    %c0_5 = arith.constant 0 : index
    %c0_6 = arith.constant 0 : index
    %6 = vector.load %arg3[%c0_5, %c0_6] : memref<16x200xf32, #tpu.memory_space<vmem>>, vector<1x200xf32>
    %7 = vector.broadcast %6 : vector<1x200xf32> to vector<128x200xf32>
    %8 = arith.addf %5, %7 : vector<128x200xf32>
    %9 = vector.extract_strided_slice %8 {offsets = [0, 0], sizes = [128, 96], strides = [1, 1]} : vector<128x200xf32> to vector<128x96xf32>
    %c64_i32 = arith.constant 64 : i32
    %10 = vector.broadcast %c64_i32 : i32 to vector<1x96xi32>
    %11 = arith.cmpi slt, %3, %10 : vector<1x96xi32>
    %cst_7 = arith.constant 0.000000e+00 : f32
    %12 = vector.broadcast %cst_7 : f32 to vector<128x96xf32>
    %13 = arith.cmpf oge, %9, %12 : vector<128x96xf32>
    %cst_8 = arith.constant 0.00999999977 : f32
    %14 = vector.broadcast %cst_8 : f32 to vector<128x96xf32>
    %15 = arith.mulf %14, %9 : vector<128x96xf32>
    %16 = arith.select %13, %9, %15 : vector<128x96xi1>, vector<128x96xf32>
    %17 = math.sin %9 : vector<128x96xf32>
    %18 = vector.shape_cast %11 : vector<1x96xi1> to vector<1x96xi1>
    %19 = vector.broadcast %18 : vector<1x96xi1> to vector<128x96xi1>
    %20 = arith.select %19, %16, %17 : vector<128x96xi1>, vector<128x96xf32>
    %c32 = arith.constant 32 : index
    %c0_9 = arith.constant 0 : index
    %21 = vector.load %arg2[%c32, %c0_9] : memref<320x200xf32, #tpu.memory_space<vmem>>, vector<96x96xf32>
    %cst_10 = arith.constant dense<0.000000e+00> : vector<128x96xf32>
    %22 = tpu.matmul %20, %21, %cst_10 {dimension_numbers = #tpu.dot_dimension_numbers<[1], [0], [0], [1], [0, 0, 1, 1], [], []>} : vector<128x96xf32>, vector<96x96xf32>, vector<128x96xf32> -> vector<128x96xf32>
    %c1 = arith.constant 1 : index
    %c0_11 = arith.constant 0 : index
    %23 = vector.load %arg3[%c1, %c0_11] : memref<16x200xf32, #tpu.memory_space<vmem>>, vector<1x96xf32>
    %24 = vector.broadcast %23 : vector<1x96xf32> to vector<128x96xf32>
    %25 = arith.addf %22, %24 : vector<128x96xf32>
    %c32_i32 = arith.constant 32 : i32
    %26 = vector.broadcast %c32_i32 : i32 to vector<1x96xi32>
    %27 = arith.cmpi slt, %3, %26 : vector<1x96xi32>
    %cst_12 = arith.constant 1.000000e+00 : f32
    %28 = vector.broadcast %cst_12 : f32 to vector<128x1xf32>
    %29 = arith.subf %2, %28 : vector<128x1xf32>
    %cst_13 = arith.constant 1.000000e+00 : f32
    %30 = vector.shape_cast %27 : vector<1x96xi1> to vector<1x96xi1>
    %31 = vector.broadcast %30 : vector<1x96xi1> to vector<128x96xi1>
    %32 = vector.shape_cast %29 : vector<128x1xf32> to vector<128x1xf32>
    %33 = vector.broadcast %32 : vector<128x1xf32> to vector<128x96xf32>
    %34 = vector.broadcast %cst_13 : f32 to vector<128x96xf32>
    %35 = arith.select %31, %33, %34 : vector<128x96xi1>, vector<128x96xf32>
    %36 = arith.mulf %25, %35 : vector<128x96xf32>
    %c128 = arith.constant 128 : index
    %c0_14 = arith.constant 0 : index
    %37 = vector.load %arg2[%c128, %c0_14] : memref<320x200xf32, #tpu.memory_space<vmem>>, vector<96x32xf32>
    %cst_15 = arith.constant dense<0.000000e+00> : vector<128x32xf32>
    %38 = tpu.matmul %36, %37, %cst_15 {dimension_numbers = #tpu.dot_dimension_numbers<[1], [0], [0], [1], [0, 0, 1, 1], [], []>} : vector<128x96xf32>, vector<96x32xf32>, vector<128x32xf32> -> vector<128x32xf32>
    %c2 = arith.constant 2 : index
    %c0_16 = arith.constant 0 : index
    %39 = vector.load %arg3[%c2, %c0_16] : memref<16x200xf32, #tpu.memory_space<vmem>>, vector<1x32xf32>
    %40 = vector.broadcast %39 : vector<1x32xf32> to vector<128x32xf32>
    %41 = arith.addf %38, %40 : vector<128x32xf32>
    %cst_17 = arith.constant dense<0.000000e+00> : vector<128x32xf32>
    %42 = tpu.matmul %1, %41, %cst_17 {dimension_numbers = #tpu.dot_dimension_numbers<[1], [0], [0], [1], [0, 0, 1, 1], [], []>} : vector<128x128xf32>, vector<128x32xf32>, vector<128x32xf32> -> vector<128x32xf32>
    %43 = arith.subf %41, %42 : vector<128x32xf32>
    %44 = arith.mulf %43, %43 : vector<128x32xf32>
    %cst_18 = arith.constant dense<0.000000e+00> : vector<128x32xf32>
    %45 = tpu.matmul %1, %44, %cst_18 {dimension_numbers = #tpu.dot_dimension_numbers<[1], [0], [0], [1], [0, 0, 1, 1], [], []>} : vector<128x128xf32>, vector<128x32xf32>, vector<128x32xf32> -> vector<128x32xf32>
    %c3 = arith.constant 3 : index
    %c0_19 = arith.constant 0 : index
    %46 = vector.load %arg3[%c3, %c0_19] : memref<16x200xf32, #tpu.memory_space<vmem>>, vector<1x32xf32>
    %c4 = arith.constant 4 : index
    %c0_20 = arith.constant 0 : index
    %47 = vector.load %arg3[%c4, %c0_20] : memref<16x200xf32, #tpu.memory_space<vmem>>, vector<1x32xf32>
    %cst_21 = arith.constant 9.99999974E-6 : f32
    %48 = vector.broadcast %cst_21 : f32 to vector<128x32xf32>
    %49 = arith.addf %45, %48 : vector<128x32xf32>
    %50 = math.rsqrt %49 : vector<128x32xf32>
    %51 = arith.mulf %43, %50 : vector<128x32xf32>
    %52 = vector.broadcast %46 : vector<1x32xf32> to vector<128x32xf32>
    %53 = arith.mulf %51, %52 : vector<128x32xf32>
    %54 = vector.broadcast %47 : vector<1x32xf32> to vector<128x32xf32>
    %55 = arith.addf %53, %54 : vector<128x32xf32>
    %cst_22 = arith.constant 5.000000e-01 : f32
    %56 = vector.broadcast %cst_22 : f32 to vector<128x32xf32>
    %57 = arith.mulf %56, %55 : vector<128x32xf32>
    %cst_23 = arith.constant 0.707106769 : f32
    %58 = vector.broadcast %cst_23 : f32 to vector<128x32xf32>
    %59 = arith.mulf %55, %58 : vector<128x32xf32>
    %60 = math.erf %59 : vector<128x32xf32>
    %cst_24 = arith.constant 1.000000e+00 : f32
    %61 = vector.broadcast %cst_24 : f32 to vector<128x32xf32>
    %62 = arith.addf %61, %60 : vector<128x32xf32>
    %63 = arith.mulf %57, %62 : vector<128x32xf32>
    %cst_25 = arith.constant 0.70721358 : f32
    %64 = vector.broadcast %cst_25 : f32 to vector<128x32xf32>
    %65 = arith.mulf %63, %64 : vector<128x32xf32>
    %c224 = arith.constant 224 : index
    %c0_26 = arith.constant 0 : index
    %66 = vector.load %arg2[%c224, %c0_26] : memref<320x200xf32, #tpu.memory_space<vmem>>, vector<32x32xf32>
    %cst_27 = arith.constant dense<0.000000e+00> : vector<128x32xf32>
    %67 = tpu.matmul %65, %66, %cst_27 {dimension_numbers = #tpu.dot_dimension_numbers<[1], [0], [0], [1], [0, 0, 1, 1], [], []>} : vector<128x32xf32>, vector<32x32xf32>, vector<128x32xf32> -> vector<128x32xf32>
    %68 = vector.extract_strided_slice %8 {offsets = [0, 128], sizes = [128, 32], strides = [1, 1]} : vector<128x200xf32> to vector<128x32xf32>
    %69 = arith.addf %67, %68 : vector<128x32xf32>
    %cst_28 = arith.constant dense<0.000000e+00> : vector<128x32xf32>
    %70 = tpu.matmul %1, %69, %cst_28 {dimension_numbers = #tpu.dot_dimension_numbers<[1], [0], [0], [1], [0, 0, 1, 1], [], []>} : vector<128x128xf32>, vector<128x32xf32>, vector<128x32xf32> -> vector<128x32xf32>
    %71 = arith.subf %69, %70 : vector<128x32xf32>
    %72 = arith.mulf %71, %71 : vector<128x32xf32>
    %cst_29 = arith.constant dense<0.000000e+00> : vector<128x32xf32>
    %73 = tpu.matmul %1, %72, %cst_29 {dimension_numbers = #tpu.dot_dimension_numbers<[1], [0], [0], [1], [0, 0, 1, 1], [], []>} : vector<128x128xf32>, vector<128x32xf32>, vector<128x32xf32> -> vector<128x32xf32>
    %c5 = arith.constant 5 : index
    %c0_30 = arith.constant 0 : index
    %74 = vector.load %arg3[%c5, %c0_30] : memref<16x200xf32, #tpu.memory_space<vmem>>, vector<1x32xf32>
    %c6 = arith.constant 6 : index
    %c0_31 = arith.constant 0 : index
    %75 = vector.load %arg3[%c6, %c0_31] : memref<16x200xf32, #tpu.memory_space<vmem>>, vector<1x32xf32>
    %cst_32 = arith.constant 9.99999974E-6 : f32
    %76 = vector.broadcast %cst_32 : f32 to vector<128x32xf32>
    %77 = arith.addf %73, %76 : vector<128x32xf32>
    %78 = math.rsqrt %77 : vector<128x32xf32>
    %79 = arith.mulf %71, %78 : vector<128x32xf32>
    %80 = vector.broadcast %74 : vector<1x32xf32> to vector<128x32xf32>
    %81 = arith.mulf %79, %80 : vector<128x32xf32>
    %82 = vector.broadcast %75 : vector<1x32xf32> to vector<128x32xf32>
    %83 = arith.addf %81, %82 : vector<128x32xf32>
    %cst_33 = arith.constant 5.000000e-01 : f32
    %84 = vector.broadcast %cst_33 : f32 to vector<128x32xf32>
    %85 = arith.mulf %84, %83 : vector<128x32xf32>
    %cst_34 = arith.constant 0.707106769 : f32
    %86 = vector.broadcast %cst_34 : f32 to vector<128x32xf32>
    %87 = arith.mulf %83, %86 : vector<128x32xf32>
    %88 = math.erf %87 : vector<128x32xf32>
    %cst_35 = arith.constant 1.000000e+00 : f32
    %89 = vector.broadcast %cst_35 : f32 to vector<128x32xf32>
    %90 = arith.addf %89, %88 : vector<128x32xf32>
    %91 = arith.mulf %85, %90 : vector<128x32xf32>
    %92 = arith.addf %91, %65 : vector<128x32xf32>
    %cst_36 = arith.constant 0.70721358 : f32
    %93 = vector.broadcast %cst_36 : f32 to vector<128x32xf32>
    %94 = arith.mulf %92, %93 : vector<128x32xf32>
    %c256 = arith.constant 256 : index
    %c0_37 = arith.constant 0 : index
    %95 = vector.load %arg2[%c256, %c0_37] : memref<320x200xf32, #tpu.memory_space<vmem>>, vector<32x32xf32>
    %cst_38 = arith.constant dense<0.000000e+00> : vector<128x32xf32>
    %96 = tpu.matmul %94, %95, %cst_38 {dimension_numbers = #tpu.dot_dimension_numbers<[1], [0], [0], [1], [0, 0, 1, 1], [], []>} : vector<128x32xf32>, vector<32x32xf32>, vector<128x32xf32> -> vector<128x32xf32>
    %97 = vector.extract_strided_slice %8 {offsets = [0, 160], sizes = [128, 32], strides = [1, 1]} : vector<128x200xf32> to vector<128x32xf32>
    %98 = arith.addf %96, %97 : vector<128x32xf32>
    %cst_39 = arith.constant dense<0.000000e+00> : vector<128x32xf32>
    %99 = tpu.matmul %1, %98, %cst_39 {dimension_numbers = #tpu.dot_dimension_numbers<[1], [0], [0], [1], [0, 0, 1, 1], [], []>} : vector<128x128xf32>, vector<128x32xf32>, vector<128x32xf32> -> vector<128x32xf32>
    %100 = arith.subf %98, %99 : vector<128x32xf32>
    %101 = arith.mulf %100, %100 : vector<128x32xf32>
    %cst_40 = arith.constant dense<0.000000e+00> : vector<128x32xf32>
    %102 = tpu.matmul %1, %101, %cst_40 {dimension_numbers = #tpu.dot_dimension_numbers<[1], [0], [0], [1], [0, 0, 1, 1], [], []>} : vector<128x128xf32>, vector<128x32xf32>, vector<128x32xf32> -> vector<128x32xf32>
    %c7 = arith.constant 7 : index
    %c0_41 = arith.constant 0 : index
    %103 = vector.load %arg3[%c7, %c0_41] : memref<16x200xf32, #tpu.memory_space<vmem>>, vector<1x32xf32>
    %c8 = arith.constant 8 : index
    %c0_42 = arith.constant 0 : index
    %104 = vector.load %arg3[%c8, %c0_42] : memref<16x200xf32, #tpu.memory_space<vmem>>, vector<1x32xf32>
    %cst_43 = arith.constant 9.99999974E-6 : f32
    %105 = vector.broadcast %cst_43 : f32 to vector<128x32xf32>
    %106 = arith.addf %102, %105 : vector<128x32xf32>
    %107 = math.rsqrt %106 : vector<128x32xf32>
    %108 = arith.mulf %100, %107 : vector<128x32xf32>
    %109 = vector.broadcast %103 : vector<1x32xf32> to vector<128x32xf32>
    %110 = arith.mulf %108, %109 : vector<128x32xf32>
    %111 = vector.broadcast %104 : vector<1x32xf32> to vector<128x32xf32>
    %112 = arith.addf %110, %111 : vector<128x32xf32>
    %cst_44 = arith.constant 5.000000e-01 : f32
    %113 = vector.broadcast %cst_44 : f32 to vector<128x32xf32>
    %114 = arith.mulf %113, %112 : vector<128x32xf32>
    %cst_45 = arith.constant 0.707106769 : f32
    %115 = vector.broadcast %cst_45 : f32 to vector<128x32xf32>
    %116 = arith.mulf %112, %115 : vector<128x32xf32>
    %117 = math.erf %116 : vector<128x32xf32>
    %cst_46 = arith.constant 1.000000e+00 : f32
    %118 = vector.broadcast %cst_46 : f32 to vector<128x32xf32>
    %119 = arith.addf %118, %117 : vector<128x32xf32>
    %120 = arith.mulf %114, %119 : vector<128x32xf32>
    %121 = arith.addf %120, %94 : vector<128x32xf32>
    %c288 = arith.constant 288 : index
    %c0_47 = arith.constant 0 : index
    %122 = vector.load %arg2[%c288, %c0_47] : memref<320x200xf32, #tpu.memory_space<vmem>>, vector<32x8xf32>
    %cst_48 = arith.constant dense<0.000000e+00> : vector<128x8xf32>
    %123 = tpu.matmul %121, %122, %cst_48 {dimension_numbers = #tpu.dot_dimension_numbers<[1], [0], [0], [1], [0, 0, 1, 1], [], []>} : vector<128x32xf32>, vector<32x8xf32>, vector<128x8xf32> -> vector<128x8xf32>
    %124 = vector.extract_strided_slice %8 {offsets = [0, 192], sizes = [128, 8], strides = [1, 1]} : vector<128x200xf32> to vector<128x8xf32>
    %125 = arith.addf %123, %124 : vector<128x8xf32>
    %c0_49 = arith.constant 0 : index
    %c0_50 = arith.constant 0 : index
    %126 = vector.load %arg5[%c0_49, %c0_50] : memref<128x8xf32, #tpu.memory_space<vmem>>, vector<128x8xf32>
    tpu.vector_store %arg5[%c0_49, %c0_50], %125 {strides = array<i32>} : memref<128x8xf32, #tpu.memory_space<vmem>>, vector<128x8xf32>,
    return
  }
  func.func @transform_0(%arg0: i32) -> (i32, i32) {
    %c0_i32 = arith.constant 0 : i32
    %c0_i32_0 = arith.constant 0 : i32
    return %arg0, %c0_i32 : i32, i32
  }
  func.func @transform_1(%arg0: i32) -> (i32, i32) {
    %c0_i32 = arith.constant 0 : i32
    %c0_i32_0 = arith.constant 0 : i32
    %c0_i32_1 = arith.constant 0 : i32
    return %c0_i32, %c0_i32_0 : i32, i32
  }
  func.func @transform_2(%arg0: i32) -> (i32, i32) {
    %c0_i32 = arith.constant 0 : i32
    %c0_i32_0 = arith.constant 0 : i32
    %c0_i32_1 = arith.constant 0 : i32
    return %c0_i32, %c0_i32_0 : i32, i32
  }
  func.func @transform_3(%arg0: i32) -> (i32, i32) {
    %c0_i32 = arith.constant 0 : i32
    %c0_i32_0 = arith.constant 0 : i32
    %c0_i32_1 = arith.constant 0 : i32
    return %c0_i32, %c0_i32_0 : i32, i32
  }
  func.func @transform_4(%arg0: i32) -> (i32, i32) {
    %c0_i32 = arith.constant 0 : i32
    %c0_i32_0 = arith.constant 0 : i32
    return %arg0, %c0_i32 : i32, i32
  }
}

</mosaic_0001>

<llo_original>
// kernel: model_mlp_forward.1
$region0: #{model_mlp_forward.1}
  #allocation0 [shape = 'u32[]', space=smem, size = 0x4, offset = 0x4, fixed_abs, tag = 'smem constant byte address 0x4 - core index']
  #allocation1 [shape = 'u32[144,128]{1,0:T(1,128)}', space=vmem, size = 0x12000, scoped, tag = 'internal scratch']
  %s0 = inlined_call_operand.vmem [shape: f32[512,32], index: 0, kind: input, shape index: {}]
  %s1 = inlined_call_operand.vmem [shape: f32[320,200], index: 1, kind: input, shape index: {}]
  %s2 = inlined_call_operand.vmem [shape: f32[16,200], index: 2, kind: input, shape index: {}]
  %s3 = inlined_call_operand.vmem [shape: f32[128,128], index: 3, kind: input, shape index: {}]
  %s4 = inlined_call_operand.vmem [shape: f32[512,8], index: 4, kind: output, shape index: {}]
  %s5 = sld [smem:[#allocation0]]
  $region49: #{model_mlp_forward.1} parent=0
    _
  %s7 = ssub.s32 1, %s5
  %s8 = scalar_select 0, %s7, %s5
  loop: start=0, step=1, limit=6
  $region2: #{model_mlp_forward.1} parent=0 // loop_pre_header
    _
  $region3: #{model_mlp_forward.1} parent=0 // loop_header
    %s10 = sphi 0, %s14
    %p11 = scmp.ge.s32.totalorder %s10, 6
    %s20 = sphi 0, %s22
    %s23 = sphi 0, %s20
    %s24 = sphi 0, %s23
    %s40 = sphi 0, %s24
    %s44 = sphi 0, %s44
    %s46 = sphi 0, %s44
    %s47 = sphi 0, %s46
    %s61 = sphi 0, %s47
    %s65 = sphi 0, %s65
    %s67 = sphi 0, %s65
    %s68 = sphi 0, %s67
    %s82 = sphi 0, %s68
    %s86 = sphi 0, %s86
    %s88 = sphi 0, %s86
    %s89 = sphi 0, %s88
    %s103 = sphi 0, %s89
    %s109 = sphi 0, %s111
    %s112 = sphi 0, %s109
    %s113 = sphi 0, %s112
    %s129 = sphi 0, %s113
  $region4: #{model_mlp_forward.1} parent=0 // loop_header_branch
    %13 = sbr.rel (%p11) target = $region8
  $region5: #{model_mlp_forward.1} parent=0 // loop_body
    %s15 = ssub.s32 %s10, 1
    %s16 = ssub.s32 %s10, 2
    %s17 = sadd.s32 %s10, 1
    %s18 = ssub.s32 %s10, %s17
    %p19 = scmp.eq.s32.totalorder %s18, 0
    %s21 = sadd.s32 %s20, 1
    %s22 = scalar_select %p19, %s20, %s21
    %p25 = pneg %p19
    %p26 = scmp.eq.s32.totalorder %s10, 3
    %p27 = por %p25, %p26
    %p28 = scmp.ne.s32.totalorder %s20, %s23
    %p29 = scmp.eq.s32.totalorder %s10, 0
    %p30 = por %p28, %p29
    %p31 = scmp.ne.s32.totalorder %s20, %s23
    %p32 = scmp.eq.s32.totalorder %s15, 3
    %p33 = por %p31, %p32
    %p34 = scmp.ne.s32.totalorder %s23, %s24
    %p35 = scmp.eq.s32.totalorder %s15, 0
    %p36 = por %p34, %p35
    %p37 = scmp.ne.s32.totalorder %s23, %s24
    %p38 = scmp.eq.s32.totalorder %s16, 3
    %p39 = por %p37, %p38
    %p41 = scmp.ne.s32.totalorder %s24, %s40
    %p42 = scmp.eq.s32.totalorder %s16, 0
    %p43 = por %p41, %p42
    %s45 = sadd.s32 %s44, 1
    %p48 = scmp.eq.s32.totalorder %s10, 3
    %p49 = scmp.ne.s32.totalorder %s44, %s46
    %p50 = scmp.eq.s32.totalorder %s10, 0
    %p51 = por %p49, %p50
    %p52 = scmp.ne.s32.totalorder %s44, %s46
    %p53 = scmp.eq.s32.totalorder %s15, 3
    %p54 = por %p52, %p53
    %p55 = scmp.ne.s32.totalorder %s46, %s47
    %p56 = scmp.eq.s32.totalorder %s15, 0
    %p57 = por %p55, %p56
    %p58 = scmp.ne.s32.totalorder %s46, %s47
    %p59 = scmp.eq.s32.totalorder %s16, 3
    %p60 = por %p58, %p59
    %p62 = scmp.ne.s32.totalorder %s47, %s61
    %p63 = scmp.eq.s32.totalorder %s16, 0
    %p64 = por %p62, %p63
    %s66 = sadd.s32 %s65, 1
    %p69 = scmp.eq.s32.totalorder %s10, 3
    %p70 = scmp.ne.s32.totalorder %s65, %s67
    %p71 = scmp.eq.s32.totalorder %s10, 0
    %p72 = por %p70, %p71
    %p73 = scmp.ne.s32.totalorder %s65, %s67
    %p74 = scmp.eq.s32.totalorder %s15, 3
    %p75 = por %p73, %p74
    %p76 = scmp.ne.s32.totalorder %s67, %s68
    %p77 = scmp.eq.s32.totalorder %s15, 0
    %p78 = por %p76, %p77
    %p79 = scmp.ne.s32.totalorder %s67, %s68
    %p80 = scmp.eq.s32.totalorder %s16, 3
    %p81 = por %p79, %p80
    %p83 = scmp.ne.s32.totalorder %s68, %s82
    %p84 = scmp.eq.s32.totalorder %s16, 0
    %p85 = por %p83, %p84
    %s87 = sadd.s32 %s86, 1
    %p90 = scmp.eq.s32.totalorder %s10, 3
    %p91 = scmp.ne.s32.totalorder %s86, %s88
    %p92 = scmp.eq.s32.totalorder %s10, 0
    %p93 = por %p91, %p92
    %p94 = scmp.ne.s32.totalorder %s86, %s88
    %p95 = scmp.eq.s32.totalorder %s15, 3
    %p96 = por %p94, %p95
    %p97 = scmp.ne.s32.totalorder %s88, %s89
    %p98 = scmp.eq.s32.totalorder %s15, 0
    %p99 = por %p97, %p98
    %p100 = scmp.ne.s32.totalorder %s88, %s89
    %p101 = scmp.eq.s32.totalorder %s16, 3
    %p102 = por %p100, %p101
    %p104 = scmp.ne.s32.totalorder %s89, %s103
    %p105 = scmp.eq.s32.totalorder %s16, 0
    %p106 = por %p104, %p105
    %s107 = ssub.s32 %s10, %s17
    %p108 = scmp.eq.s32.totalorder %s107, 0
    %s110 = sadd.s32 %s109, 1
    %s111 = scalar_select %p108, %s109, %s110
    %p114 = pneg %p108
    %p115 = scmp.eq.s32.totalorder %s10, 3
    %p116 = por %p114, %p115
    %p117 = scmp.ne.s32.totalorder %s109, %s112
    %p118 = scmp.eq.s32.totalorder %s10, 0
    %p119 = por %p117, %p118
    %p120 = scmp.ne.s32.totalorder %s109, %s112
    %p121 = scmp.eq.s32.totalorder %s15, 3
    %p122 = por %p120, %p121
    %p123 = scmp.ne.s32.totalorder %s112, %s113
    %p124 = scmp.eq.s32.totalorder %s15, 0
    %p125 = por %p123, %p124
    %p126 = scmp.ne.s32.totalorder %s112, %s113
    %p127 = scmp.eq.s32.totalorder %s16, 3
    %p128 = por %p126, %p127
    %p130 = scmp.ne.s32.totalorder %s113, %s129
    %p131 = scmp.eq.s32.totalorder %s16, 0
    %p132 = por %p130, %p131
    %p133 = scmp.le.s32.totalorder 1, %s10
    %p134 = scmp.lt.s32.totalorder %s10, 5
    %p135 = pnand %p133, %p134
    %p136 = pneg %p135
    // Predicated region
    $region9: #{model_mlp_forward.1} parent=5 // pred_check
      _
    $region10: #{model_mlp_forward.1} parent=5 // pred_check_branch
      %138 = sbr.rel (%p135) target = $region12
    $region11: #{model_mlp_forward.1} parent=5 // pred_region
      %s139 = ssub.s32 %s10, 1
      // Predicated region
      $region13: #{model_mlp_forward.1} parent=11 // pred_check
        %p140 = pneg %p57
      $region14: #{model_mlp_forward.1} parent=11 // pred_check_branch
        %142 = sbr.rel (%p140) target = $region16
      $region15: #{model_mlp_forward.1} parent=11 // pred_region
        _
      $region16: #{model_mlp_forward.1} parent=11 // pred_fallthru
        _
      // Predicated region
      $region17: #{model_mlp_forward.1} parent=11 // pred_check
        %p143 = pneg %p78
      $region18: #{model_mlp_forward.1} parent=11 // pred_check_branch
        %145 = sbr.rel (%p143) target = $region20
      $region19: #{model_mlp_forward.1} parent=11 // pred_region
        _
      $region20: #{model_mlp_forward.1} parent=11 // pred_fallthru
        _
      // Predicated region
      $region21: #{model_mlp_forward.1} parent=11 // pred_check
        %p146 = pneg %p99
      $region22: #{model_mlp_forward.1} parent=11 // pred_check_branch
        %148 = sbr.rel (%p146) target = $region24
      $region23: #{model_mlp_forward.1} parent=11 // pred_region
        _
      $region24: #{model_mlp_forward.1} parent=11 // pred_fallthru
        _
    $region12: #{model_mlp_forward.1} parent=5 // pred_fallthru
      _
    %p149 = scmp.lt.s32.totalorder %s10, 4
    // Predicated region
    $region25: #{model_mlp_forward.1} parent=5 // pred_check
      %p150 = pneg %p149
    $region26: #{model_mlp_forward.1} parent=5 // pred_check_branch
      %152 = sbr.rel (%p150) target = $region28
    $region27: #{model_mlp_forward.1} parent=5 // pred_region
      // Predicated region
      $region29: #{model_mlp_forward.1} parent=27 // pred_check
        %p153 = pneg %p30
      $region30: #{model_mlp_forward.1} parent=27 // pred_check_branch
        %155 = sbr.rel (%p153) target = $region32
      $region31: #{model_mlp_forward.1} parent=27 // pred_region
        %s156 = smul.u32 16, %s10
        %p157 = scmp.lt.s32.totalorder %s156, 63
        %s158 = scalar_select %p157, %s156, 63
        %s159 = smul.addr %s158, 8
        %s160 = scalar_lea.vmem %s0, %s159
        %s161 = smul.u32 16, %s10
      $region32: #{model_mlp_forward.1} parent=27 // pred_fallthru
        _
    $region28: #{model_mlp_forward.1} parent=5 // pred_fallthru
      _
    %p162 = scmp.le.s32.totalorder 1, %s10
    %p163 = scmp.lt.s32.totalorder %s10, 5
    %p164 = pnand %p162, %p163
    %p165 = pneg %p164
    // Predicated region
    $region33: #{model_mlp_forward.1} parent=5 // pred_check
      _
    $region34: #{model_mlp_forward.1} parent=5 // pred_check_branch
      %167 = sbr.rel (%p164) target = $region36
    $region35: #{model_mlp_forward.1} parent=5 // pred_region
      %s168 = ssub.s32 %s10, 1
      %s169 = smul.u32 16, %s15
      %p170 = scmp.lt.s32.totalorder %s169, 63
      %s171 = scalar_select %p170, %s169, 63
      %s172 = smul.addr %s171, 8
      %s173 = scalar_lea.vmem %s0, %s172
      %p174 = pneg %p36
      %p175 = pneg %p33
      %p176 = pneg %p57
      %p177 = pneg %p54
      %p178 = pneg %p78
      %p179 = pneg %p75
      %p180 = pneg %p99
      %p181 = pneg %p96
      %p182 = pneg %p125
      %p183 = pneg %p122
      %s184 = smul.u32 16, %s15
      %p185 = scmp.lt.s32.totalorder %s184, 63
      %s186 = scalar_select %p185, %s184, 63
      %s187 = smul.addr %s186, 8
      %s188 = scalar_lea.vmem %s4, %s187
      %s189 = smul.u32 16, %s15
      %p190 = scmp.lt.s32.totalorder %s189, 63
      %s191 = scalar_select %p190, %s189, 63
      %s192 = smul.addr %s191, 8
      %s193 = scalar_lea.vmem %s0, %s192
      %s194 = smul.u32 16, %s15
      %s195 = smul.u32 16, %s15
      %p196 = scmp.lt.s32.totalorder %s195, 63
      %s197 = scalar_select %p196, %s195, 63
      %s198 = smul.addr %s197, 8
      %s199 = scalar_lea.vmem %s4, %s198
      %s200 = smul.u32 16, %s15
      %v201 = vld [vmem:[%s193] sm:$0xff]
      %v202 = vld [vmem:[%s193 + $0x8] sm:$0xff]
      %v203 = vld [vmem:[%s193 + $0x10] sm:$0xff]
      %v204 = vld [vmem:[%s193 + $0x18] sm:$0xff]
      %v205 = vld [vmem:[%s193 + $0x20] sm:$0xff]
      %v206 = vld [vmem:[%s193 + $0x28] sm:$0xff]
      %v207 = vld [vmem:[%s193 + $0x30] sm:$0xff]
      %v208 = vld [vmem:[%s193 + $0x38] sm:$0xff]
      %v209 = vld [vmem:[%s193 + $0x40] sm:$0xff]
      %v210 = vld [vmem:[%s193 + $0x48] sm:$0xff]
      %v211 = vld [vmem:[%s193 + $0x50] sm:$0xff]
      %v212 = vld [vmem:[%s193 + $0x58] sm:$0xff]
      %v213 = vld [vmem:[%s193 + $0x60] sm:$0xff]
      %v214 = vld [vmem:[%s193 + $0x68] sm:$0xff]
      %v215 = vld [vmem:[%s193 + $0x70] sm:$0xff]
      %v216 = vld [vmem:[%s193 + $0x78] sm:$0xff]
      %v217 = vld [vmem:[%s3] sm:$0xff]
      %v218 = vld [vmem:[%s3 + $0x8] sm:$0xff]
      %v219 = vld [vmem:[%s3 + $0x10] sm:$0xff]
      %v220 = vld [vmem:[%s3 + $0x18] sm:$0xff]
      %v221 = vld [vmem:[%s3 + $0x20] sm:$0xff]
      %v222 = vld [vmem:[%s3 + $0x28] sm:$0xff]
      %v223 = vld [vmem:[%s3 + $0x30] sm:$0xff]
      %v224 = vld [vmem:[%s3 + $0x38] sm:$0xff]
      %v225 = vld [vmem:[%s3 + $0x40] sm:$0xff]
      %v226 = vld [vmem:[%s3 + $0x48] sm:$0xff]
      %v227 = vld [vmem:[%s3 + $0x50] sm:$0xff]
      %v228 = vld [vmem:[%s3 + $0x58] sm:$0xff]
      %v229 = vld [vmem:[%s3 + $0x60] sm:$0xff]
      %v230 = vld [vmem:[%s3 + $0x68] sm:$0xff]
      %v231 = vld [vmem:[%s3 + $0x70] sm:$0xff]
      %v232 = vld [vmem:[%s3 + $0x78] sm:$0xff]
      %v233 = vlaneseq
      %v234 = vand.u32 %v233, 127
      %v235 = vld [vmem:[%s1] sm:$0xff]
      %v236 = vld [vmem:[%s1 + $0x8] sm:$0xff]
      %v237 = vld [vmem:[%s1 + $0x10] sm:$0xff]
      %v238 = vld [vmem:[%s1 + $0x18] sm:$0xff]
      %v239 = vld [vmem:[%s1 + $0x20] sm:$0xff]
      %v240 = vld [vmem:[%s1 + $0x28] sm:$0xff]
      %v241 = vld [vmem:[%s1 + $0x30] sm:$0xff]
      %v242 = vld [vmem:[%s1 + $0x38] sm:$0xff]
      %v243 = vld [vmem:[%s2] ss:$8 sm:$0x3]
      %v245 = vlaneseq
      %v246 = vshrl.u32 %v245, 7
      %v247 = vsub.s32 0, %v246
      %v248 = vrot.slane %v243, %v247
      %v249 = vlaneseq
      %v250 = vshrl.u32 %v249, 7
      %v251 = vsub.s32 1, %v250
      %v252 = vrot.slane %v243, %v251
      %vm255 = vcmask 261120
      %v257 = vsel %vm255, %v201, 0
      %v260 = vsel %vm255, %v202, 0
      %v263 = vsel %vm255, %v203, 0
      %v266 = vsel %vm255, %v204, 0
      %v269 = vsel %vm255, %v205, 0
      %v272 = vsel %vm255, %v206, 0
      %v275 = vsel %vm255, %v207, 0
      %v278 = vsel %vm255, %v208, 0
      %v281 = vsel %vm255, %v209, 0
      %v284 = vsel %vm255, %v210, 0
      %v287 = vsel %vm255, %v211, 0
      %v290 = vsel %vm255, %v212, 0
      %v293 = vsel %vm255, %v213, 0
      %v296 = vsel %vm255, %v214, 0
      %v299 = vsel %vm255, %v215, 0
      %v302 = vsel %vm255, %v216, 0
      %304 = vmatprep.subr.mxu0 %v236
      %305 = vmatpush1.msra.mxu0 %v235
      %306 = vmatprep.subr.mxu0 %v238
      %307 = vmatpush1.msra.mxu0 %v237
      %308 = vmatprep.subr.mxu0 %v240
      %309 = vmatpush1.msra.mxu0 %v239
      %310 = vmatprep.subr.mxu0 %v242
      %311 = vmatpush1.msra.mxu0 %v241
      %312 = vmatprep.subr.mxu0 0.0
      %313 = vmatpush1.msra.mxu0 0.0
      %314 = vmatprep.subr.mxu0 0.0
      %315 = vmatpush1.msra.mxu0 0.0
      %316 = vmatprep.subr.mxu0 0.0
      %317 = vmatpush1.msra.mxu0 0.0
      %318 = vmatprep.subr.mxu0 0.0
      %319 = vmatpush1.msra.mxu0 0.0
      %320 = vmatprep.subr.mxu0 0.0
      %321 = vmatpush1.msra.mxu0 0.0
      %322 = vmatprep.subr.mxu0 0.0
      %323 = vmatpush1.msra.mxu0 0.0
      %324 = vmatprep.subr.mxu0 0.0
      %325 = vmatpush1.msra.mxu0 0.0
      %326 = vmatprep.subr.mxu0 0.0
      %327 = vmatpush1.msra.mxu0 0.0
      %328 = vmatprep.subr.mxu0 0.0
      %329 = vmatpush1.msra.mxu0 0.0
      %330 = vmatprep.subr.mxu0 0.0
      %331 = vmatpush1.msra.mxu0 0.0
      %332 = vmatprep.subr.mxu0 0.0
      %333 = vmatpush1.msra.mxu0 0.0
      %334 = vmatprep.subr.mxu0 0.0
      %335 = vmatpush1.msra.mxu0 0.0
      %336 = vmatprep.subr.mxu0 0.0
      %337 = vmatpush1.msra.mxu0 0.0
      %338 = vmatprep.subr.mxu0 0.0
      %339 = vmatpush1.msra.mxu0 0.0
      %340 = vmatprep.subr.mxu0 0.0
      %341 = vmatpush1.msra.mxu0 0.0
      %342 = vmatprep.subr.mxu0 0.0
      %343 = vmatpush1.msra.mxu0 0.0
      %344 = vmatprep.subr.mxu0 0.0
      %345 = vmatpush1.msra.mxu0 0.0
      %346 = vmatprep.subr.mxu0 0.0
      %347 = vmatpush1.msra.mxu0 0.0
      %348 = vmatprep.subr.mxu0 0.0
      %349 = vmatpush1.msra.mxu0 0.0
      %350 = vmatprep.subr.mxu0 0.0
      %351 = vmatpush1.msra.mxu0 0.0
      %352 = vmatprep.subr.mxu0 0.0
      %353 = vmatpush1.msra.mxu0 0.0
      %354 = vmatprep.subr.mxu0 0.0
      %355 = vmatpush1.msra.mxu0 0.0
      %356 = vmatprep.subr.mxu0 0.0
      %357 = vmatpush1.msra.mxu0 0.0
      %358 = vmatprep.subr.mxu0 0.0
      %359 = vmatpush1.msra.mxu0 0.0
      %360 = vmatprep.subr.mxu0 0.0
      %361 = vmatpush1.msra.mxu0 0.0
      %362 = vmatprep.subr.mxu0 0.0
      %363 = vmatpush1.msra.mxu0 0.0
      %364 = vmatprep.subr.mxu0 0.0
      %365 = vmatpush1.msra.mxu0 0.0
      %366 = vmatprep.subr.mxu0 0.0
      %367 = vmatpush1.msra.mxu0 0.0
      %368 = vmatprep.mubr.f32.mxu0 0.0
      %369 = vmatmul.mubr.f32.gmra.mrb[0].mxu0 %v257
      %v370 = vpop.f32.mrb[0].mxu0
      %v371 = vadd.f32 %v248, %v370
      %v372 = vpop.f32.mrb[0].mxu0
      %v373 = vadd.f32 %v252, %v372
      %374 = vmatprep.mubr.f32.mxu0 0.0
      %375 = vmatmul.mubr.f32.gmra.mrb[0].mxu0 %v260
      %v376 = vpop.f32.mrb[0].mxu0
      %v377 = vadd.f32 %v248, %v376
      %v378 = vpop.f32.mrb[0].mxu0
      %v379 = vadd.f32 %v252, %v378
      %380 = vmatprep.mubr.f32.mxu0 0.0
      %381 = vmatmul.mubr.f32.gmra.mrb[0].mxu0 %v263
      %v382 = vpop.f32.mrb[0].mxu0
      %v383 = vadd.f32 %v248, %v382
      %v384 = vpop.f32.mrb[0].mxu0
      %v385 = vadd.f32 %v252, %v384
      %386 = vmatprep.mubr.f32.mxu0 0.0
      %387 = vmatmul.mubr.f32.gmra.mrb[0].mxu0 %v266
      %v388 = vpop.f32.mrb[0].mxu0
      %v389 = vadd.f32 %v248, %v388
      %v390 = vpop.f32.mrb[0].mxu0
      %v391 = vadd.f32 %v252, %v390
      %392 = vmatprep.mubr.f32.mxu0 0.0
      %393 = vmatmul.mubr.f32.gmra.mrb[0].mxu0 %v269
      %v394 = vpop.f32.mrb[0].mxu0
      %v395 = vadd.f32 %v248, %v394
      %v396 = vpop.f32.mrb[0].mxu0
      %v397 = vadd.f32 %v252, %v396
      %398 = vmatprep.mubr.f32.mxu0 0.0
      %399 = vmatmul.mubr.f32.gmra.mrb[0].mxu0 %v272
      %v400 = vpop.f32.mrb[0].mxu0
      %v401 = vadd.f32 %v248, %v400
      %v402 = vpop.f32.mrb[0].mxu0
      %v403 = vadd.f32 %v252, %v402
      %404 = vmatprep.mubr.f32.mxu0 0.0
      %405 = vmatmul.mubr.f32.gmra.mrb[0].mxu0 %v275
      %v406 = vpop.f32.mrb[0].mxu0
      %v407 = vadd.f32 %v248, %v406
      %v408 = vpop.f32.mrb[0].mxu0
      %v409 = vadd.f32 %v252, %v408
      %410 = vmatprep.mubr.f32.mxu0 0.0
      %411 = vmatmul.mubr.f32.gmra.mrb[0].mxu0 %v278
      %v412 = vpop.f32.mrb[0].mxu0
      %v413 = vadd.f32 %v248, %v412
      %v414 = vpop.f32.mrb[0].mxu0
      %v415 = vadd.f32 %v252, %v414
      %416 = vmatprep.mubr.f32.mxu0 0.0
      %417 = vmatmul.mubr.f32.gmra.mrb[0].mxu0 %v281
      %v418 = vpop.f32.mrb[0].mxu0
      %v419 = vadd.f32 %v248, %v418
      %v420 = vpop.f32.mrb[0].mxu0
      %v421 = vadd.f32 %v252, %v420
      %422 = vmatprep.mubr.f32.mxu0 0.0
      %423 = vmatmul.mubr.f32.gmra.mrb[0].mxu0 %v284
      %v424 = vpop.f32.mrb[0].mxu0
      %v425 = vadd.f32 %v248, %v424
      %v426 = vpop.f32.mrb[0].mxu0
      %v427 = vadd.f32 %v252, %v426
      %428 = vmatprep.mubr.f32.mxu0 0.0
      %429 = vmatmul.mubr.f32.gmra.mrb[0].mxu0 %v287
      %v430 = vpop.f32.mrb[0].mxu0
      %v431 = vadd.f32 %v248, %v430
      %v432 = vpop.f32.mrb[0].mxu0
      %v433 = vadd.f32 %v252, %v432
      %434 = vmatprep.mubr.f32.mxu0 0.0
      %435 = vmatmul.mubr.f32.gmra.mrb[0].mxu0 %v290
      %v436 = vpop.f32.mrb[0].mxu0
      %v437 = vadd.f32 %v248, %v436
      %v438 = vpop.f32.mrb[0].mxu0
      %v439 = vadd.f32 %v252, %v438
      %440 = vmatprep.mubr.f32.mxu0 0.0
      %441 = vmatmul.mubr.f32.gmra.mrb[0].mxu0 %v293
      %v442 = vpop.f32.mrb[0].mxu0
      %v443 = vadd.f32 %v248, %v442
      %v444 = vpop.f32.mrb[0].mxu0
      %v445 = vadd.f32 %v252, %v444
      %446 = vmatprep.mubr.f32.mxu0 0.0
      %447 = vmatmul.mubr.f32.gmra.mrb[0].mxu0 %v296
      %v448 = vpop.f32.mrb[0].mxu0
      %v449 = vadd.f32 %v248, %v448
      %v450 = vpop.f32.mrb[0].mxu0
      %v451 = vadd.f32 %v252, %v450
      %452 = vmatprep.mubr.f32.mxu0 0.0
      %453 = vmatmul.mubr.f32.gmra.mrb[0].mxu0 %v299
      %v454 = vpop.f32.mrb[0].mxu0
      %v455 = vadd.f32 %v248, %v454
      %v456 = vpop.f32.mrb[0].mxu0
      %v457 = vadd.f32 %v252, %v456
      %458 = vmatprep.mubr.f32.mxu0 0.0
      %459 = vmatmul.mubr.f32.gmra.mrb[0].mxu0 %v302
      %v460 = vpop.f32.mrb[0].mxu0
      %v461 = vadd.f32 %v248, %v460
      %v462 = vpop.f32.mrb[0].mxu0
      %v463 = vadd.f32 %v252, %v462
      %464 = vdwg.mxu0
      %vm465 = vcmp.lt.s32.totalorder %v234, 64
      %vm466 = vcmp.ge.f32.partialorder %v371, 0.0
      %vm467 = vcmp.ge.f32.partialorder %v377, 0.0
      %vm468 = vcmp.ge.f32.partialorder %v383, 0.0
      %vm469 = vcmp.ge.f32.partialorder %v389, 0.0
      %vm470 = vcmp.ge.f32.partialorder %v395, 0.0
      %vm471 = vcmp.ge.f32.partialorder %v401, 0.0
      %vm472 = vcmp.ge.f32.partialorder %v407, 0.0
      %vm473 = vcmp.ge.f32.partialorder %v413, 0.0
      %vm474 = vcmp.ge.f32.partialorder %v419, 0.0
      %vm475 = vcmp.ge.f32.partialorder %v425, 0.0
      %vm476 = vcmp.ge.f32.partialorder %v431, 0.0
      %vm477 = vcmp.ge.f32.partialorder %v437, 0.0
      %vm478 = vcmp.ge.f32.partialorder %v443, 0.0
      %vm479 = vcmp.ge.f32.partialorder %v449, 0.0
      %vm480 = vcmp.ge.f32.partialorder %v455, 0.0
      %vm481 = vcmp.ge.f32.partialorder %v461, 0.0
      %v482 = vmul.f32 %v371, 0.01
      %v483 = vmul.f32 %v377, 0.01
      %v484 = vmul.f32 %v383, 0.01
      %v485 = vmul.f32 %v389, 0.01
      %v486 = vmul.f32 %v395, 0.01
      %v487 = vmul.f32 %v401, 0.01
      %v488 = vmul.f32 %v407, 0.01
      %v489 = vmul.f32 %v413, 0.01
      %v490 = vmul.f32 %v419, 0.01
      %v491 = vmul.f32 %v425, 0.01
      %v492 = vmul.f32 %v431, 0.01
      %v493 = vmul.f32 %v437, 0.01
      %v494 = vmul.f32 %v443, 0.01
      %v495 = vmul.f32 %v449, 0.01
      %v496 = vmul.f32 %v455, 0.01
      %v497 = vmul.f32 %v461, 0.01
      %v498 = vsel %vm466, %v371, %v482
      %v499 = vsel %vm467, %v377, %v483
      %v500 = vsel %vm468, %v383, %v484
      %v501 = vsel %vm469, %v389, %v485
      %v502 = vsel %vm470, %v395, %v486
      %v503 = vsel %vm471, %v401, %v487
      %v504 = vsel %vm472, %v407, %v488
      %v505 = vsel %vm473, %v413, %v489
      %v506 = vsel %vm474, %v419, %v490
      %v507 = vsel %vm475, %v425, %v491
      %v508 = vsel %vm476, %v431, %v492
      %v509 = vsel %vm477, %v437, %v493
      %v510 = vsel %vm478, %v443, %v494
      %v511 = vsel %vm479, %v449, %v495
      %v512 = vsel %vm480, %v455, %v496
      %v513 = vsel %vm481, %v461, %v497
      %v514 = vand.u32 2147483647, %v371
      %vm515 = vcmp.le.f32.partialorder %v514, 0.7853982
      %vm516 = vcmp.lt.s32.totalorder %v371, 0
      %v517 = vand.u32 %v371, 2139095040
      %v518 = vshrl.u32 %v517, 23
      %v519 = vsub.s32 %v518, 127
      %v520 = vand.u32 2147483647, %v371
      %v521 = vand.u32 %v520, 8388607
      %v522 = vor.u32 %v521, 8388608
      %v523 = vsub.s32 0, %v522
      %v524 = vadd.s32 %v519, 1
      %vm525 = vcmp.gt.s32.totalorder %v524, 0
      %v526 = vsel %vm525, %v524, 0
      %v527 = vshrl.u32 %v526, 5
      %v528 = vand.u32 %v526, 31
      %v529 = vsub.s32 32, %v528
      %v530 = vshrl.u32 683565275, %v529
      %v531 = vshll.u32 683565275, %v528
      %v532 = vshrl.u32 2475754826, %v529
      %v533 = vor.u32 %v531, %v532
      %v534 = vshll.u32 2475754826, %v528
      %v535 = vshrl.u32 2131351028, %v529
      %v536 = vor.u32 %v534, %v535
      %v537 = vshll.u32 2131351028, %v528
      %v538 = vshrl.u32 2102212464, %v529
      %v539 = vor.u32 %v537, %v538
      %v540 = vshll.u32 2102212464, %v528
      %v541 = vshrl.u32 920167782, %v529
      %v542 = vor.u32 %v540, %v541
      %v543 = vshll.u32 920167782, %v528
      %v544 = vshrl.u32 1326507024, %v529
      %v545 = vor.u32 %v543, %v544
      %vm546 = vcmp.lt.s32.totalorder %v527, 1
      %vm547 = vcmp.lt.s32.totalorder %v527, 2
      %vm548 = vcmp.lt.s32.totalorder %v527, 3
      %vm549 = vcmp.lt.s32.totalorder %v527, 4
      %v550 = vsel %vm546, %v530, %v533
      %v551 = vsel %vm549, %v539, 2102212464
      %v552 = vsel %vm548, %v536, %v551
      %v553 = vsel %vm547, %v550, %v552
      %v554 = vsel %vm546, %v533, %v536
      %v555 = vsel %vm549, %v542, 920167782
      %v556 = vsel %vm548, %v539, %v555
      %v557 = vsel %vm547, %v554, %v556
      %v558 = vsel %vm546, %v536, %v539
      %v559 = vsel %vm549, %v545, 1326507024
      %v560 = vsel %vm548, %v542, %v559
      %v561 = vsel %vm547, %v558, %v560
      %v562 = vshll.u32 %v522, 8
      %v563 = vmul.u32.u64.compose %v562, %v561
      %v564 = vextract.low.u32 %v563
      %v565 = vextract.high.u32 %v563
      %v566 = vmul.u32.u64.compose %v562, %v557
      %v567 = vextract.low.u32 %v566
      %v568 = vextract.high.u32 %v566
      %v569 = vmul.u32 %v562, %v553
      %v570 = vadd.s32 %v565, %v567
      %vm571 = vc.u32 %v565, %v567
      %v572 = vadd.s32 %v568, 1
      %v573 = vsel %vm571, %v572, %v568
      %v574 = vadd.s32 %v569, %v573
      %v575 = vadd.s32 %v574, 536870912
      %v576 = vshrl.u32 %v575, 30
      %v577 = vshll.u32 %v576, 30
      %v578 = vsub.s32 %v574, %v577
      %vm579 = vcmp.lt.s32.totalorder %v578, 0
      %v580 = vsub.s32 0, %v578
      %v581 = vsel %vm579, %v580, %v578
      %v582 = vclz %v581
      %v583 = vsub.s32 %v582, 2
      %vm584 = vcmp.gt.s32.totalorder 0, %v583
      %v585 = vsel %vm584, 0, %v583
      %v586 = vsub.s32 32, %v585
      %v587 = vshll.u32 %v578, %v585
      %v588 = vshrl.u32 %v570, %v586
      %v589 = vor.u32 %v587, %v588
      %v590 = vsub.s32 4294967266, %v585
      %v591 = vadd.s32 %v590, 127
      %v592 = vshll.u32 %v591, 23
      %v593 = vor.u32 4788187, %v592
      %v594 = vand.u32 2147483647, %v593
      %v596 = vcvt.s32.f32 %v589
      %v597 = vmul.f32 %v596, %v594
      %v598 = vxor.u32 %v597, 2147483648
      %v599 = vsel %vm516, %v598, %v597
      %v600 = vsub.s32 4, %v576
      %v601 = vsel %vm516, %v600, %v576
      %v602 = vsel %vm515, %v371, %v599
      %v603 = vsel %vm515, 0, %v601
      %v604 = vcosq.f32.pop %v602
      %v605 = vsinq.f32.pop %v602
      %vm606 = vweird.f32 %v371
      %v607 = vadd.s32 %v603, 3
      %v608 = vand.u32 %v607, 3
      %vm609 = vcmp.lt.s32.totalorder %v608, 2
      %vm610 = vcmp.eq.s32.totalorder %v608, 0
      %v611 = vxor.u32 %v605, 2147483648
      %v612 = vsel %vm610, %v604, %v611
      %vm613 = vcmp.eq.s32.totalorder %v608, 2
      %v614 = vxor.u32 %v604, 2147483648
      %v615 = vsel %vm613, %v614, %v605
      %v616 = vsel %vm609, %v612, %v615
      %v617 = vsel %vm606, nan, %v616
      %v618 = vand.u32 2147483647, %v377
      %vm619 = vcmp.le.f32.partialorder %v618, 0.7853982
      %vm620 = vcmp.lt.s32.totalorder %v377, 0
      %v621 = vand.u32 %v377, 2139095040
      %v622 = vshrl.u32 %v621, 23
      %v623 = vsub.s32 %v622, 127
      %v624 = vand.u32 2147483647, %v377
      %v625 = vand.u32 %v624, 8388607
      %v626 = vor.u32 %v625, 8388608
      %v627 = vsub.s32 0, %v626
      %v628 = vadd.s32 %v623, 1
      %vm629 = vcmp.gt.s32.totalorder %v628, 0
      %v630 = vsel %vm629, %v628, 0
      %v631 = vshrl.u32 %v630, 5
      %v632 = vand.u32 %v630, 31
      %v633 = vsub.s32 32, %v632
      %v634 = vshrl.u32 683565275, %v633
      %v635 = vshll.u32 683565275, %v632
      %v636 = vshrl.u32 2475754826, %v633
      %v637 = vor.u32 %v635, %v636
      %v638 = vshll.u32 2475754826, %v632
      %v639 = vshrl.u32 2131351028, %v633
      %v640 = vor.u32 %v638, %v639
      %v641 = vshll.u32 2131351028, %v632
      %v642 = vshrl.u32 2102212464, %v633
      %v643 = vor.u32 %v641, %v642
      %v644 = vshll.u32 2102212464, %v632
      %v645 = vshrl.u32 920167782, %v633
      %v646 = vor.u32 %v644, %v645
      %v647 = vshll.u32 920167782, %v632
      %v648 = vshrl.u32 1326507024, %v633
      %v649 = vor.u32 %v647, %v648
      %vm650 = vcmp.lt.s32.totalorder %v631, 1
      %vm651 = vcmp.lt.s32.totalorder %v631, 2
      %vm652 = vcmp.lt.s32.totalorder %v631, 3
      %vm653 = vcmp.lt.s32.totalorder %v631, 4
      %v654 = vsel %vm650, %v634, %v637
      %v655 = vsel %vm653, %v643, 2102212464
      %v656 = vsel %vm652, %v640, %v655
      %v657 = vsel %vm651, %v654, %v656
      %v658 = vsel %vm650, %v637, %v640
      %v659 = vsel %vm653, %v646, 920167782
      %v660 = vsel %vm652, %v643, %v659
      %v661 = vsel %vm651, %v658, %v660
      %v662 = vsel %vm650, %v640, %v643
      %v663 = vsel %vm653, %v649, 1326507024
      %v664 = vsel %vm652, %v646, %v663
      %v665 = vsel %vm651, %v662, %v664
      %v666 = vshll.u32 %v626, 8
      %v667 = vmul.u32.u64.compose %v666, %v665
      %v668 = vextract.low.u32 %v667
      %v669 = vextract.high.u32 %v667
      %v670 = vmul.u32.u64.compose %v666, %v661
      %v671 = vextract.low.u32 %v670
      %v672 = vextract.high.u32 %v670
      %v673 = vmul.u32 %v666, %v657
      %v674 = vadd.s32 %v669, %v671
      %vm675 = vc.u32 %v669, %v671
      %v676 = vadd.s32 %v672, 1
      %v677 = vsel %vm675, %v676, %v672
      %v678 = vadd.s32 %v673, %v677
      %v679 = vadd.s32 %v678, 536870912
      %v680 = vshrl.u32 %v679, 30
      %v681 = vshll.u32 %v680, 30
      %v682 = vsub.s32 %v678, %v681
      %vm683 = vcmp.lt.s32.totalorder %v682, 0
      %v684 = vsub.s32 0, %v682
      %v685 = vsel %vm683, %v684, %v682
      %v686 = vclz %v685
      %v687 = vsub.s32 %v686, 2
      %vm688 = vcmp.gt.s32.totalorder 0, %v687
      %v689 = vsel %vm688, 0, %v687
      %v690 = vsub.s32 32, %v689
      %v691 = vshll.u32 %v682, %v689
      %v692 = vshrl.u32 %v674, %v690
      %v693 = vor.u32 %v691, %v692
      %v694 = vsub.s32 4294967266, %v689
      %v695 = vadd.s32 %v694, 127
      %v696 = vshll.u32 %v695, 23
      %v697 = vor.u32 4788187, %v696
      %v698 = vand.u32 2147483647, %v697
      %v700 = vcvt.s32.f32 %v693
      %v701 = vmul.f32 %v700, %v698
      %v702 = vxor.u32 %v701, 2147483648
      %v703 = vsel %vm620, %v702, %v701
      %v704 = vsub.s32 4, %v680
      %v705 = vsel %vm620, %v704, %v680
      %v706 = vsel %vm619, %v377, %v703
      %v707 = vsel %vm619, 0, %v705
      %v708 = vcosq.f32.pop %v706
      %v709 = vsinq.f32.pop %v706
      %vm710 = vweird.f32 %v377
      %v711 = vadd.s32 %v707, 3
      %v712 = vand.u32 %v711, 3
      %vm713 = vcmp.lt.s32.totalorder %v712, 2
      %vm714 = vcmp.eq.s32.totalorder %v712, 0
      %v715 = vxor.u32 %v709, 2147483648
      %v716 = vsel %vm714, %v708, %v715
      %vm717 = vcmp.eq.s32.totalorder %v712, 2
      %v718 = vxor.u32 %v708, 2147483648
      %v719 = vsel %vm717, %v718, %v709
      %v720 = vsel %vm713, %v716, %v719
      %v721 = vsel %vm710, nan, %v720
      %v722 = vand.u32 2147483647, %v383
      %vm723 = vcmp.le.f32.partialorder %v722, 0.7853982
      %vm724 = vcmp.lt.s32.totalorder %v383, 0
      %v725 = vand.u32 %v383, 2139095040
      %v726 = vshrl.u32 %v725, 23
      %v727 = vsub.s32 %v726, 127
      %v728 = vand.u32 2147483647, %v383
      %v729 = vand.u32 %v728, 8388607
      %v730 = vor.u32 %v729, 8388608
      %v731 = vsub.s32 0, %v730
      %v732 = vadd.s32 %v727, 1
      %vm733 = vcmp.gt.s32.totalorder %v732, 0
      %v734 = vsel %vm733, %v732, 0
      %v735 = vshrl.u32 %v734, 5
      %v736 = vand.u32 %v734, 31
      %v737 = vsub.s32 32, %v736
      %v738 = vshrl.u32 683565275, %v737
      %v739 = vshll.u32 683565275, %v736
      %v740 = vshrl.u32 2475754826, %v737
      %v741 = vor.u32 %v739, %v740
      %v742 = vshll.u32 2475754826, %v736
      %v743 = vshrl.u32 2131351028, %v737
      %v744 = vor.u32 %v742, %v743
      %v745 = vshll.u32 2131351028, %v736
      %v746 = vshrl.u32 2102212464, %v737
      %v747 = vor.u32 %v745, %v746
      %v748 = vshll.u32 2102212464, %v736
      %v749 = vshrl.u32 920167782, %v737
      %v750 = vor.u32 %v748, %v749
      %v751 = vshll.u32 920167782, %v736
      %v752 = vshrl.u32 1326507024, %v737
      %v753 = vor.u32 %v751, %v752
      %vm754 = vcmp.lt.s32.totalorder %v735, 1
      %vm755 = vcmp.lt.s32.totalorder %v735, 2
      %vm756 = vcmp.lt.s32.totalorder %v735, 3
      %vm757 = vcmp.lt.s32.totalorder %v735, 4
      %v758 = vsel %vm754, %v738, %v741
      %v759 = vsel %vm757, %v747, 2102212464
      %v760 = vsel %vm756, %v744, %v759
      %v761 = vsel %vm755, %v758, %v760
      %v762 = vsel %vm754, %v741, %v744
      %v763 = vsel %vm757, %v750, 920167782
      %v764 = vsel %vm756, %v747, %v763
      %v765 = vsel %vm755, %v762, %v764
      %v766 = vsel %vm754, %v744, %v747
      %v767 = vsel %vm757, %v753, 1326507024
      %v768 = vsel %vm756, %v750, %v767
      %v769 = vsel %vm755, %v766, %v768
      %v770 = vshll.u32 %v730, 8
      %v771 = vmul.u32.u64.compose %v770, %v769
      %v772 = vextract.low.u32 %v771
      %v773 = vextract.high.u32 %v771
      %v774 = vmul.u32.u64.compose %v770, %v765
      %v775 = vextract.low.u32 %v774
      %v776 = vextract.high.u32 %v774
      %v777 = vmul.u32 %v770, %v761
      %v778 = vadd.s32 %v773, %v775
      %vm779 = vc.u32 %v773, %v775
      %v780 = vadd.s32 %v776, 1
      %v781 = vsel %vm779, %v780, %v776
      %v782 = vadd.s32 %v777, %v781
      %v783 = vadd.s32 %v782, 536870912
      %v784 = vshrl.u32 %v783, 30
      %v785 = vshll.u32 %v784, 30
      %v786 = vsub.s32 %v782, %v785
      %vm787 = vcmp.lt.s32.totalorder %v786, 0
      %v788 = vsub.s32 0, %v786
      %v789 = vsel %vm787, %v788, %v786
      %v790 = vclz %v789
      %v791 = vsub.s32 %v790, 2
      %vm792 = vcmp.gt.s32.totalorder 0, %v791
      %v793 = vsel %vm792, 0, %v791
      %v794 = vsub.s32 32, %v793
      %v795 = vshll.u32 %v786, %v793
      %v796 = vshrl.u32 %v778, %v794
      %v797 = vor.u32 %v795, %v796
      %v798 = vsub.s32 4294967266, %v793
      %v799 = vadd.s32 %v798, 127
      %v800 = vshll.u32 %v799, 23
      %v801 = vor.u32 4788187, %v800
      %v802 = vand.u32 2147483647, %v801
      %v804 = vcvt.s32.f32 %v797
      %v805 = vmul.f32 %v804, %v802
      %v806 = vxor.u32 %v805, 2147483648
      %v807 = vsel %vm724, %v806, %v805
      %v808 = vsub.s32 4, %v784
      %v809 = vsel %vm724, %v808, %v784
      %v810 = vsel %vm723, %v383, %v807
      %v811 = vsel %vm723, 0, %v809
      %v812 = vcosq.f32.pop %v810
      %v813 = vsinq.f32.pop %v810
      %vm814 = vweird.f32 %v383
      %v815 = vadd.s32 %v811, 3
      %v816 = vand.u32 %v815, 3
      %vm817 = vcmp.lt.s32.totalorder %v816, 2
      %vm818 = vcmp.eq.s32.totalorder %v816, 0
      %v819 = vxor.u32 %v813, 2147483648
      %v820 = vsel %vm818, %v812, %v819
      %vm821 = vcmp.eq.s32.totalorder %v816, 2
      %v822 = vxor.u32 %v812, 2147483648
      %v823 = vsel %vm821, %v822, %v813
      %v824 = vsel %vm817, %v820, %v823
      %v825 = vsel %vm814, nan, %v824
      %v826 = vand.u32 2147483647, %v389
      %vm827 = vcmp.le.f32.partialorder %v826, 0.7853982
      %vm828 = vcmp.lt.s32.totalorder %v389, 0
      %v829 = vand.u32 %v389, 2139095040
      %v830 = vshrl.u32 %v829, 23
      %v831 = vsub.s32 %v830, 127
      %v832 = vand.u32 2147483647, %v389
      %v833 = vand.u32 %v832, 8388607
      %v834 = vor.u32 %v833, 8388608
      %v835 = vsub.s32 0, %v834
      %v836 = vadd.s32 %v831, 1
      %vm837 = vcmp.gt.s32.totalorder %v836, 0
      %v838 = vsel %vm837, %v836, 0
      %v839 = vshrl.u32 %v838, 5
      %v840 = vand.u32 %v838, 31
      %v841 = vsub.s32 32, %v840
      %v842 = vshrl.u32 683565275, %v841
      %v843 = vshll.u32 683565275, %v840
      %v844 = vshrl.u32 2475754826, %v841
      %v845 = vor.u32 %v843, %v844
      %v846 = vshll.u32 2475754826, %v840
      %v847 = vshrl.u32 2131351028, %v841
      %v848 = vor.u32 %v846, %v847
      %v849 = vshll.u32 2131351028, %v840
      %v850 = vshrl.u32 2102212464, %v841
      %v851 = vor.u32 %v849, %v850
      %v852 = vshll.u32 2102212464, %v840
      %v853 = vshrl.u32 920167782, %v841
      %v854 = vor.u32 %v852, %v853
      %v855 = vshll.u32 920167782, %v840
      %v856 = vshrl.u32 1326507024, %v841
      %v857 = vor.u32 %v855, %v856
      %vm858 = vcmp.lt.s32.totalorder %v839, 1
      %vm859 = vcmp.lt.s32.totalorder %v839, 2
      %vm860 = vcmp.lt.s32.totalorder %v839, 3
      %vm861 = vcmp.lt.s32.totalorder %v839, 4
      %v862 = vsel %vm858, %v842, %v845
      %v863 = vsel %vm861, %v851, 2102212464
      %v864 = vsel %vm860, %v848, %v863
      %v865 = vsel %vm859, %v862, %v864
      %v866 = vsel %vm858, %v845, %v848
      %v867 = vsel %vm861, %v854, 920167782
      %v868 = vsel %vm860, %v851, %v867
      %v869 = vsel %vm859, %v866, %v868
      %v870 = vsel %vm858, %v848, %v851
      %v871 = vsel %vm861, %v857, 1326507024
      %v872 = vsel %vm860, %v854, %v871
      %v873 = vsel %vm859, %v870, %v872
      %v874 = vshll.u32 %v834, 8
      %v875 = vmul.u32.u64.compose %v874, %v873
      %v876 = vextract.low.u32 %v875
      %v877 = vextract.high.u32 %v875
      %v878 = vmul.u32.u64.compose %v874, %v869
      %v879 = vextract.low.u32 %v878
      %v880 = vextract.high.u32 %v878
      %v881 = vmul.u32 %v874, %v865
      %v882 = vadd.s32 %v877, %v879
      %vm883 = vc.u32 %v877, %v879
      %v884 = vadd.s32 %v880, 1
      %v885 = vsel %vm883, %v884, %v880
      %v886 = vadd.s32 %v881, %v885
      %v887 = vadd.s32 %v886, 536870912
      %v888 = vshrl.u32 %v887, 30
      %v889 = vshll.u32 %v888, 30
      %v890 = vsub.s32 %v886, %v889
      %vm891 = vcmp.lt.s32.totalorder %v890, 0
      %v892 = vsub.s32 0, %v890
      %v893 = vsel %vm891, %v892, %v890
      %v894 = vclz %v893
      %v895 = vsub.s32 %v894, 2
      %vm896 = vcmp.gt.s32.totalorder 0, %v895
      %v897 = vsel %vm896, 0, %v895
      %v898 = vsub.s32 32, %v897
      %v899 = vshll.u32 %v890, %v897
      %v900 = vshrl.u32 %v882, %v898
      %v901 = vor.u32 %v899, %v900
      %v902 = vsub.s32 4294967266, %v897
      %v903 = vadd.s32 %v902, 127
      %v904 = vshll.u32 %v903, 23
      %v905 = vor.u32 4788187, %v904
      %v906 = vand.u32 2147483647, %v905
      %v908 = vcvt.s32.f32 %v901
      %v909 = vmul.f32 %v908, %v906
      %v910 = vxor.u32 %v909, 2147483648
      %v911 = vsel %vm828, %v910, %v909
      %v912 = vsub.s32 4, %v888
      %v913 = vsel %vm828, %v912, %v888
      %v914 = vsel %vm827, %v389, %v911
      %v915 = vsel %vm827, 0, %v913
      %v916 = vcosq.f32.pop %v914
      %v917 = vsinq.f32.pop %v914
      %vm918 = vweird.f32 %v389
      %v919 = vadd.s32 %v915, 3
      %v920 = vand.u32 %v919, 3
      %vm921 = vcmp.lt.s32.totalorder %v920, 2
      %vm922 = vcmp.eq.s32.totalorder %v920, 0
      %v923 = vxor.u32 %v917, 2147483648
      %v924 = vsel %vm922, %v916, %v923
      %vm925 = vcmp.eq.s32.totalorder %v920, 2
      %v926 = vxor.u32 %v916, 2147483648
      %v927 = vsel %vm925, %v926, %v917
      %v928 = vsel %vm921, %v924, %v927
      %v929 = vsel %vm918, nan, %v928
      %v930 = vand.u32 2147483647, %v395
      %vm931 = vcmp.le.f32.partialorder %v930, 0.7853982
      %vm932 = vcmp.lt.s32.totalorder %v395, 0
      %v933 = vand.u32 %v395, 2139095040
      %v934 = vshrl.u32 %v933, 23
      %v935 = vsub.s32 %v934, 127
      %v936 = vand.u32 2147483647, %v395
      %v937 = vand.u32 %v936, 8388607
      %v938 = vor.u32 %v937, 8388608
      %v939 = vsub.s32 0, %v938
      %v940 = vadd.s32 %v935, 1
      %vm941 = vcmp.gt.s32.totalorder %v940, 0
      %v942 = vsel %vm941, %v940, 0
      %v943 = vshrl.u32 %v942, 5
      %v944 = vand.u32 %v942, 31
      %v945 = vsub.s32 32, %v944
      %v946 = vshrl.u32 683565275, %v945
      %v947 = vshll.u32 683565275, %v944
      %v948 = vshrl.u32 2475754826, %v945
      %v949 = vor.u32 %v947, %v948
      %v950 = vshll.u32 2475754826, %v944
      %v951 = vshrl.u32 2131351028, %v945
      %v952 = vor.u32 %v950, %v951
      %v953 = vshll.u32 2131351028, %v944
      %v954 = vshrl.u32 2102212464, %v945
      %v955 = vor.u32 %v953, %v954
      %v956 = vshll.u32 2102212464, %v944
      %v957 = vshrl.u32 920167782, %v945
      %v958 = vor.u32 %v956, %v957
      %v959 = vshll.u32 920167782, %v944
      %v960 = vshrl.u32 1326507024, %v945
      %v961 = vor.u32 %v959, %v960
      %vm962 = vcmp.lt.s32.totalorder %v943, 1
      %vm963 = vcmp.lt.s32.totalorder %v943, 2
      %vm964 = vcmp.lt.s32.totalorder %v943, 3
      %vm965 = vcmp.lt.s32.totalorder %v943, 4
      %v966 = vsel %vm962, %v946, %v949
      %v967 = vsel %vm965, %v955, 2102212464
      %v968 = vsel %vm964, %v952, %v967
      %v969 = vsel %vm963, %v966, %v968
      %v970 = vsel %vm962, %v949, %v952
      %v971 = vsel %vm965, %v958, 920167782
      %v972 = vsel %vm964, %v955, %v971
      %v973 = vsel %vm963, %v970, %v972
      %v974 = vsel %vm962, %v952, %v955
      %v975 = vsel %vm965, %v961, 1326507024
      %v976 = vsel %vm964, %v958, %v975
      %v977 = vsel %vm963, %v974, %v976
      %v978 = vshll.u32 %v938, 8
      %v979 = vmul.u32.u64.compose %v978, %v977
      %v980 = vextract.low.u32 %v979
      %v981 = vextract.high.u32 %v979
      %v982 = vmul.u32.u64.compose %v978, %v973
      %v983 = vextract.low.u32 %v982
      %v984 = vextract.high.u32 %v982
      %v985 = vmul.u32 %v978, %v969
      %v986 = vadd.s32 %v981, %v983
      %vm987 = vc.u32 %v981, %v983
      %v988 = vadd.s32 %v984, 1
      %v989 = vsel %vm987, %v988, %v984
      %v990 = vadd.s32 %v985, %v989
      %v991 = vadd.s32 %v990, 536870912
      %v992 = vshrl.u32 %v991, 30
      %v993 = vshll.u32 %v992, 30
      %v994 = vsub.s32 %v990, %v993
      %vm995 = vcmp.lt.s32.totalorder %v994, 0
      %v996 = vsub.s32 0, %v994
      %v997 = vsel %vm995, %v996, %v994
      %v998 = vclz %v997
      %v999 = vsub.s32 %v998, 2
      %vm1000 = vcmp.gt.s32.totalorder 0, %v999
      %v1001 = vsel %vm1000, 0, %v999
      %v1002 = vsub.s32 32, %v1001
      %v1003 = vshll.u32 %v994, %v1001
      %v1004 = vshrl.u32 %v986, %v1002
      %v1005 = vor.u32 %v1003, %v1004
      %v1006 = vsub.s32 4294967266, %v1001
      %v1007 = vadd.s32 %v1006, 127
      %v1008 = vshll.u32 %v1007, 23
      %v1009 = vor.u32 4788187, %v1008
      %v1010 = vand.u32 2147483647, %v1009
      %v1012 = vcvt.s32.f32 %v1005
      %v1013 = vmul.f32 %v1012, %v1010
      %v1014 = vxor.u32 %v1013, 2147483648
      %v1015 = vsel %vm932, %v1014, %v1013
      %v1016 = vsub.s32 4, %v992
      %v1017 = vsel %vm932, %v1016, %v992
      %v1018 = vsel %vm931, %v395, %v1015
      %v1019 = vsel %vm931, 0, %v1017
      %v1020 = vcosq.f32.pop %v1018
      %v1021 = vsinq.f32.pop %v1018
      %vm1022 = vweird.f32 %v395
      %v1023 = vadd.s32 %v1019, 3
      %v1024 = vand.u32 %v1023, 3
      %vm1025 = vcmp.lt.s32.totalorder %v1024, 2
      %vm1026 = vcmp.eq.s32.totalorder %v1024, 0
      %v1027 = vxor.u32 %v1021, 2147483648
      %v1028 = vsel %vm1026, %v1020, %v1027
      %vm1029 = vcmp.eq.s32.totalorder %v1024, 2
      %v1030 = vxor.u32 %v1020, 2147483648
      %v1031 = vsel %vm1029, %v1030, %v1021
      %v1032 = vsel %vm1025, %v1028, %v1031
      %v1033 = vsel %vm1022, nan, %v1032
      %v1034 = vand.u32 2147483647, %v401
      %vm1035 = vcmp.le.f32.partialorder %v1034, 0.7853982
      %vm1036 = vcmp.lt.s32.totalorder %v401, 0
      %v1037 = vand.u32 %v401, 2139095040
      %v1038 = vshrl.u32 %v1037, 23
      %v1039 = vsub.s32 %v1038, 127
      %v1040 = vand.u32 2147483647, %v401
      %v1041 = vand.u32 %v1040, 8388607
      %v1042 = vor.u32 %v1041, 8388608
      %v1043 = vsub.s32 0, %v1042
      %v1044 = vadd.s32 %v1039, 1
      %vm1045 = vcmp.gt.s32.totalorder %v1044, 0
      %v1046 = vsel %vm1045, %v1044, 0
      %v1047 = vshrl.u32 %v1046, 5
      %v1048 = vand.u32 %v1046, 31
      %v1049 = vsub.s32 32, %v1048
      %v1050 = vshrl.u32 683565275, %v1049
      %v1051 = vshll.u32 683565275, %v1048
      %v1052 = vshrl.u32 2475754826, %v1049
      %v1053 = vor.u32 %v1051, %v1052
      %v1054 = vshll.u32 2475754826, %v1048
      %v1055 = vshrl.u32 2131351028, %v1049
      %v1056 = vor.u32 %v1054, %v1055
      %v1057 = vshll.u32 2131351028, %v1048
      %v1058 = vshrl.u32 2102212464, %v1049
      %v1059 = vor.u32 %v1057, %v1058
      %v1060 = vshll.u32 2102212464, %v1048
      %v1061 = vshrl.u32 920167782, %v1049
      %v1062 = vor.u32 %v1060, %v1061
      %v1063 = vshll.u32 920167782, %v1048
      %v1064 = vshrl.u32 1326507024, %v1049
      %v1065 = vor.u32 %v1063, %v1064
      %vm1066 = vcmp.lt.s32.totalorder %v1047, 1
      %vm1067 = vcmp.lt.s32.totalorder %v1047, 2
      %vm1068 = vcmp.lt.s32.totalorder %v1047, 3
      %vm1069 = vcmp.lt.s32.totalorder %v1047, 4
      %v1070 = vsel %vm1066, %v1050, %v1053
      %v1071 = vsel %vm1069, %v1059, 2102212464
      %v1072 = vsel %vm1068, %v1056, %v1071
      %v1073 = vsel %vm1067, %v1070, %v1072
      %v1074 = vsel %vm1066, %v1053, %v1056
      %v1075 = vsel %vm1069, %v1062, 920167782
      %v1076 = vsel %vm1068, %v1059, %v1075
      %v1077 = vsel %vm1067, %v1074, %v1076
      %v1078 = vsel %vm1066, %v1056, %v1059
      %v1079 = vsel %vm1069, %v1065, 1326507024
      %v1080 = vsel %vm1068, %v1062, %v1079
      %v1081 = vsel %vm1067, %v1078, %v1080
      %v1082 = vshll.u32 %v1042, 8
      %v1083 = vmul.u32.u64.compose %v1082, %v1081
      %v1084 = vextract.low.u32 %v1083
      %v1085 = vextract.high.u32 %v1083
      %v1086 = vmul.u32.u64.compose %v1082, %v1077
      %v1087 = vextract.low.u32 %v1086
      %v1088 = vextract.high.u32 %v1086
      %v1089 = vmul.u32 %v1082, %v1073
      %v1090 = vadd.s32 %v1085, %v1087
      %vm1091 = vc.u32 %v1085, %v1087
      %v1092 = vadd.s32 %v1088, 1
      %v1093 = vsel %vm1091, %v1092, %v1088
      %v1094 = vadd.s32 %v1089, %v1093
      %v1095 = vadd.s32 %v1094, 536870912
      %v1096 = vshrl.u32 %v1095, 30
      %v1097 = vshll.u32 %v1096, 30
      %v1098 = vsub.s32 %v1094, %v1097
      %vm1099 = vcmp.lt.s32.totalorder %v1098, 0
      %v1100 = vsub.s32 0, %v1098
      %v1101 = vsel %vm1099, %v1100, %v1098
      %v1102 = vclz %v1101
      %v1103 = vsub.s32 %v1102, 2
      %vm1104 = vcmp.gt.s32.totalorder 0, %v1103
      %v1105 = vsel %vm1104, 0, %v1103
      %v1106 = vsub.s32 32, %v1105
      %v1107 = vshll.u32 %v1098, %v1105
      %v1108 = vshrl.u32 %v1090, %v1106
      %v1109 = vor.u32 %v1107, %v1108
      %v1110 = vsub.s32 4294967266, %v1105
      %v1111 = vadd.s32 %v1110, 127
      %v1112 = vshll.u32 %v1111, 23
      %v1113 = vor.u32 4788187, %v1112
      %v1114 = vand.u32 2147483647, %v1113
      %v1116 = vcvt.s32.f32 %v1109
      %v1117 = vmul.f32 %v1116, %v1114
      %v1118 = vxor.u32 %v1117, 2147483648
      %v1119 = vsel %vm1036, %v1118, %v1117
      %v1120 = vsub.s32 4, %v1096
      %v1121 = vsel %vm1036, %v1120, %v1096
      %v1122 = vsel %vm1035, %v401, %v1119
      %v1123 = vsel %vm1035, 0, %v1121
      %v1124 = vcosq.f32.pop %v1122
      %v1125 = vsinq.f32.pop %v1122
      %vm1126 = vweird.f32 %v401
      %v1127 = vadd.s32 %v1123, 3
      %v1128 = vand.u32 %v1127, 3
      %vm1129 = vcmp.lt.s32.totalorder %v1128, 2
      %vm1130 = vcmp.eq.s32.totalorder %v1128, 0
      %v1131 = vxor.u32 %v1125, 2147483648
      %v1132 = vsel %vm1130, %v1124, %v1131
      %vm1133 = vcmp.eq.s32.totalorder %v1128, 2
      %v1134 = vxor.u32 %v1124, 2147483648
      %v1135 = vsel %vm1133, %v1134, %v1125
      %v1136 = vsel %vm1129, %v1132, %v1135
      %v1137 = vsel %vm1126, nan, %v1136
      %v1138 = vand.u32 2147483647, %v407
      %vm1139 = vcmp.le.f32.partialorder %v1138, 0.7853982
      %vm1140 = vcmp.lt.s32.totalorder %v407, 0
      %v1141 = vand.u32 %v407, 2139095040
      %v1142 = vshrl.u32 %v1141, 23
      %v1143 = vsub.s32 %v1142, 127
      %v1144 = vand.u32 2147483647, %v407
      %v1145 = vand.u32 %v1144, 8388607
      %v1146 = vor.u32 %v1145, 8388608
      %v1147 = vsub.s32 0, %v1146
      %v1148 = vadd.s32 %v1143, 1
      %vm1149 = vcmp.gt.s32.totalorder %v1148, 0
      %v1150 = vsel %vm1149, %v1148, 0
      %v1151 = vshrl.u32 %v1150, 5
      %v1152 = vand.u32 %v1150, 31
      %v1153 = vsub.s32 32, %v1152
      %v1154 = vshrl.u32 683565275, %v1153
      %v1155 = vshll.u32 683565275, %v1152
      %v1156 = vshrl.u32 2475754826, %v1153
      %v1157 = vor.u32 %v1155, %v1156
      %v1158 = vshll.u32 2475754826, %v1152
      %v1159 = vshrl.u32 2131351028, %v1153
      %v1160 = vor.u32 %v1158, %v1159
      %v1161 = vshll.u32 2131351028, %v1152
      %v1162 = vshrl.u32 2102212464, %v1153
      %v1163 = vor.u32 %v1161, %v1162
      %v1164 = vshll.u32 2102212464, %v1152
      %v1165 = vshrl.u32 920167782, %v1153
      %v1166 = vor.u32 %v1164, %v1165
      %v1167 = vshll.u32 920167782, %v1152
      %v1168 = vshrl.u32 1326507024, %v1153
      %v1169 = vor.u32 %v1167, %v1168
      %vm1170 = vcmp.lt.s32.totalorder %v1151, 1
      %vm1171 = vcmp.lt.s32.totalorder %v1151, 2
      %vm1172 = vcmp.lt.s32.totalorder %v1151, 3
      %vm1173 = vcmp.lt.s32.totalorder %v1151, 4
      %v1174 = vsel %vm1170, %v1154, %v1157
      %v1175 = vsel %vm1173, %v1163, 2102212464
      %v1176 = vsel %vm1172, %v1160, %v1175
      %v1177 = vsel %vm1171, %v1174, %v1176
      %v1178 = vsel %vm1170, %v1157, %v1160
      %v1179 = vsel %vm1173, %v1166, 920167782
      %v1180 = vsel %vm1172, %v1163, %v1179
      %v1181 = vsel %vm1171, %v1178, %v1180
      %v1182 = vsel %vm1170, %v1160, %v1163
      %v1183 = vsel %vm1173, %v1169, 1326507024
      %v1184 = vsel %vm1172, %v1166, %v1183
      %v1185 = vsel %vm1171, %v1182, %v1184
      %v1186 = vshll.u32 %v1146, 8
      %v1187 = vmul.u32.u64.compose %v1186, %v1185
      %v1188 = vextract.low.u32 %v1187
      %v1189 = vextract.high.u32 %v1187
      %v1190 = vmul.u32.u64.compose %v1186, %v1181
      %v1191 = vextract.low.u32 %v1190
      %v1192 = vextract.high.u32 %v1190
      %v1193 = vmul.u32 %v1186, %v1177
      %v1194 = vadd.s32 %v1189, %v1191
      %vm1195 = vc.u32 %v1189, %v1191
      %v1196 = vadd.s32 %v1192, 1
      %v1197 = vsel %vm1195, %v1196, %v1192
      %v1198 = vadd.s32 %v1193, %v1197
      %v1199 = vadd.s32 %v1198, 536870912
      %v1200 = vshrl.u32 %v1199, 30
      %v1201 = vshll.u32 %v1200, 30
      %v1202 = vsub.s32 %v1198, %v1201
      %vm1203 = vcmp.lt.s32.totalorder %v1202, 0
      %v1204 = vsub.s32 0, %v1202
      %v1205 = vsel %vm1203, %v1204, %v1202
      %v1206 = vclz %v1205
      %v1207 = vsub.s32 %v1206, 2
      %vm1208 = vcmp.gt.s32.totalorder 0, %v1207
      %v1209 = vsel %vm1208, 0, %v1207
      %v1210 = vsub.s32 32, %v1209
      %v1211 = vshll.u32 %v1202, %v1209
      %v1212 = vshrl.u32 %v1194, %v1210
      %v1213 = vor.u32 %v1211, %v1212
      %v1214 = vsub.s32 4294967266, %v1209
      %v1215 = vadd.s32 %v1214, 127
      %v1216 = vshll.u32 %v1215, 23
      %v1217 = vor.u32 4788187, %v1216
      %v1218 = vand.u32 2147483647, %v1217
      %v1220 = vcvt.s32.f32 %v1213
      %v1221 = vmul.f32 %v1220, %v1218
      %v1222 = vxor.u32 %v1221, 2147483648
      %v1223 = vsel %vm1140, %v1222, %v1221
      %v1224 = vsub.s32 4, %v1200
      %v1225 = vsel %vm1140, %v1224, %v1200
      %v1226 = vsel %vm1139, %v407, %v1223
      %v1227 = vsel %vm1139, 0, %v1225
      %v1228 = vcosq.f32.pop %v1226
      %v1229 = vsinq.f32.pop %v1226
      %vm1230 = vweird.f32 %v407
      %v1231 = vadd.s32 %v1227, 3
      %v1232 = vand.u32 %v1231, 3
      %vm1233 = vcmp.lt.s32.totalorder %v1232, 2
      %vm1234 = vcmp.eq.s32.totalorder %v1232, 0
      %v1235 = vxor.u32 %v1229, 2147483648
      %v1236 = vsel %vm1234, %v1228, %v1235
      %vm1237 = vcmp.eq.s32.totalorder %v1232, 2
      %v1238 = vxor.u32 %v1228, 2147483648
      %v1239 = vsel %vm1237, %v1238, %v1229
      %v1240 = vsel %vm1233, %v1236, %v1239
      %v1241 = vsel %vm1230, nan, %v1240
      %v1242 = vand.u32 2147483647, %v413
      %vm1243 = vcmp.le.f32.partialorder %v1242, 0.7853982
      %vm1244 = vcmp.lt.s32.totalorder %v413, 0
      %v1245 = vand.u32 %v413, 2139095040
      %v1246 = vshrl.u32 %v1245, 23
      %v1247 = vsub.s32 %v1246, 127
      %v1248 = vand.u32 2147483647, %v413
      %v1249 = vand.u32 %v1248, 8388607
      %v1250 = vor.u32 %v1249, 8388608
      %v1251 = vsub.s32 0, %v1250
      %v1252 = vadd.s32 %v1247, 1
      %vm1253 = vcmp.gt.s32.totalorder %v1252, 0
      %v1254 = vsel %vm1253, %v1252, 0
      %v1255 = vshrl.u32 %v1254, 5
      %v1256 = vand.u32 %v1254, 31
      %v1257 = vsub.s32 32, %v1256
      %v1258 = vshrl.u32 683565275, %v1257
      %v1259 = vshll.u32 683565275, %v1256
      %v1260 = vshrl.u32 2475754826, %v1257
      %v1261 = vor.u32 %v1259, %v1260
      %v1262 = vshll.u32 2475754826, %v1256
      %v1263 = vshrl.u32 2131351028, %v1257
      %v1264 = vor.u32 %v1262, %v1263
      %v1265 = vshll.u32 2131351028, %v1256
      %v1266 = vshrl.u32 2102212464, %v1257
      %v1267 = vor.u32 %v1265, %v1266
      %v1268 = vshll.u32 2102212464, %v1256
      %v1269 = vshrl.u32 920167782, %v1257
      %v1270 = vor.u32 %v1268, %v1269
      %v1271 = vshll.u32 920167782, %v1256
      %v1272 = vshrl.u32 1326507024, %v1257
      %v1273 = vor.u32 %v1271, %v1272
      %vm1274 = vcmp.lt.s32.totalorder %v1255, 1
      %vm1275 = vcmp.lt.s32.totalorder %v1255, 2
      %vm1276 = vcmp.lt.s32.totalorder %v1255, 3
      %vm1277 = vcmp.lt.s32.totalorder %v1255, 4
      %v1278 = vsel %vm1274, %v1258, %v1261
      %v1279 = vsel %vm1277, %v1267, 2102212464
      %v1280 = vsel %vm1276, %v1264, %v1279
      %v1281 = vsel %vm1275, %v1278, %v1280
      %v1282 = vsel %vm1274, %v1261, %v1264
      %v1283 = vsel %vm1277, %v1270, 920167782
      %v1284 = vsel %vm1276, %v1267, %v1283
      %v1285 = vsel %vm1275, %v1282, %v1284
      %v1286 = vsel %vm1274, %v1264, %v1267
      %v1287 = vsel %vm1277, %v1273, 1326507024
      %v1288 = vsel %vm1276, %v1270, %v1287
      %v1289 = vsel %vm1275, %v1286, %v1288
      %v1290 = vshll.u32 %v1250, 8
      %v1291 = vmul.u32.u64.compose %v1290, %v1289
      %v1292 = vextract.low.u32 %v1291
      %v1293 = vextract.high.u32 %v1291
      %v1294 = vmul.u32.u64.compose %v1290, %v1285
      %v1295 = vextract.low.u32 %v1294
      %v1296 = vextract.high.u32 %v1294
      %v1297 = vmul.u32 %v1290, %v1281
      %v1298 = vadd.s32 %v1293, %v1295
      %vm1299 = vc.u32 %v1293, %v1295
      %v1300 = vadd.s32 %v1296, 1
      %v1301 = vsel %vm1299, %v1300, %v1296
      %v1302 = vadd.s32 %v1297, %v1301
      %v1303 = vadd.s32 %v1302, 536870912
      %v1304 = vshrl.u32 %v1303, 30
      %v1305 = vshll.u32 %v1304, 30
      %v1306 = vsub.s32 %v1302, %v1305
      %vm1307 = vcmp.lt.s32.totalorder %v1306, 0
      %v1308 = vsub.s32 0, %v1306
      %v1309 = vsel %vm1307, %v1308, %v1306
      %v1310 = vclz %v1309
      %v1311 = vsub.s32 %v1310, 2
      %vm1312 = vcmp.gt.s32.totalorder 0, %v1311
      %v1313 = vsel %vm1312, 0, %v1311
      %v1314 = vsub.s32 32, %v1313
      %v1315 = vshll.u32 %v1306, %v1313
      %v1316 = vshrl.u32 %v1298, %v1314
      %v1317 = vor.u32 %v1315, %v1316
      %v1318 = vsub.s32 4294967266, %v1313
      %v1319 = vadd.s32 %v1318, 127
      %v1320 = vshll.u32 %v1319, 23
      %v1321 = vor.u32 4788187, %v1320
      %v1322 = vand.u32 2147483647, %v1321
      %v1324 = vcvt.s32.f32 %v1317
      %v1325 = vmul.f32 %v1324, %v1322
      %v1326 = vxor.u32 %v1325, 2147483648
      %v1327 = vsel %vm1244, %v1326, %v1325
      %v1328 = vsub.s32 4, %v1304
      %v1329 = vsel %vm1244, %v1328, %v1304
      %v1330 = vsel %vm1243, %v413, %v1327
      %v1331 = vsel %vm1243, 0, %v1329
      %v1332 = vcosq.f32.pop %v1330
      %v1333 = vsinq.f32.pop %v1330
      %vm1334 = vweird.f32 %v413
      %v1335 = vadd.s32 %v1331, 3
      %v1336 = vand.u32 %v1335, 3
      %vm1337 = vcmp.lt.s32.totalorder %v1336, 2
      %vm1338 = vcmp.eq.s32.totalorder %v1336, 0
      %v1339 = vxor.u32 %v1333, 2147483648
      %v1340 = vsel %vm1338, %v1332, %v1339
      %vm1341 = vcmp.eq.s32.totalorder %v1336, 2
      %v1342 = vxor.u32 %v1332, 2147483648
      %v1343 = vsel %vm1341, %v1342, %v1333
      %v1344 = vsel %vm1337, %v1340, %v1343
      %v1345 = vsel %vm1334, nan, %v1344
      %v1346 = vand.u32 2147483647, %v419
      %vm1347 = vcmp.le.f32.partialorder %v1346, 0.7853982
      %vm1348 = vcmp.lt.s32.totalorder %v419, 0
      %v1349 = vand.u32 %v419, 2139095040
      %v1350 = vshrl.u32 %v1349, 23
      %v1351 = vsub.s32 %v1350, 127
      %v1352 = vand.u32 2147483647, %v419
      %v1353 = vand.u32 %v1352, 8388607
      %v1354 = vor.u32 %v1353, 8388608
      %v1355 = vsub.s32 0, %v1354
      %v1356 = vadd.s32 %v1351, 1
      %vm1357 = vcmp.gt.s32.totalorder %v1356, 0
      %v1358 = vsel %vm1357, %v1356, 0
      %v1359 = vshrl.u32 %v1358, 5
      %v1360 = vand.u32 %v1358, 31
      %v1361 = vsub.s32 32, %v1360
      %v1362 = vshrl.u32 683565275, %v1361
      %v1363 = vshll.u32 683565275, %v1360
      %v1364 = vshrl.u32 2475754826, %v1361
      %v1365 = vor.u32 %v1363, %v1364
      %v1366 = vshll.u32 2475754826, %v1360
      %v1367 = vshrl.u32 2131351028, %v1361
      %v1368 = vor.u32 %v1366, %v1367
      %v1369 = vshll.u32 2131351028, %v1360
      %v1370 = vshrl.u32 2102212464, %v1361
      %v1371 = vor.u32 %v1369, %v1370
      %v1372 = vshll.u32 2102212464, %v1360
      %v1373 = vshrl.u32 920167782, %v1361
      %v1374 = vor.u32 %v1372, %v1373
      %v1375 = vshll.u32 920167782, %v1360
      %v1376 = vshrl.u32 1326507024, %v1361
      %v1377 = vor.u32 %v1375, %v1376
      %vm1378 = vcmp.lt.s32.totalorder %v1359, 1
      %vm1379 = vcmp.lt.s32.totalorder %v1359, 2
      %vm1380 = vcmp.lt.s32.totalorder %v1359, 3
      %vm1381 = vcmp.lt.s32.totalorder %v1359, 4
      %v1382 = vsel %vm1378, %v1362, %v1365
      %v1383 = vsel %vm1381, %v1371, 2102212464
      %v1384 = vsel %vm1380, %v1368, %v1383
      %v1385 = vsel %vm1379, %v1382, %v1384
      %v1386 = vsel %vm1378, %v1365, %v1368
      %v1387 = vsel %vm1381, %v1374, 920167782
      %v1388 = vsel %vm1380, %v1371, %v1387
      %v1389 = vsel %vm1379, %v1386, %v1388
      %v1390 = vsel %vm1378, %v1368, %v1371
      %v1391 = vsel %vm1381, %v1377, 1326507024
      %v1392 = vsel %vm1380, %v1374, %v1391
      %v1393 = vsel %vm1379, %v1390, %v1392
      %v1394 = vshll.u32 %v1354, 8
      %v1395 = vmul.u32.u64.compose %v1394, %v1393
      %v1396 = vextract.low.u32 %v1395
      %v1397 = vextract.high.u32 %v1395
      %v1398 = vmul.u32.u64.compose %v1394, %v1389
      %v1399 = vextract.low.u32 %v1398
      %v1400 = vextract.high.u32 %v1398
      %v1401 = vmul.u32 %v1394, %v1385
      %v1402 = vadd.s32 %v1397, %v1399
      %vm1403 = vc.u32 %v1397, %v1399
      %v1404 = vadd.s32 %v1400, 1
      %v1405 = vsel %vm1403, %v1404, %v1400
      %v1406 = vadd.s32 %v1401, %v1405
      %v1407 = vadd.s32 %v1406, 536870912
      %v1408 = vshrl.u32 %v1407, 30
      %v1409 = vshll.u32 %v1408, 30
      %v1410 = vsub.s32 %v1406, %v1409
      %vm1411 = vcmp.lt.s32.totalorder %v1410, 0
      %v1412 = vsub.s32 0, %v1410
      %v1413 = vsel %vm1411, %v1412, %v1410
      %v1414 = vclz %v1413
      %v1415 = vsub.s32 %v1414, 2
      %vm1416 = vcmp.gt.s32.totalorder 0, %v1415
      %v1417 = vsel %vm1416, 0, %v1415
      %v1418 = vsub.s32 32, %v1417
      %v1419 = vshll.u32 %v1410, %v1417
      %v1420 = vshrl.u32 %v1402, %v1418
      %v1421 = vor.u32 %v1419, %v1420
      %v1422 = vsub.s32 4294967266, %v1417
      %v1423 = vadd.s32 %v1422, 127
      %v1424 = vshll.u32 %v1423, 23
      %v1425 = vor.u32 4788187, %v1424
      %v1426 = vand.u32 2147483647, %v1425
      %v1428 = vcvt.s32.f32 %v1421
      %v1429 = vmul.f32 %v1428, %v1426
      %v1430 = vxor.u32 %v1429, 2147483648
      %v1431 = vsel %vm1348, %v1430, %v1429
      %v1432 = vsub.s32 4, %v1408
      %v1433 = vsel %vm1348, %v1432, %v1408
      %v1434 = vsel %vm1347, %v419, %v1431
      %v1435 = vsel %vm1347, 0, %v1433
      %v1436 = vcosq.f32.pop %v1434
      %v1437 = vsinq.f32.pop %v1434
      %vm1438 = vweird.f32 %v419
      %v1439 = vadd.s32 %v1435, 3
      %v1440 = vand.u32 %v1439, 3
      %vm1441 = vcmp.lt.s32.totalorder %v1440, 2
      %vm1442 = vcmp.eq.s32.totalorder %v1440, 0
      %v1443 = vxor.u32 %v1437, 2147483648
      %v1444 = vsel %vm1442, %v1436, %v1443
      %vm1445 = vcmp.eq.s32.totalorder %v1440, 2
      %v1446 = vxor.u32 %v1436, 2147483648
      %v1447 = vsel %vm1445, %v1446, %v1437
      %v1448 = vsel %vm1441, %v1444, %v1447
      %v1449 = vsel %vm1438, nan, %v1448
      %v1450 = vand.u32 2147483647, %v425
      %vm1451 = vcmp.le.f32.partialorder %v1450, 0.7853982
      %vm1452 = vcmp.lt.s32.totalorder %v425, 0
      %v1453 = vand.u32 %v425, 2139095040
      %v1454 = vshrl.u32 %v1453, 23
      %v1455 = vsub.s32 %v1454, 127
      %v1456 = vand.u32 2147483647, %v425
      %v1457 = vand.u32 %v1456, 8388607
      %v1458 = vor.u32 %v1457, 8388608
      %v1459 = vsub.s32 0, %v1458
      %v1460 = vadd.s32 %v1455, 1
      %vm1461 = vcmp.gt.s32.totalorder %v1460, 0
      %v1462 = vsel %vm1461, %v1460, 0
      %v1463 = vshrl.u32 %v1462, 5
      %v1464 = vand.u32 %v1462, 31
      %v1465 = vsub.s32 32, %v1464
      %v1466 = vshrl.u32 683565275, %v1465
      %v1467 = vshll.u32 683565275, %v1464
      %v1468 = vshrl.u32 2475754826, %v1465
      %v1469 = vor.u32 %v1467, %v1468
      %v1470 = vshll.u32 2475754826, %v1464
      %v1471 = vshrl.u32 2131351028, %v1465
      %v1472 = vor.u32 %v1470, %v1471
      %v1473 = vshll.u32 2131351028, %v1464
      %v1474 = vshrl.u32 2102212464, %v1465
      %v1475 = vor.u32 %v1473, %v1474
      %v1476 = vshll.u32 2102212464, %v1464
      %v1477 = vshrl.u32 920167782, %v1465
      %v1478 = vor.u32 %v1476, %v1477
      %v1479 = vshll.u32 920167782, %v1464
      %v1480 = vshrl.u32 1326507024, %v1465
      %v1481 = vor.u32 %v1479, %v1480
      %vm1482 = vcmp.lt.s32.totalorder %v1463, 1
      %vm1483 = vcmp.lt.s32.totalorder %v1463, 2
      %vm1484 = vcmp.lt.s32.totalorder %v1463, 3
      %vm1485 = vcmp.lt.s32.totalorder %v1463, 4
      %v1486 = vsel %vm1482, %v1466, %v1469
      %v1487 = vsel %vm1485, %v1475, 2102212464
      %v1488 = vsel %vm1484, %v1472, %v1487
      %v1489 = vsel %vm1483, %v1486, %v1488
      %v1490 = vsel %vm1482, %v1469, %v1472
      %v1491 = vsel %vm1485, %v1478, 920167782
      %v1492 = vsel %vm1484, %v1475, %v1491
      %v1493 = vsel %vm1483, %v1490, %v1492
      %v1494 = vsel %vm1482, %v1472, %v1475
      %v1495 = vsel %vm1485, %v1481, 1326507024
      %v1496 = vsel %vm1484, %v1478, %v1495
      %v1497 = vsel %vm1483, %v1494, %v1496
      %v1498 = vshll.u32 %v1458, 8
      %v1499 = vmul.u32.u64.compose %v1498, %v1497
      %v1500 = vextract.low.u32 %v1499
      %v1501 = vextract.high.u32 %v1499
      %v1502 = vmul.u32.u64.compose %v1498, %v1493
      %v1503 = vextract.low.u32 %v1502
      %v1504 = vextract.high.u32 %v1502
      %v1505 = vmul.u32 %v1498, %v1489
      %v1506 = vadd.s32 %v1501, %v1503
      %vm1507 = vc.u32 %v1501, %v1503
      %v1508 = vadd.s32 %v1504, 1
      %v1509 = vsel %vm1507, %v1508, %v1504
      %v1510 = vadd.s32 %v1505, %v1509
      %v1511 = vadd.s32 %v1510, 536870912
      %v1512 = vshrl.u32 %v1511, 30
      %v1513 = vshll.u32 %v1512, 30
      %v1514 = vsub.s32 %v1510, %v1513
      %vm1515 = vcmp.lt.s32.totalorder %v1514, 0
      %v1516 = vsub.s32 0, %v1514
      %v1517 = vsel %vm1515, %v1516, %v1514
      %v1518 = vclz %v1517
      %v1519 = vsub.s32 %v1518, 2
      %vm1520 = vcmp.gt.s32.totalorder 0, %v1519
      %v1521 = vsel %vm1520, 0, %v1519
      %v1522 = vsub.s32 32, %v1521
      %v1523 = vshll.u32 %v1514, %v1521
      %v1524 = vshrl.u32 %v1506, %v1522
      %v1525 = vor.u32 %v1523, %v1524
      %v1526 = vsub.s32 4294967266, %v1521
      %v1527 = vadd.s32 %v1526, 127
      %v1528 = vshll.u32 %v1527, 23
      %v1529 = vor.u32 4788187, %v1528
      %v1530 = vand.u32 2147483647, %v1529
      %v1532 = vcvt.s32.f32 %v1525
      %v1533 = vmul.f32 %v1532, %v1530
      %v1534 = vxor.u32 %v1533, 2147483648
      %v1535 = vsel %vm1452, %v1534, %v1533
      %v1536 = vsub.s32 4, %v1512
      %v1537 = vsel %vm1452, %v1536, %v1512
      %v1538 = vsel %vm1451, %v425, %v1535
      %v1539 = vsel %vm1451, 0, %v1537
      %v1540 = vcosq.f32.pop %v1538
      %v1541 = vsinq.f32.pop %v1538
      %vm1542 = vweird.f32 %v425
      %v1543 = vadd.s32 %v1539, 3
      %v1544 = vand.u32 %v1543, 3
      %vm1545 = vcmp.lt.s32.totalorder %v1544, 2
      %vm1546 = vcmp.eq.s32.totalorder %v1544, 0
      %v1547 = vxor.u32 %v1541, 2147483648
      %v1548 = vsel %vm1546, %v1540, %v1547
      %vm1549 = vcmp.eq.s32.totalorder %v1544, 2
      %v1550 = vxor.u32 %v1540, 2147483648
      %v1551 = vsel %vm1549, %v1550, %v1541
      %v1552 = vsel %vm1545, %v1548, %v1551
      %v1553 = vsel %vm1542, nan, %v1552
      %v1554 = vand.u32 2147483647, %v431
      %vm1555 = vcmp.le.f32.partialorder %v1554, 0.7853982
      %vm1556 = vcmp.lt.s32.totalorder %v431, 0
      %v1557 = vand.u32 %v431, 2139095040
      %v1558 = vshrl.u32 %v1557, 23
      %v1559 = vsub.s32 %v1558, 127
      %v1560 = vand.u32 2147483647, %v431
      %v1561 = vand.u32 %v1560, 8388607
      %v1562 = vor.u32 %v1561, 8388608
      %v1563 = vsub.s32 0, %v1562
      %v1564 = vadd.s32 %v1559, 1
      %vm1565 = vcmp.gt.s32.totalorder %v1564, 0
      %v1566 = vsel %vm1565, %v1564, 0
      %v1567 = vshrl.u32 %v1566, 5
      %v1568 = vand.u32 %v1566, 31
      %v1569 = vsub.s32 32, %v1568
      %v1570 = vshrl.u32 683565275, %v1569
      %v1571 = vshll.u32 683565275, %v1568
      %v1572 = vshrl.u32 2475754826, %v1569
      %v1573 = vor.u32 %v1571, %v1572
      %v1574 = vshll.u32 2475754826, %v1568
      %v1575 = vshrl.u32 2131351028, %v1569
      %v1576 = vor.u32 %v1574, %v1575
      %v1577 = vshll.u32 2131351028, %v1568
      %v1578 = vshrl.u32 2102212464, %v1569
      %v1579 = vor.u32 %v1577, %v1578
      %v1580 = vshll.u32 2102212464, %v1568
      %v1581 = vshrl.u32 920167782, %v1569
      %v1582 = vor.u32 %v1580, %v1581
      %v1583 = vshll.u32 920167782, %v1568
      %v1584 = vshrl.u32 1326507024, %v1569
      %v1585 = vor.u32 %v1583, %v1584
      %vm1586 = vcmp.lt.s32.totalorder %v1567, 1
      %vm1587 = vcmp.lt.s32.totalorder %v1567, 2
      %vm1588 = vcmp.lt.s32.totalorder %v1567, 3
      %vm1589 = vcmp.lt.s32.totalorder %v1567, 4
      %v1590 = vsel %vm1586, %v1570, %v1573
      %v1591 = vsel %vm1589, %v1579, 2102212464
      %v1592 = vsel %vm1588, %v1576, %v1591
      %v1593 = vsel %vm1587, %v1590, %v1592
      %v1594 = vsel %vm1586, %v1573, %v1576
      %v1595 = vsel %vm1589, %v1582, 920167782
      %v1596 = vsel %vm1588, %v1579, %v1595
      %v1597 = vsel %vm1587, %v1594, %v1596
      %v1598 = vsel %vm1586, %v1576, %v1579
      %v1599 = vsel %vm1589, %v1585, 1326507024
      %v1600 = vsel %vm1588, %v1582, %v1599
      %v1601 = vsel %vm1587, %v1598, %v1600
      %v1602 = vshll.u32 %v1562, 8
      %v1603 = vmul.u32.u64.compose %v1602, %v1601
      %v1604 = vextract.low.u32 %v1603
      %v1605 = vextract.high.u32 %v1603
      %v1606 = vmul.u32.u64.compose %v1602, %v1597
      %v1607 = vextract.low.u32 %v1606
      %v1608 = vextract.high.u32 %v1606
      %v1609 = vmul.u32 %v1602, %v1593
      %v1610 = vadd.s32 %v1605, %v1607
      %vm1611 = vc.u32 %v1605, %v1607
      %v1612 = vadd.s32 %v1608, 1
      %v1613 = vsel %vm1611, %v1612, %v1608
      %v1614 = vadd.s32 %v1609, %v1613
      %v1615 = vadd.s32 %v1614, 536870912
      %v1616 = vshrl.u32 %v1615, 30
      %v1617 = vshll.u32 %v1616, 30
      %v1618 = vsub.s32 %v1614, %v1617
      %vm1619 = vcmp.lt.s32.totalorder %v1618, 0
      %v1620 = vsub.s32 0, %v1618
      %v1621 = vsel %vm1619, %v1620, %v1618
      %v1622 = vclz %v1621
      %v1623 = vsub.s32 %v1622, 2
      %vm1624 = vcmp.gt.s32.totalorder 0, %v1623
      %v1625 = vsel %vm1624, 0, %v1623
      %v1626 = vsub.s32 32, %v1625
      %v1627 = vshll.u32 %v1618, %v1625
      %v1628 = vshrl.u32 %v1610, %v1626
      %v1629 = vor.u32 %v1627, %v1628
      %v1630 = vsub.s32 4294967266, %v1625
      %v1631 = vadd.s32 %v1630, 127
      %v1632 = vshll.u32 %v1631, 23
      %v1633 = vor.u32 4788187, %v1632
      %v1634 = vand.u32 2147483647, %v1633
      %v1636 = vcvt.s32.f32 %v1629
      %v1637 = vmul.f32 %v1636, %v1634
      %v1638 = vxor.u32 %v1637, 2147483648
      %v1639 = vsel %vm1556, %v1638, %v1637
      %v1640 = vsub.s32 4, %v1616
      %v1641 = vsel %vm1556, %v1640, %v1616
      %v1642 = vsel %vm1555, %v431, %v1639
      %v1643 = vsel %vm1555, 0, %v1641
      %v1644 = vcosq.f32.pop %v1642
      %v1645 = vsinq.f32.pop %v1642
      %vm1646 = vweird.f32 %v431
      %v1647 = vadd.s32 %v1643, 3
      %v1648 = vand.u32 %v1647, 3
      %vm1649 = vcmp.lt.s32.totalorder %v1648, 2
      %vm1650 = vcmp.eq.s32.totalorder %v1648, 0
      %v1651 = vxor.u32 %v1645, 2147483648
      %v1652 = vsel %vm1650, %v1644, %v1651
      %vm1653 = vcmp.eq.s32.totalorder %v1648, 2
      %v1654 = vxor.u32 %v1644, 2147483648
      %v1655 = vsel %vm1653, %v1654, %v1645
      %v1656 = vsel %vm1649, %v1652, %v1655
      %v1657 = vsel %vm1646, nan, %v1656
      %v1658 = vand.u32 2147483647, %v437
      %vm1659 = vcmp.le.f32.partialorder %v1658, 0.7853982
      %vm1660 = vcmp.lt.s32.totalorder %v437, 0
      %v1661 = vand.u32 %v437, 2139095040
      %v1662 = vshrl.u32 %v1661, 23
      %v1663 = vsub.s32 %v1662, 127
      %v1664 = vand.u32 2147483647, %v437
      %v1665 = vand.u32 %v1664, 8388607
      %v1666 = vor.u32 %v1665, 8388608
      %v1667 = vsub.s32 0, %v1666
      %v1668 = vadd.s32 %v1663, 1
      %vm1669 = vcmp.gt.s32.totalorder %v1668, 0
      %v1670 = vsel %vm1669, %v1668, 0
      %v1671 = vshrl.u32 %v1670, 5
      %v1672 = vand.u32 %v1670, 31
      %v1673 = vsub.s32 32, %v1672
      %v1674 = vshrl.u32 683565275, %v1673
      %v1675 = vshll.u32 683565275, %v1672
      %v1676 = vshrl.u32 2475754826, %v1673
      %v1677 = vor.u32 %v1675, %v1676
      %v1678 = vshll.u32 2475754826, %v1672
      %v1679 = vshrl.u32 2131351028, %v1673
      %v1680 = vor.u32 %v1678, %v1679
      %v1681 = vshll.u32 2131351028, %v1672
      %v1682 = vshrl.u32 2102212464, %v1673
      %v1683 = vor.u32 %v1681, %v1682
      %v1684 = vshll.u32 2102212464, %v1672
      %v1685 = vshrl.u32 920167782, %v1673
      %v1686 = vor.u32 %v1684, %v1685
      %v1687 = vshll.u32 920167782, %v1672
      %v1688 = vshrl.u32 1326507024, %v1673
      %v1689 = vor.u32 %v1687, %v1688
      %vm1690 = vcmp.lt.s32.totalorder %v1671, 1
      %vm1691 = vcmp.lt.s32.totalorder %v1671, 2
      %vm1692 = vcmp.lt.s32.totalorder %v1671, 3
      %vm1693 = vcmp.lt.s32.totalorder %v1671, 4
      %v1694 = vsel %vm1690, %v1674, %v1677
      %v1695 = vsel %vm1693, %v1683, 2102212464
      %v1696 = vsel %vm1692, %v1680, %v1695
      %v1697 = vsel %vm1691, %v1694, %v1696
      %v1698 = vsel %vm1690, %v1677, %v1680
      %v1699 = vsel %vm1693, %v1686, 920167782
      %v1700 = vsel %vm1692, %v1683, %v1699
      %v1701 = vsel %vm1691, %v1698, %v1700
      %v1702 = vsel %vm1690, %v1680, %v1683
      %v1703 = vsel %vm1693, %v1689, 1326507024
      %v1704 = vsel %vm1692, %v1686, %v1703
      %v1705 = vsel %vm1691, %v1702, %v1704
      %v1706 = vshll.u32 %v1666, 8
      %v1707 = vmul.u32.u64.compose %v1706, %v1705
      %v1708 = vextract.low.u32 %v1707
      %v1709 = vextract.high.u32 %v1707
      %v1710 = vmul.u32.u64.compose %v1706, %v1701
      %v1711 = vextract.low.u32 %v1710
      %v1712 = vextract.high.u32 %v1710
      %v1713 = vmul.u32 %v1706, %v1697
      %v1714 = vadd.s32 %v1709, %v1711
      %vm1715 = vc.u32 %v1709, %v1711
      %v1716 = vadd.s32 %v1712, 1
      %v1717 = vsel %vm1715, %v1716, %v1712
      %v1718 = vadd.s32 %v1713, %v1717
      %v1719 = vadd.s32 %v1718, 536870912
      %v1720 = vshrl.u32 %v1719, 30
      %v1721 = vshll.u32 %v1720, 30
      %v1722 = vsub.s32 %v1718, %v1721
      %vm1723 = vcmp.lt.s32.totalorder %v1722, 0
      %v1724 = vsub.s32 0, %v1722
      %v1725 = vsel %vm1723, %v1724, %v1722
      %v1726 = vclz %v1725
      %v1727 = vsub.s32 %v1726, 2
      %vm1728 = vcmp.gt.s32.totalorder 0, %v1727
      %v1729 = vsel %vm1728, 0, %v1727
      %v1730 = vsub.s32 32, %v1729
      %v1731 = vshll.u32 %v1722, %v1729
      %v1732 = vshrl.u32 %v1714, %v1730
      %v1733 = vor.u32 %v1731, %v1732
      %v1734 = vsub.s32 4294967266, %v1729
      %v1735 = vadd.s32 %v1734, 127
      %v1736 = vshll.u32 %v1735, 23
      %v1737 = vor.u32 4788187, %v1736
      %v1738 = vand.u32 2147483647, %v1737
      %v1740 = vcvt.s32.f32 %v1733
      %v1741 = vmul.f32 %v1740, %v1738
      %v1742 = vxor.u32 %v1741, 2147483648
      %v1743 = vsel %vm1660, %v1742, %v1741
      %v1744 = vsub.s32 4, %v1720
      %v1745 = vsel %vm1660, %v1744, %v1720
      %v1746 = vsel %vm1659, %v437, %v1743
      %v1747 = vsel %vm1659, 0, %v1745
      %v1748 = vcosq.f32.pop %v1746
      %v1749 = vsinq.f32.pop %v1746
      %vm1750 = vweird.f32 %v437
      %v1751 = vadd.s32 %v1747, 3
      %v1752 = vand.u32 %v1751, 3
      %vm1753 = vcmp.lt.s32.totalorder %v1752, 2
      %vm1754 = vcmp.eq.s32.totalorder %v1752, 0
      %v1755 = vxor.u32 %v1749, 2147483648
      %v1756 = vsel %vm1754, %v1748, %v1755
      %vm1757 = vcmp.eq.s32.totalorder %v1752, 2
      %v1758 = vxor.u32 %v1748, 2147483648
      %v1759 = vsel %vm1757, %v1758, %v1749
      %v1760 = vsel %vm1753, %v1756, %v1759
      %v1761 = vsel %vm1750, nan, %v1760
      %v1762 = vand.u32 2147483647, %v443
      %vm1763 = vcmp.le.f32.partialorder %v1762, 0.7853982
      %vm1764 = vcmp.lt.s32.totalorder %v443, 0
      %v1765 = vand.u32 %v443, 2139095040
      %v1766 = vshrl.u32 %v1765, 23
      %v1767 = vsub.s32 %v1766, 127
      %v1768 = vand.u32 2147483647, %v443
      %v1769 = vand.u32 %v1768, 8388607
      %v1770 = vor.u32 %v1769, 8388608
      %v1771 = vsub.s32 0, %v1770
      %v1772 = vadd.s32 %v1767, 1
      %vm1773 = vcmp.gt.s32.totalorder %v1772, 0
      %v1774 = vsel %vm1773, %v1772, 0
      %v1775 = vshrl.u32 %v1774, 5
      %v1776 = vand.u32 %v1774, 31
      %v1777 = vsub.s32 32, %v1776
      %v1778 = vshrl.u32 683565275, %v1777
      %v1779 = vshll.u32 683565275, %v1776
      %v1780 = vshrl.u32 2475754826, %v1777
      %v1781 = vor.u32 %v1779, %v1780
      %v1782 = vshll.u32 2475754826, %v1776
      %v1783 = vshrl.u32 2131351028, %v1777
      %v1784 = vor.u32 %v1782, %v1783
      %v1785 = vshll.u32 2131351028, %v1776
      %v1786 = vshrl.u32 2102212464, %v1777
      %v1787 = vor.u32 %v1785, %v1786
      %v1788 = vshll.u32 2102212464, %v1776
      %v1789 = vshrl.u32 920167782, %v1777
      %v1790 = vor.u32 %v1788, %v1789
      %v1791 = vshll.u32 920167782, %v1776
      %v1792 = vshrl.u32 1326507024, %v1777
      %v1793 = vor.u32 %v1791, %v1792
      %vm1794 = vcmp.lt.s32.totalorder %v1775, 1
      %vm1795 = vcmp.lt.s32.totalorder %v1775, 2
      %vm1796 = vcmp.lt.s32.totalorder %v1775, 3
      %vm1797 = vcmp.lt.s32.totalorder %v1775, 4
      %v1798 = vsel %vm1794, %v1778, %v1781
      %v1799 = vsel %vm1797, %v1787, 2102212464
      %v1800 = vsel %vm1796, %v1784, %v1799
      %v1801 = vsel %vm1795, %v1798, %v1800
      %v1802 = vsel %vm1794, %v1781, %v1784
      %v1803 = vsel %vm1797, %v1790, 920167782
      %v1804 = vsel %vm1796, %v1787, %v1803
      %v1805 = vsel %vm1795, %v1802, %v1804
      %v1806 = vsel %vm1794, %v1784, %v1787
      %v1807 = vsel %vm1797, %v1793, 1326507024
      %v1808 = vsel %vm1796, %v1790, %v1807
      %v1809 = vsel %vm1795, %v1806, %v1808
      %v1810 = vshll.u32 %v1770, 8
      %v1811 = vmul.u32.u64.compose %v1810, %v1809
      %v1812 = vextract.low.u32 %v1811
      %v1813 = vextract.high.u32 %v1811
      %v1814 = vmul.u32.u64.compose %v1810, %v1805
      %v1815 = vextract.low.u32 %v1814
      %v1816 = vextract.high.u32 %v1814
      %v1817 = vmul.u32 %v1810, %v1801
      %v1818 = vadd.s32 %v1813, %v1815
      %vm1819 = vc.u32 %v1813, %v1815
      %v1820 = vadd.s32 %v1816, 1
      %v1821 = vsel %vm1819, %v1820, %v1816
      %v1822 = vadd.s32 %v1817, %v1821
      %v1823 = vadd.s32 %v1822, 536870912
      %v1824 = vshrl.u32 %v1823, 30
      %v1825 = vshll.u32 %v1824, 30
      %v1826 = vsub.s32 %v1822, %v1825
      %vm1827 = vcmp.lt.s32.totalorder %v1826, 0
      %v1828 = vsub.s32 0, %v1826
      %v1829 = vsel %vm1827, %v1828, %v1826
      %v1830 = vclz %v1829
      %v1831 = vsub.s32 %v1830, 2
      %vm1832 = vcmp.gt.s32.totalorder 0, %v1831
      %v1833 = vsel %vm1832, 0, %v1831
      %v1834 = vsub.s32 32, %v1833
      %v1835 = vshll.u32 %v1826, %v1833
      %v1836 = vshrl.u32 %v1818, %v1834
      %v1837 = vor.u32 %v1835, %v1836
      %v1838 = vsub.s32 4294967266, %v1833
      %v1839 = vadd.s32 %v1838, 127
      %v1840 = vshll.u32 %v1839, 23
      %v1841 = vor.u32 4788187, %v1840
      %v1842 = vand.u32 2147483647, %v1841
      %v1844 = vcvt.s32.f32 %v1837
      %v1845 = vmul.f32 %v1844, %v1842
      %v1846 = vxor.u32 %v1845, 2147483648
      %v1847 = vsel %vm1764, %v1846, %v1845
      %v1848 = vsub.s32 4, %v1824
      %v1849 = vsel %vm1764, %v1848, %v1824
      %v1850 = vsel %vm1763, %v443, %v1847
      %v1851 = vsel %vm1763, 0, %v1849
      %v1852 = vcosq.f32.pop %v1850
      %v1853 = vsinq.f32.pop %v1850
      %vm1854 = vweird.f32 %v443
      %v1855 = vadd.s32 %v1851, 3
      %v1856 = vand.u32 %v1855, 3
      %vm1857 = vcmp.lt.s32.totalorder %v1856, 2
      %vm1858 = vcmp.eq.s32.totalorder %v1856, 0
      %v1859 = vxor.u32 %v1853, 2147483648
      %v1860 = vsel %vm1858, %v1852, %v1859
      %vm1861 = vcmp.eq.s32.totalorder %v1856, 2
      %v1862 = vxor.u32 %v1852, 2147483648
      %v1863 = vsel %vm1861, %v1862, %v1853
      %v1864 = vsel %vm1857, %v1860, %v1863
      %v1865 = vsel %vm1854, nan, %v1864
      %v1866 = vand.u32 2147483647, %v449
      %vm1867 = vcmp.le.f32.partialorder %v1866, 0.7853982
      %vm1868 = vcmp.lt.s32.totalorder %v449, 0
      %v1869 = vand.u32 %v449, 2139095040
      %v1870 = vshrl.u32 %v1869, 23
      %v1871 = vsub.s32 %v1870, 127
      %v1872 = vand.u32 2147483647, %v449
      %v1873 = vand.u32 %v1872, 8388607
      %v1874 = vor.u32 %v1873, 8388608
      %v1875 = vsub.s32 0, %v1874
      %v1876 = vadd.s32 %v1871, 1
      %vm1877 = vcmp.gt.s32.totalorder %v1876, 0
      %v1878 = vsel %vm1877, %v1876, 0
      %v1879 = vshrl.u32 %v1878, 5
      %v1880 = vand.u32 %v1878, 31
      %v1881 = vsub.s32 32, %v1880
      %v1882 = vshrl.u32 683565275, %v1881
      %v1883 = vshll.u32 683565275, %v1880
      %v1884 = vshrl.u32 2475754826, %v1881
      %v1885 = vor.u32 %v1883, %v1884
      %v1886 = vshll.u32 2475754826, %v1880
      %v1887 = vshrl.u32 2131351028, %v1881
      %v1888 = vor.u32 %v1886, %v1887
      %v1889 = vshll.u32 2131351028, %v1880
      %v1890 = vshrl.u32 2102212464, %v1881
      %v1891 = vor.u32 %v1889, %v1890
      %v1892 = vshll.u32 2102212464, %v1880
      %v1893 = vshrl.u32 920167782, %v1881
      %v1894 = vor.u32 %v1892, %v1893
      %v1895 = vshll.u32 920167782, %v1880
      %v1896 = vshrl.u32 1326507024, %v1881
      %v1897 = vor.u32 %v1895, %v1896
      %vm1898 = vcmp.lt.s32.totalorder %v1879, 1
      %vm1899 = vcmp.lt.s32.totalorder %v1879, 2
      %vm1900 = vcmp.lt.s32.totalorder %v1879, 3
      %vm1901 = vcmp.lt.s32.totalorder %v1879, 4
      %v1902 = vsel %vm1898, %v1882, %v1885
      %v1903 = vsel %vm1901, %v1891, 2102212464
      %v1904 = vsel %vm1900, %v1888, %v1903
      %v1905 = vsel %vm1899, %v1902, %v1904
      %v1906 = vsel %vm1898, %v1885, %v1888
      %v1907 = vsel %vm1901, %v1894, 920167782
      %v1908 = vsel %vm1900, %v1891, %v1907
      %v1909 = vsel %vm1899, %v1906, %v1908
      %v1910 = vsel %vm1898, %v1888, %v1891
      %v1911 = vsel %vm1901, %v1897, 1326507024
      %v1912 = vsel %vm1900, %v1894, %v1911
      %v1913 = vsel %vm1899, %v1910, %v1912
      %v1914 = vshll.u32 %v1874, 8
      %v1915 = vmul.u32.u64.compose %v1914, %v1913
      %v1916 = vextract.low.u32 %v1915
      %v1917 = vextract.high.u32 %v1915
      %v1918 = vmul.u32.u64.compose %v1914, %v1909
      %v1919 = vextract.low.u32 %v1918
      %v1920 = vextract.high.u32 %v1918
      %v1921 = vmul.u32 %v1914, %v1905
      %v1922 = vadd.s32 %v1917, %v1919
      %vm1923 = vc.u32 %v1917, %v1919
      %v1924 = vadd.s32 %v1920, 1
      %v1925 = vsel %vm1923, %v1924, %v1920
      %v1926 = vadd.s32 %v1921, %v1925
      %v1927 = vadd.s32 %v1926, 536870912
      %v1928 = vshrl.u32 %v1927, 30
      %v1929 = vshll.u32 %v1928, 30
      %v1930 = vsub.s32 %v1926, %v1929
      %vm1931 = vcmp.lt.s32.totalorder %v1930, 0
      %v1932 = vsub.s32 0, %v1930
      %v1933 = vsel %vm1931, %v1932, %v1930
      %v1934 = vclz %v1933
      %v1935 = vsub.s32 %v1934, 2
      %vm1936 = vcmp.gt.s32.totalorder 0, %v1935
      %v1937 = vsel %vm1936, 0, %v1935
      %v1938 = vsub.s32 32, %v1937
      %v1939 = vshll.u32 %v1930, %v1937
      %v1940 = vshrl.u32 %v1922, %v1938
      %v1941 = vor.u32 %v1939, %v1940
      %v1942 = vsub.s32 4294967266, %v1937
      %v1943 = vadd.s32 %v1942, 127
      %v1944 = vshll.u32 %v1943, 23
      %v1945 = vor.u32 4788187, %v1944
      %v1946 = vand.u32 2147483647, %v1945
      %v1948 = vcvt.s32.f32 %v1941
      %v1949 = vmul.f32 %v1948, %v1946
      %v1950 = vxor.u32 %v1949, 2147483648
      %v1951 = vsel %vm1868, %v1950, %v1949
      %v1952 = vsub.s32 4, %v1928
      %v1953 = vsel %vm1868, %v1952, %v1928
      %v1954 = vsel %vm1867, %v449, %v1951
      %v1955 = vsel %vm1867, 0, %v1953
      %v1956 = vcosq.f32.pop %v1954
      %v1957 = vsinq.f32.pop %v1954
      %vm1958 = vweird.f32 %v449
      %v1959 = vadd.s32 %v1955, 3
      %v1960 = vand.u32 %v1959, 3
      %vm1961 = vcmp.lt.s32.totalorder %v1960, 2
      %vm1962 = vcmp.eq.s32.totalorder %v1960, 0
      %v1963 = vxor.u32 %v1957, 2147483648
      %v1964 = vsel %vm1962, %v1956, %v1963
      %vm1965 = vcmp.eq.s32.totalorder %v1960, 2
      %v1966 = vxor.u32 %v1956, 2147483648
      %v1967 = vsel %vm1965, %v1966, %v1957
      %v1968 = vsel %vm1961, %v1964, %v1967
      %v1969 = vsel %vm1958, nan, %v1968
      %v1970 = vand.u32 2147483647, %v455
      %vm1971 = vcmp.le.f32.partialorder %v1970, 0.7853982
      %vm1972 = vcmp.lt.s32.totalorder %v455, 0
      %v1973 = vand.u32 %v455, 2139095040
      %v1974 = vshrl.u32 %v1973, 23
      %v1975 = vsub.s32 %v1974, 127
      %v1976 = vand.u32 2147483647, %v455
      %v1977 = vand.u32 %v1976, 8388607
      %v1978 = vor.u32 %v1977, 8388608
      %v1979 = vsub.s32 0, %v1978
      %v1980 = vadd.s32 %v1975, 1
      %vm1981 = vcmp.gt.s32.totalorder %v1980, 0
      %v1982 = vsel %vm1981, %v1980, 0
      %v1983 = vshrl.u32 %v1982, 5
      %v1984 = vand.u32 %v1982, 31
      %v1985 = vsub.s32 32, %v1984
      %v1986 = vshrl.u32 683565275, %v1985
      %v1987 = vshll.u32 683565275, %v1984
      %v1988 = vshrl.u32 2475754826, %v1985
      %v1989 = vor.u32 %v1987, %v1988
      %v1990 = vshll.u32 2475754826, %v1984
      %v1991 = vshrl.u32 2131351028, %v1985
      %v1992 = vor.u32 %v1990, %v1991
      %v1993 = vshll.u32 2131351028, %v1984
      %v1994 = vshrl.u32 2102212464, %v1985
      %v1995 = vor.u32 %v1993, %v1994
      %v1996 = vshll.u32 2102212464, %v1984
      %v1997 = vshrl.u32 920167782, %v1985
      %v1998 = vor.u32 %v1996, %v1997
      %v1999 = vshll.u32 920167782, %v1984
      %v2000 = vshrl.u32 1326507024, %v1985
      %v2001 = vor.u32 %v1999, %v2000
      %vm2002 = vcmp.lt.s32.totalorder %v1983, 1
      %vm2003 = vcmp.lt.s32.totalorder %v1983, 2
      %vm2004 = vcmp.lt.s32.totalorder %v1983, 3
      %vm2005 = vcmp.lt.s32.totalorder %v1983, 4
      %v2006 = vsel %vm2002, %v1986, %v1989
      %v2007 = vsel %vm2005, %v1995, 2102212464
      %v2008 = vsel %vm2004, %v1992, %v2007
      %v2009 = vsel %vm2003, %v2006, %v2008
      %v2010 = vsel %vm2002, %v1989, %v1992
      %v2011 = vsel %vm2005, %v1998, 920167782
      %v2012 = vsel %vm2004, %v1995, %v2011
      %v2013 = vsel %vm2003, %v2010, %v2012
      %v2014 = vsel %vm2002, %v1992, %v1995
      %v2015 = vsel %vm2005, %v2001, 1326507024
      %v2016 = vsel %vm2004, %v1998, %v2015
      %v2017 = vsel %vm2003, %v2014, %v2016
      %v2018 = vshll.u32 %v1978, 8
      %v2019 = vmul.u32.u64.compose %v2018, %v2017
      %v2020 = vextract.low.u32 %v2019
      %v2021 = vextract.high.u32 %v2019
      %v2022 = vmul.u32.u64.compose %v2018, %v2013
      %v2023 = vextract.low.u32 %v2022
      %v2024 = vextract.high.u32 %v2022
      %v2025 = vmul.u32 %v2018, %v2009
      %v2026 = vadd.s32 %v2021, %v2023
      %vm2027 = vc.u32 %v2021, %v2023
      %v2028 = vadd.s32 %v2024, 1
      %v2029 = vsel %vm2027, %v2028, %v2024
      %v2030 = vadd.s32 %v2025, %v2029
      %v2031 = vadd.s32 %v2030, 536870912
      %v2032 = vshrl.u32 %v2031, 30
      %v2033 = vshll.u32 %v2032, 30
      %v2034 = vsub.s32 %v2030, %v2033
      %vm2035 = vcmp.lt.s32.totalorder %v2034, 0
      %v2036 = vsub.s32 0, %v2034
      %v2037 = vsel %vm2035, %v2036, %v2034
      %v2038 = vclz %v2037
      %v2039 = vsub.s32 %v2038, 2
      %vm2040 = vcmp.gt.s32.totalorder 0, %v2039
      %v2041 = vsel %vm2040, 0, %v2039
      %v2042 = vsub.s32 32, %v2041
      %v2043 = vshll.u32 %v2034, %v2041
      %v2044 = vshrl.u32 %v2026, %v2042
      %v2045 = vor.u32 %v2043, %v2044
      %v2046 = vsub.s32 4294967266, %v2041
      %v2047 = vadd.s32 %v2046, 127
      %v2048 = vshll.u32 %v2047, 23
      %v2049 = vor.u32 4788187, %v2048
      %v2050 = vand.u32 2147483647, %v2049
      %v2052 = vcvt.s32.f32 %v2045
      %v2053 = vmul.f32 %v2052, %v2050
      %v2054 = vxor.u32 %v2053, 2147483648
      %v2055 = vsel %vm1972, %v2054, %v2053
      %v2056 = vsub.s32 4, %v2032
      %v2057 = vsel %vm1972, %v2056, %v2032
      %v2058 = vsel %vm1971, %v455, %v2055
      %v2059 = vsel %vm1971, 0, %v2057
      %v2060 = vcosq.f32.pop %v2058
      %v2061 = vsinq.f32.pop %v2058
      %vm2062 = vweird.f32 %v455
      %v2063 = vadd.s32 %v2059, 3
      %v2064 = vand.u32 %v2063, 3
      %vm2065 = vcmp.lt.s32.totalorder %v2064, 2
      %vm2066 = vcmp.eq.s32.totalorder %v2064, 0
      %v2067 = vxor.u32 %v2061, 2147483648
      %v2068 = vsel %vm2066, %v2060, %v2067
      %vm2069 = vcmp.eq.s32.totalorder %v2064, 2
      %v2070 = vxor.u32 %v2060, 2147483648
      %v2071 = vsel %vm2069, %v2070, %v2061
      %v2072 = vsel %vm2065, %v2068, %v2071
      %v2073 = vsel %vm2062, nan, %v2072
      %v2074 = vand.u32 2147483647, %v461
      %vm2075 = vcmp.le.f32.partialorder %v2074, 0.7853982
      %vm2076 = vcmp.lt.s32.totalorder %v461, 0
      %v2077 = vand.u32 %v461, 2139095040
      %v2078 = vshrl.u32 %v2077, 23
      %v2079 = vsub.s32 %v2078, 127
      %v2080 = vand.u32 2147483647, %v461
      %v2081 = vand.u32 %v2080, 8388607
      %v2082 = vor.u32 %v2081, 8388608
      %v2083 = vsub.s32 0, %v2082
      %v2084 = vadd.s32 %v2079, 1
      %vm2085 = vcmp.gt.s32.totalorder %v2084, 0
      %v2086 = vsel %vm2085, %v2084, 0
      %v2087 = vshrl.u32 %v2086, 5
      %v2088 = vand.u32 %v2086, 31
      %v2089 = vsub.s32 32, %v2088
      %v2090 = vshrl.u32 683565275, %v2089
      %v2091 = vshll.u32 683565275, %v2088
      %v2092 = vshrl.u32 2475754826, %v2089
      %v2093 = vor.u32 %v2091, %v2092
      %v2094 = vshll.u32 2475754826, %v2088
      %v2095 = vshrl.u32 2131351028, %v2089
      %v2096 = vor.u32 %v2094, %v2095
      %v2097 = vshll.u32 2131351028, %v2088
      %v2098 = vshrl.u32 2102212464, %v2089
      %v2099 = vor.u32 %v2097, %v2098
      %v2100 = vshll.u32 2102212464, %v2088
      %v2101 = vshrl.u32 920167782, %v2089
      %v2102 = vor.u32 %v2100, %v2101
      %v2103 = vshll.u32 920167782, %v2088
      %v2104 = vshrl.u32 1326507024, %v2089
      %v2105 = vor.u32 %v2103, %v2104
      %vm2106 = vcmp.lt.s32.totalorder %v2087, 1
      %vm2107 = vcmp.lt.s32.totalorder %v2087, 2
      %vm2108 = vcmp.lt.s32.totalorder %v2087, 3
      %vm2109 = vcmp.lt.s32.totalorder %v2087, 4
      %v2110 = vsel %vm2106, %v2090, %v2093
      %v2111 = vsel %vm2109, %v2099, 2102212464
      %v2112 = vsel %vm2108, %v2096, %v2111
      %v2113 = vsel %vm2107, %v2110, %v2112
      %v2114 = vsel %vm2106, %v2093, %v2096
      %v2115 = vsel %vm2109, %v2102, 920167782
      %v2116 = vsel %vm2108, %v2099, %v2115
      %v2117 = vsel %vm2107, %v2114, %v2116
      %v2118 = vsel %vm2106, %v2096, %v2099
      %v2119 = vsel %vm2109, %v2105, 1326507024
      %v2120 = vsel %vm2108, %v2102, %v2119
      %v2121 = vsel %vm2107, %v2118, %v2120
      %v2122 = vshll.u32 %v2082, 8
      %v2123 = vmul.u32.u64.compose %v2122, %v2121
      %v2124 = vextract.low.u32 %v2123
      %v2125 = vextract.high.u32 %v2123
      %v2126 = vmul.u32.u64.compose %v2122, %v2117
      %v2127 = vextract.low.u32 %v2126
      %v2128 = vextract.high.u32 %v2126
      %v2129 = vmul.u32 %v2122, %v2113
      %v2130 = vadd.s32 %v2125, %v2127
      %vm2131 = vc.u32 %v2125, %v2127
      %v2132 = vadd.s32 %v2128, 1
      %v2133 = vsel %vm2131, %v2132, %v2128
      %v2134 = vadd.s32 %v2129, %v2133
      %v2135 = vadd.s32 %v2134, 536870912
      %v2136 = vshrl.u32 %v2135, 30
      %v2137 = vshll.u32 %v2136, 30
      %v2138 = vsub.s32 %v2134, %v2137
      %vm2139 = vcmp.lt.s32.totalorder %v2138, 0
      %v2140 = vsub.s32 0, %v2138
      %v2141 = vsel %vm2139, %v2140, %v2138
      %v2142 = vclz %v2141
      %v2143 = vsub.s32 %v2142, 2
      %vm2144 = vcmp.gt.s32.totalorder 0, %v2143
      %v2145 = vsel %vm2144, 0, %v2143
      %v2146 = vsub.s32 32, %v2145
      %v2147 = vshll.u32 %v2138, %v2145
      %v2148 = vshrl.u32 %v2130, %v2146
      %v2149 = vor.u32 %v2147, %v2148
      %v2150 = vsub.s32 4294967266, %v2145
      %v2151 = vadd.s32 %v2150, 127
      %v2152 = vshll.u32 %v2151, 23
      %v2153 = vor.u32 4788187, %v2152
      %v2154 = vand.u32 2147483647, %v2153
      %v2156 = vcvt.s32.f32 %v2149
      %v2157 = vmul.f32 %v2156, %v2154
      %v2158 = vxor.u32 %v2157, 2147483648
      %v2159 = vsel %vm2076, %v2158, %v2157
      %v2160 = vsub.s32 4, %v2136
      %v2161 = vsel %vm2076, %v2160, %v2136
      %v2162 = vsel %vm2075, %v461, %v2159
      %v2163 = vsel %vm2075, 0, %v2161
      %v2164 = vcosq.f32.pop %v2162
      %v2165 = vsinq.f32.pop %v2162
      %vm2166 = vweird.f32 %v461
      %v2167 = vadd.s32 %v2163, 3
      %v2168 = vand.u32 %v2167, 3
      %vm2169 = vcmp.lt.s32.totalorder %v2168, 2
      %vm2170 = vcmp.eq.s32.totalorder %v2168, 0
      %v2171 = vxor.u32 %v2165, 2147483648
      %v2172 = vsel %vm2170, %v2164, %v2171
      %vm2173 = vcmp.eq.s32.totalorder %v2168, 2
      %v2174 = vxor.u32 %v2164, 2147483648
      %v2175 = vsel %vm2173, %v2174, %v2165
      %v2176 = vsel %vm2169, %v2172, %v2175
      %v2177 = vsel %vm2166, nan, %v2176
      %v2178 = vsel %vm465, 1, 0
      %vm2179 = vcmp.eq.s32.totalorder %v2178, 1
      %v2180 = vsel %vm2179, %v498, %v617
      %v2181 = vsel %vm2179, %v499, %v721
      %v2182 = vsel %vm2179, %v500, %v825
      %v2183 = vsel %vm2179, %v501, %v929
      %v2184 = vsel %vm2179, %v502, %v1033
      %v2185 = vsel %vm2179, %v503, %v1137
      %v2186 = vsel %vm2179, %v504, %v1241
      %v2187 = vsel %vm2179, %v505, %v1345
      %v2188 = vsel %vm2179, %v506, %v1449
      %v2189 = vsel %vm2179, %v507, %v1553
      %v2190 = vsel %vm2179, %v508, %v1657
      %v2191 = vsel %vm2179, %v509, %v1761
      %v2192 = vsel %vm2179, %v510, %v1865
      %v2193 = vsel %vm2179, %v511, %v1969
      %v2194 = vsel %vm2179, %v512, %v2073
      %v2195 = vsel %vm2179, %v513, %v2177
      %v2196 = vld [vmem:[%s1 + $0x40] sm:$0xff]
      %v2197 = vld [vmem:[%s1 + $0x50] sm:$0xff]
      %v2198 = vld [vmem:[%s1 + $0x60] sm:$0xff]
      %v2199 = vld [vmem:[%s1 + $0x70] sm:$0xff]
      %v2200 = vld [vmem:[%s1 + $0x80] sm:$0xff]
      %v2201 = vld [vmem:[%s1 + $0x90] sm:$0xff]
      %v2202 = vld [vmem:[%s1 + $0xa0] sm:$0xff]
      %v2203 = vld [vmem:[%s1 + $0xb0] sm:$0xff]
      %v2204 = vld [vmem:[%s1 + $0xc0] sm:$0xff]
      %v2205 = vld [vmem:[%s1 + $0xd0] sm:$0xff]
      %v2206 = vld [vmem:[%s1 + $0xe0] sm:$0xff]
      %v2207 = vld [vmem:[%s1 + $0xf0] sm:$0xff]
      %v2208 = vld [vmem:[%s2 + $0x1] ss:$0 sm:$0xff]
      %vm2209 = vcmask 785408
      %v2211 = vsel %vm2209, %v2180, 0
      %v2214 = vsel %vm2209, %v2181, 0
      %v2217 = vsel %vm2209, %v2182, 0
      %v2220 = vsel %vm2209, %v2183, 0
      %v2223 = vsel %vm2209, %v2184, 0
      %v2226 = vsel %vm2209, %v2185, 0
      %v2229 = vsel %vm2209, %v2186, 0
      %v2232 = vsel %vm2209, %v2187, 0
      %v2235 = vsel %vm2209, %v2188, 0
      %v2238 = vsel %vm2209, %v2189, 0
      %v2241 = vsel %vm2209, %v2190, 0
      %v2244 = vsel %vm2209, %v2191, 0
      %v2247 = vsel %vm2209, %v2192, 0
      %v2250 = vsel %vm2209, %v2193, 0
      %v2253 = vsel %vm2209, %v2194, 0
      %v2256 = vsel %vm2209, %v2195, 0
      %2258 = vmatprep.subr.mxu0 0.0
      %2259 = vmatpush1.msra.mxu0 %v2196
      %2260 = vmatprep.subr.mxu0 0.0
      %2261 = vmatpush1.msra.mxu0 %v2197
      %2262 = vmatprep.subr.mxu0 0.0
      %2263 = vmatpush1.msra.mxu0 %v2198
      %2264 = vmatprep.subr.mxu0 0.0
      %2265 = vmatpush1.msra.mxu0 %v2199
      %2266 = vmatprep.subr.mxu0 0.0
      %2267 = vmatpush1.msra.mxu0 %v2200
      %2268 = vmatprep.subr.mxu0 0.0
      %2269 = vmatpush1.msra.mxu0 %v2201
      %2270 = vmatprep.subr.mxu0 0.0
      %2271 = vmatpush1.msra.mxu0 %v2202
      %2272 = vmatprep.subr.mxu0 0.0
      %2273 = vmatpush1.msra.mxu0 %v2203
      %2274 = vmatprep.subr.mxu0 0.0
      %2275 = vmatpush1.msra.mxu0 %v2204
      %2276 = vmatprep.subr.mxu0 0.0
      %2277 = vmatpush1.msra.mxu0 %v2205
      %2278 = vmatprep.subr.mxu0 0.0
      %2279 = vmatpush1.msra.mxu0 %v2206
      %2280 = vmatprep.subr.mxu0 0.0
      %2281 = vmatpush1.msra.mxu0 %v2207
      %2282 = vmatprep.subr.mxu0 0.0
      %2283 = vmatpush1.msra.mxu0 0.0
      %2284 = vmatprep.subr.mxu0 0.0
      %2285 = vmatpush1.msra.mxu0 0.0
      %2286 = vmatprep.subr.mxu0 0.0
      %2287 = vmatpush1.msra.mxu0 0.0
      %2288 = vmatprep.subr.mxu0 0.0
      %2289 = vmatpush1.msra.mxu0 0.0
      %2290 = vmatprep.subr.mxu0 0.0
      %2291 = vmatpush1.msra.mxu0 0.0
      %2292 = vmatprep.subr.mxu0 0.0
      %2293 = vmatpush1.msra.mxu0 0.0
      %2294 = vmatprep.subr.mxu0 0.0
      %2295 = vmatpush1.msra.mxu0 0.0
      %2296 = vmatprep.subr.mxu0 0.0
      %2297 = vmatpush1.msra.mxu0 0.0
      %2298 = vmatprep.subr.mxu0 0.0
      %2299 = vmatpush1.msra.mxu0 0.0
      %2300 = vmatprep.subr.mxu0 0.0
      %2301 = vmatpush1.msra.mxu0 0.0
      %2302 = vmatprep.subr.mxu0 0.0
      %2303 = vmatpush1.msra.mxu0 0.0
      %2304 = vmatprep.subr.mxu0 0.0
      %2305 = vmatpush1.msra.mxu0 0.0
      %2306 = vmatprep.subr.mxu0 0.0
      %2307 = vmatpush1.msra.mxu0 0.0
      %2308 = vmatprep.subr.mxu0 0.0
      %2309 = vmatpush1.msra.mxu0 0.0
      %2310 = vmatprep.subr.mxu0 0.0
      %2311 = vmatpush1.msra.mxu0 0.0
      %2312 = vmatprep.subr.mxu0 0.0
      %2313 = vmatpush1.msra.mxu0 0.0
      %2314 = vmatprep.subr.mxu0 0.0
      %2315 = vmatpush1.msra.mxu0 0.0
      %2316 = vmatprep.subr.mxu0 0.0
      %2317 = vmatpush1.msra.mxu0 0.0
      %2318 = vmatprep.subr.mxu0 0.0
      %2319 = vmatpush1.msra.mxu0 0.0
      %2320 = vmatprep.subr.mxu0 0.0
      %2321 = vmatpush1.msra.mxu0 0.0
      %2322 = vmatprep.mubr.f32.mxu0 0.0
      %2323 = vmatmul.mubr.f32.gmra.mrb[0].mxu0 %v2211
      %v2324 = vpop.f32.mrb[0].mxu0
      %v2325 = vadd.f32 %v2208, %v2324
      %v2326 = vpop.f32.mrb[0].mxu0
      %2327 = vmatprep.mubr.f32.mxu0 0.0
      %2328 = vmatmul.mubr.f32.gmra.mrb[0].mxu0 %v2214
      %v2329 = vpop.f32.mrb[0].mxu0
      %v2330 = vadd.f32 %v2208, %v2329
      %v2331 = vpop.f32.mrb[0].mxu0
      %2332 = vmatprep.mubr.f32.mxu0 0.0
      %2333 = vmatmul.mubr.f32.gmra.mrb[0].mxu0 %v2217
      %v2334 = vpop.f32.mrb[0].mxu0
      %v2335 = vadd.f32 %v2208, %v2334
      %v2336 = vpop.f32.mrb[0].mxu0
      %2337 = vmatprep.mubr.f32.mxu0 0.0
      %2338 = vmatmul.mubr.f32.gmra.mrb[0].mxu0 %v2220
      %v2339 = vpop.f32.mrb[0].mxu0
      %v2340 = vadd.f32 %v2208, %v2339
      %v2341 = vpop.f32.mrb[0].mxu0
      %2342 = vmatprep.mubr.f32.mxu0 0.0
      %2343 = vmatmul.mubr.f32.gmra.mrb[0].mxu0 %v2223
      %v2344 = vpop.f32.mrb[0].mxu0
      %v2345 = vadd.f32 %v2208, %v2344
      %v2346 = vpop.f32.mrb[0].mxu0
      %2347 = vmatprep.mubr.f32.mxu0 0.0
      %2348 = vmatmul.mubr.f32.gmra.mrb[0].mxu0 %v2226
      %v2349 = vpop.f32.mrb[0].mxu0
      %v2350 = vadd.f32 %v2208, %v2349
      %v2351 = vpop.f32.mrb[0].mxu0
      %2352 = vmatprep.mubr.f32.mxu0 0.0
      %2353 = vmatmul.mubr.f32.gmra.mrb[0].mxu0 %v2229
      %v2354 = vpop.f32.mrb[0].mxu0
      %v2355 = vadd.f32 %v2208, %v2354
      %v2356 = vpop.f32.mrb[0].mxu0
      %2357 = vmatprep.mubr.f32.mxu0 0.0
      %2358 = vmatmul.mubr.f32.gmra.mrb[0].mxu0 %v2232
      %v2359 = vpop.f32.mrb[0].mxu0
      %v2360 = vadd.f32 %v2208, %v2359
      %v2361 = vpop.f32.mrb[0].mxu0
      %2362 = vmatprep.mubr.f32.mxu0 0.0
      %2363 = vmatmul.mubr.f32.gmra.mrb[0].mxu0 %v2235
      %v2364 = vpop.f32.mrb[0].mxu0
      %v2365 = vadd.f32 %v2208, %v2364
      %v2366 = vpop.f32.mrb[0].mxu0
      %2367 = vmatprep.mubr.f32.mxu0 0.0
      %2368 = vmatmul.mubr.f32.gmra.mrb[0].mxu0 %v2238
      %v2369 = vpop.f32.mrb[0].mxu0
      %v2370 = vadd.f32 %v2208, %v2369
      %v2371 = vpop.f32.mrb[0].mxu0
      %2372 = vmatprep.mubr.f32.mxu0 0.0
      %2373 = vmatmul.mubr.f32.gmra.mrb[0].mxu0 %v2241
      %v2374 = vpop.f32.mrb[0].mxu0
      %v2375 = vadd.f32 %v2208, %v2374
      %v2376 = vpop.f32.mrb[0].mxu0
      %2377 = vmatprep.mubr.f32.mxu0 0.0
      %2378 = vmatmul.mubr.f32.gmra.mrb[0].mxu0 %v2244
      %v2379 = vpop.f32.mrb[0].mxu0
      %v2380 = vadd.f32 %v2208, %v2379
      %v2381 = vpop.f32.mrb[0].mxu0
      %2382 = vmatprep.mubr.f32.mxu0 0.0
      %2383 = vmatmul.mubr.f32.gmra.mrb[0].mxu0 %v2247
      %v2384 = vpop.f32.mrb[0].mxu0
      %v2385 = vadd.f32 %v2208, %v2384
      %v2386 = vpop.f32.mrb[0].mxu0
      %2387 = vmatprep.mubr.f32.mxu0 0.0
      %2388 = vmatmul.mubr.f32.gmra.mrb[0].mxu0 %v2250
      %v2389 = vpop.f32.mrb[0].mxu0
      %v2390 = vadd.f32 %v2208, %v2389
      %v2391 = vpop.f32.mrb[0].mxu0
      %2392 = vmatprep.mubr.f32.mxu0 0.0
      %2393 = vmatmul.mubr.f32.gmra.mrb[0].mxu0 %v2253
      %v2394 = vpop.f32.mrb[0].mxu0
      %v2395 = vadd.f32 %v2208, %v2394
      %v2396 = vpop.f32.mrb[0].mxu0
      %2397 = vmatprep.mubr.f32.mxu0 0.0
      %2398 = vmatmul.mubr.f32.gmra.mrb[0].mxu0 %v2256
      %v2399 = vpop.f32.mrb[0].mxu0
      %v2400 = vadd.f32 %v2208, %v2399
      %v2401 = vpop.f32.mrb[0].mxu0
      %2402 = vdwg.mxu0
      %vm2403 = vcmp.lt.s32.totalorder %v234, 32
      %v2404 = vsub.f32 %v201, 1.0
      %v2405 = vsub.f32 %v202, 1.0
      %v2406 = vsub.f32 %v203, 1.0
      %v2407 = vsub.f32 %v204, 1.0
      %v2408 = vsub.f32 %v205, 1.0
      %v2409 = vsub.f32 %v206, 1.0
      %v2410 = vsub.f32 %v207, 1.0
      %v2411 = vsub.f32 %v208, 1.0
      %v2412 = vsub.f32 %v209, 1.0
      %v2413 = vsub.f32 %v210, 1.0
      %v2414 = vsub.f32 %v211, 1.0
      %v2415 = vsub.f32 %v212, 1.0
      %v2416 = vsub.f32 %v213, 1.0
      %v2417 = vsub.f32 %v214, 1.0
      %v2418 = vsub.f32 %v215, 1.0
      %v2419 = vsub.f32 %v216, 1.0
      %v2420 = vsel %vm2403, 1, 0
      %vm2421 = vcmp.eq.s32.totalorder %v2420, 1
      %2423 = vset.pattern.permute.xlu0 25
      %2424 = vperm.xlu0 %2423, %v2404
      %v2425 = vpop.permute.xlu0 %2424
      %2428 = vset.pattern.permute.xlu0 25
      %2429 = vperm.xlu0 %2428, %v2405
      %v2430 = vpop.permute.xlu0 %2429
      %2433 = vset.pattern.permute.xlu0 25
      %2434 = vperm.xlu0 %2433, %v2406
      %v2435 = vpop.permute.xlu0 %2434
      %2438 = vset.pattern.permute.xlu0 25
      %2439 = vperm.xlu0 %2438, %v2407
      %v2440 = vpop.permute.xlu0 %2439
      %2443 = vset.pattern.permute.xlu0 25
      %2444 = vperm.xlu0 %2443, %v2408
      %v2445 = vpop.permute.xlu0 %2444
      %2448 = vset.pattern.permute.xlu0 25
      %2449 = vperm.xlu0 %2448, %v2409
      %v2450 = vpop.permute.xlu0 %2449
      %2453 = vset.pattern.permute.xlu0 25
      %2454 = vperm.xlu0 %2453, %v2410
      %v2455 = vpop.permute.xlu0 %2454
      %2458 = vset.pattern.permute.xlu0 25
      %2459 = vperm.xlu0 %2458, %v2411
      %v2460 = vpop.permute.xlu0 %2459
      %2463 = vset.pattern.permute.xlu0 25
      %2464 = vperm.xlu0 %2463, %v2412
      %v2465 = vpop.permute.xlu0 %2464
      %2468 = vset.pattern.permute.xlu0 25
      %2469 = vperm.xlu0 %2468, %v2413
      %v2470 = vpop.permute.xlu0 %2469
      %2473 = vset.pattern.permute.xlu0 25
      %2474 = vperm.xlu0 %2473, %v2414
      %v2475 = vpop.permute.xlu0 %2474
      %2478 = vset.pattern.permute.xlu0 25
      %2479 = vperm.xlu0 %2478, %v2415
      %v2480 = vpop.permute.xlu0 %2479
      %2483 = vset.pattern.permute.xlu0 25
      %2484 = vperm.xlu0 %2483, %v2416
      %v2485 = vpop.permute.xlu0 %2484
      %2488 = vset.pattern.permute.xlu0 25
      %2489 = vperm.xlu0 %2488, %v2417
      %v2490 = vpop.permute.xlu0 %2489
      %2493 = vset.pattern.permute.xlu0 25
      %2494 = vperm.xlu0 %2493, %v2418
      %v2495 = vpop.permute.xlu0 %2494
      %2498 = vset.pattern.permute.xlu0 25
      %2499 = vperm.xlu0 %2498, %v2419
      %v2500 = vpop.permute.xlu0 %2499
      %v2502 = vsel %vm2421, %v2425, 1.0
      %v2503 = vsel %vm2421, %v2430, 1.0
      %v2504 = vsel %vm2421, %v2435, 1.0
      %v2505 = vsel %vm2421, %v2440, 1.0
      %v2506 = vsel %vm2421, %v2445, 1.0
      %v2507 = vsel %vm2421, %v2450, 1.0
      %v2508 = vsel %vm2421, %v2455, 1.0
      %v2509 = vsel %vm2421, %v2460, 1.0
      %v2510 = vsel %vm2421, %v2465, 1.0
      %v2511 = vsel %vm2421, %v2470, 1.0
      %v2512 = vsel %vm2421, %v2475, 1.0
      %v2513 = vsel %vm2421, %v2480, 1.0
      %v2514 = vsel %vm2421, %v2485, 1.0
      %v2515 = vsel %vm2421, %v2490, 1.0
      %v2516 = vsel %vm2421, %v2495, 1.0
      %v2517 = vsel %vm2421, %v2500, 1.0
      %v2518 = vmul.f32 %v2325, %v2502
      %v2519 = vmul.f32 %v2330, %v2503
      %v2520 = vmul.f32 %v2335, %v2504
      %v2521 = vmul.f32 %v2340, %v2505
      %v2522 = vmul.f32 %v2345, %v2506
      %v2523 = vmul.f32 %v2350, %v2507
      %v2524 = vmul.f32 %v2355, %v2508
      %v2525 = vmul.f32 %v2360, %v2509
      %v2526 = vmul.f32 %v2365, %v2510
      %v2527 = vmul.f32 %v2370, %v2511
      %v2528 = vmul.f32 %v2375, %v2512
      %v2529 = vmul.f32 %v2380, %v2513
      %v2530 = vmul.f32 %v2385, %v2514
      %v2531 = vmul.f32 %v2390, %v2515
      %v2532 = vmul.f32 %v2395, %v2516
      %v2533 = vmul.f32 %v2400, %v2517
      %v2534 = vld [vmem:[%s1 + $0x100] sm:$0xff]
      %v2535 = vld [vmem:[%s1 + $0x110] sm:$0xff]
      %v2536 = vld [vmem:[%s1 + $0x120] sm:$0xff]
      %v2537 = vld [vmem:[%s1 + $0x130] sm:$0xff]
      %v2538 = vld [vmem:[%s1 + $0x140] sm:$0xff]
      %v2539 = vld [vmem:[%s1 + $0x150] sm:$0xff]
      %v2540 = vld [vmem:[%s1 + $0x160] sm:$0xff]
      %v2541 = vld [vmem:[%s1 + $0x170] sm:$0xff]
      %v2542 = vld [vmem:[%s1 + $0x180] sm:$0xff]
      %v2543 = vld [vmem:[%s1 + $0x190] sm:$0xff]
      %v2544 = vld [vmem:[%s1 + $0x1a0] sm:$0xff]
      %v2545 = vld [vmem:[%s1 + $0x1b0] sm:$0xff]
      %v2546 = vld [vmem:[%s2 + $0x2] ss:$0 sm:$0xff]
      %v2548 = vsel %vm2209, %v2518, 0
      %v2551 = vsel %vm2209, %v2519, 0
      %v2554 = vsel %vm2209, %v2520, 0
      %v2557 = vsel %vm2209, %v2521, 0
      %v2560 = vsel %vm2209, %v2522, 0
      %v2563 = vsel %vm2209, %v2523, 0
      %v2566 = vsel %vm2209, %v2524, 0
      %v2569 = vsel %vm2209, %v2525, 0
      %v2572 = vsel %vm2209, %v2526, 0
      %v2575 = vsel %vm2209, %v2527, 0
      %v2578 = vsel %vm2209, %v2528, 0
      %v2581 = vsel %vm2209, %v2529, 0
      %v2584 = vsel %vm2209, %v2530, 0
      %v2587 = vsel %vm2209, %v2531, 0
      %v2590 = vsel %vm2209, %v2532, 0
      %v2593 = vsel %vm2209, %v2533, 0
      %2595 = vmatprep.subr.mxu0 0.0
      %2596 = vmatpush1.msra.mxu0 %v2534
      %2597 = vmatprep.subr.mxu0 0.0
      %2598 = vmatpush1.msra.mxu0 %v2535
      %2599 = vmatprep.subr.mxu0 0.0
      %2600 = vmatpush1.msra.mxu0 %v2536
      %2601 = vmatprep.subr.mxu0 0.0
      %2602 = vmatpush1.msra.mxu0 %v2537
      %2603 = vmatprep.subr.mxu0 0.0
      %2604 = vmatpush1.msra.mxu0 %v2538
      %2605 = vmatprep.subr.mxu0 0.0
      %2606 = vmatpush1.msra.mxu0 %v2539
      %2607 = vmatprep.subr.mxu0 0.0
      %2608 = vmatpush1.msra.mxu0 %v2540
      %2609 = vmatprep.subr.mxu0 0.0
      %2610 = vmatpush1.msra.mxu0 %v2541
      %2611 = vmatprep.subr.mxu0 0.0
      %2612 = vmatpush1.msra.mxu0 %v2542
      %2613 = vmatprep.subr.mxu0 0.0
      %2614 = vmatpush1.msra.mxu0 %v2543
      %2615 = vmatprep.subr.mxu0 0.0
      %2616 = vmatpush1.msra.mxu0 %v2544
      %2617 = vmatprep.subr.mxu0 0.0
      %2618 = vmatpush1.msra.mxu0 %v2545
      %2619 = vmatprep.subr.mxu0 0.0
      %2620 = vmatpush1.msra.mxu0 0.0
      %2621 = vmatprep.subr.mxu0 0.0
      %2622 = vmatpush1.msra.mxu0 0.0
      %2623 = vmatprep.subr.mxu0 0.0
      %2624 = vmatpush1.msra.mxu0 0.0
      %2625 = vmatprep.subr.mxu0 0.0
      %2626 = vmatpush1.msra.mxu0 0.0
      %2627 = vmatprep.subr.mxu0 0.0
      %2628 = vmatpush1.msra.mxu0 0.0
      %2629 = vmatprep.subr.mxu0 0.0
      %2630 = vmatpush1.msra.mxu0 0.0
      %2631 = vmatprep.subr.mxu0 0.0
      %2632 = vmatpush1.msra.mxu0 0.0
      %2633 = vmatprep.subr.mxu0 0.0
      %2634 = vmatpush1.msra.mxu0 0.0
      %2635 = vmatprep.subr.mxu0 0.0
      %2636 = vmatpush1.msra.mxu0 0.0
      %2637 = vmatprep.subr.mxu0 0.0
      %2638 = vmatpush1.msra.mxu0 0.0
      %2639 = vmatprep.subr.mxu0 0.0
      %2640 = vmatpush1.msra.mxu0 0.0
      %2641 = vmatprep.subr.mxu0 0.0
      %2642 = vmatpush1.msra.mxu0 0.0
      %2643 = vmatprep.subr.mxu0 0.0
      %2644 = vmatpush1.msra.mxu0 0.0
      %2645 = vmatprep.subr.mxu0 0.0
      %2646 = vmatpush1.msra.mxu0 0.0
      %2647 = vmatprep.subr.mxu0 0.0
      %2648 = vmatpush1.msra.mxu0 0.0
      %2649 = vmatprep.subr.mxu0 0.0
      %2650 = vmatpush1.msra.mxu0 0.0
      %2651 = vmatprep.subr.mxu0 0.0
      %2652 = vmatpush1.msra.mxu0 0.0
      %2653 = vmatprep.subr.mxu0 0.0
      %2654 = vmatpush1.msra.mxu0 0.0
      %2655 = vmatprep.subr.mxu0 0.0
      %2656 = vmatpush1.msra.mxu0 0.0
      %2657 = vmatprep.subr.mxu0 0.0
      %2658 = vmatpush1.msra.mxu0 0.0
      %2659 = vmatprep.mubr.f32.mxu0 0.0
      %2660 = vmatmul.mubr.f32.gmra.mrb[0].mxu0 %v2548
      %v2661 = vpop.f32.mrb[0].mxu0
      %v2662 = vadd.f32 %v2546, %v2661
      %v2663 = vpop.f32.mrb[0].mxu0
      %2664 = vmatprep.mubr.f32.mxu0 0.0
      %2665 = vmatmul.mubr.f32.gmra.mrb[0].mxu0 %v2551
      %v2666 = vpop.f32.mrb[0].mxu0
      %v2667 = vadd.f32 %v2546, %v2666
      %v2668 = vpop.f32.mrb[0].mxu0
      %2669 = vmatprep.mubr.f32.mxu0 0.0
      %2670 = vmatmul.mubr.f32.gmra.mrb[0].mxu0 %v2554
      %v2671 = vpop.f32.mrb[0].mxu0
      %v2672 = vadd.f32 %v2546, %v2671
      %v2673 = vpop.f32.mrb[0].mxu0
      %2674 = vmatprep.mubr.f32.mxu0 0.0
      %2675 = vmatmul.mubr.f32.gmra.mrb[0].mxu0 %v2557
      %v2676 = vpop.f32.mrb[0].mxu0
      %v2677 = vadd.f32 %v2546, %v2676
      %v2678 = vpop.f32.mrb[0].mxu0
      %2679 = vmatprep.mubr.f32.mxu0 0.0
      %2680 = vmatmul.mubr.f32.gmra.mrb[0].mxu0 %v2560
      %v2681 = vpop.f32.mrb[0].mxu0
      %v2682 = vadd.f32 %v2546, %v2681
      %v2683 = vpop.f32.mrb[0].mxu0
      %2684 = vmatprep.mubr.f32.mxu0 0.0
      %2685 = vmatmul.mubr.f32.gmra.mrb[0].mxu0 %v2563
      %v2686 = vpop.f32.mrb[0].mxu0
      %v2687 = vadd.f32 %v2546, %v2686
      %v2688 = vpop.f32.mrb[0].mxu0
      %2689 = vmatprep.mubr.f32.mxu0 0.0
      %2690 = vmatmul.mubr.f32.gmra.mrb[0].mxu0 %v2566
      %v2691 = vpop.f32.mrb[0].mxu0
      %v2692 = vadd.f32 %v2546, %v2691
      %v2693 = vpop.f32.mrb[0].mxu0
      %2694 = vmatprep.mubr.f32.mxu0 0.0
      %2695 = vmatmul.mubr.f32.gmra.mrb[0].mxu0 %v2569
      %v2696 = vpop.f32.mrb[0].mxu0
      %v2697 = vadd.f32 %v2546, %v2696
      %v2698 = vpop.f32.mrb[0].mxu0
      %2699 = vmatprep.mubr.f32.mxu0 0.0
      %2700 = vmatmul.mubr.f32.gmra.mrb[0].mxu0 %v2572
      %v2701 = vpop.f32.mrb[0].mxu0
      %v2702 = vadd.f32 %v2546, %v2701
      %v2703 = vpop.f32.mrb[0].mxu0
      %2704 = vmatprep.mubr.f32.mxu0 0.0
      %2705 = vmatmul.mubr.f32.gmra.mrb[0].mxu0 %v2575
      %v2706 = vpop.f32.mrb[0].mxu0
      %v2707 = vadd.f32 %v2546, %v2706
      %v2708 = vpop.f32.mrb[0].mxu0
      %2709 = vmatprep.mubr.f32.mxu0 0.0
      %2710 = vmatmul.mubr.f32.gmra.mrb[0].mxu0 %v2578
      %v2711 = vpop.f32.mrb[0].mxu0
      %v2712 = vadd.f32 %v2546, %v2711
      %v2713 = vpop.f32.mrb[0].mxu0
      %2714 = vmatprep.mubr.f32.mxu0 0.0
      %2715 = vmatmul.mubr.f32.gmra.mrb[0].mxu0 %v2581
      %v2716 = vpop.f32.mrb[0].mxu0
      %v2717 = vadd.f32 %v2546, %v2716
      %v2718 = vpop.f32.mrb[0].mxu0
      %2719 = vmatprep.mubr.f32.mxu0 0.0
      %2720 = vmatmul.mubr.f32.gmra.mrb[0].mxu0 %v2584
      %v2721 = vpop.f32.mrb[0].mxu0
      %v2722 = vadd.f32 %v2546, %v2721
      %v2723 = vpop.f32.mrb[0].mxu0
      %2724 = vmatprep.mubr.f32.mxu0 0.0
      %2725 = vmatmul.mubr.f32.gmra.mrb[0].mxu0 %v2587
      %v2726 = vpop.f32.mrb[0].mxu0
      %v2727 = vadd.f32 %v2546, %v2726
      %v2728 = vpop.f32.mrb[0].mxu0
      %2729 = vmatprep.mubr.f32.mxu0 0.0
      %2730 = vmatmul.mubr.f32.gmra.mrb[0].mxu0 %v2590
      %v2731 = vpop.f32.mrb[0].mxu0
      %v2732 = vadd.f32 %v2546, %v2731
      %v2733 = vpop.f32.mrb[0].mxu0
      %2734 = vmatprep.mubr.f32.mxu0 0.0
      %2735 = vmatmul.mubr.f32.gmra.mrb[0].mxu0 %v2593
      %v2736 = vpop.f32.mrb[0].mxu0
      %v2737 = vadd.f32 %v2546, %v2736
      %v2738 = vpop.f32.mrb[0].mxu0
      %2739 = vdwg.mxu0
      %2740 = vmatprep.subr.mxu0 0.0
      %2741 = vmatpush1.msra.mxu0 %v2662
      %2742 = vmatprep.subr.mxu0 0.0
      %2743 = vmatpush1.msra.mxu0 %v2667
      %2744 = vmatprep.subr.mxu0 0.0
      %2745 = vmatpush1.msra.mxu0 %v2672
      %2746 = vmatprep.subr.mxu0 0.0
      %2747 = vmatpush1.msra.mxu0 %v2677
      %2748 = vmatprep.subr.mxu0 0.0
      %2749 = vmatpush1.msra.mxu0 %v2682
      %2750 = vmatprep.subr.mxu0 0.0
      %2751 = vmatpush1.msra.mxu0 %v2687
      %2752 = vmatprep.subr.mxu0 0.0
      %2753 = vmatpush1.msra.mxu0 %v2692
      %2754 = vmatprep.subr.mxu0 0.0
      %2755 = vmatpush1.msra.mxu0 %v2697
      %2756 = vmatprep.subr.mxu0 0.0
      %2757 = vmatpush1.msra.mxu0 %v2702
      %2758 = vmatprep.subr.mxu0 0.0
      %2759 = vmatpush1.msra.mxu0 %v2707
      %2760 = vmatprep.subr.mxu0 0.0
      %2761 = vmatpush1.msra.mxu0 %v2712
      %2762 = vmatprep.subr.mxu0 0.0
      %2763 = vmatpush1.msra.mxu0 %v2717
      %2764 = vmatprep.subr.mxu0 0.0
      %2765 = vmatpush1.msra.mxu0 %v2722
      %2766 = vmatprep.subr.mxu0 0.0
      %2767 = vmatpush1.msra.mxu0 %v2727
      %2768 = vmatprep.subr.mxu0 0.0
      %2769 = vmatpush1.msra.mxu0 %v2732
      %2770 = vmatprep.subr.mxu0 0.0
      %2771 = vmatpush1.msra.mxu0 %v2737
      %2772 = vmatprep.subr.mxu0 0.0
      %2773 = vmatpush1.msra.mxu0 0.0
      %2774 = vmatprep.subr.mxu0 0.0
      %2775 = vmatpush1.msra.mxu0 0.0
      %2776 = vmatprep.subr.mxu0 0.0
      %2777 = vmatpush1.msra.mxu0 0.0
      %2778 = vmatprep.subr.mxu0 0.0
      %2779 = vmatpush1.msra.mxu0 0.0
      %2780 = vmatprep.subr.mxu0 0.0
      %2781 = vmatpush1.msra.mxu0 0.0
      %2782 = vmatprep.subr.mxu0 0.0
      %2783 = vmatpush1.msra.mxu0 0.0
      %2784 = vmatprep.subr.mxu0 0.0
      %2785 = vmatpush1.msra.mxu0 0.0
      %2786 = vmatprep.subr.mxu0 0.0
      %2787 = vmatpush1.msra.mxu0 0.0
      %2788 = vmatprep.subr.mxu0 0.0
      %2789 = vmatpush1.msra.mxu0 0.0
      %2790 = vmatprep.subr.mxu0 0.0
      %2791 = vmatpush1.msra.mxu0 0.0
      %2792 = vmatprep.subr.mxu0 0.0
      %2793 = vmatpush1.msra.mxu0 0.0
      %2794 = vmatprep.subr.mxu0 0.0
      %2795 = vmatpush1.msra.mxu0 0.0
      %2796 = vmatprep.subr.mxu0 0.0
      %2797 = vmatpush1.msra.mxu0 0.0
      %2798 = vmatprep.subr.mxu0 0.0
      %2799 = vmatpush1.msra.mxu0 0.0
      %2800 = vmatprep.subr.mxu0 0.0
      %2801 = vmatpush1.msra.mxu0 0.0
      %2802 = vmatprep.subr.mxu0 0.0
      %2803 = vmatpush1.msra.mxu0 0.0
      %2804 = vmatprep.mubr.f32.mxu0 0.0
      %2805 = vmatmul.mubr.f32.gmra.mrb[0].mxu0 %v217
      %v2806 = vpop.f32.mrb[0].mxu0
      %v2807 = vadd.f32 0.0, %v2806
      %v2808 = vpop.f32.mrb[0].mxu0
      %2809 = vmatprep.mubr.f32.mxu0 0.0
      %2810 = vmatmul.mubr.f32.gmra.mrb[0].mxu0 %v218
      %v2811 = vpop.f32.mrb[0].mxu0
      %v2812 = vadd.f32 0.0, %v2811
      %v2813 = vpop.f32.mrb[0].mxu0
      %2814 = vmatprep.mubr.f32.mxu0 0.0
      %2815 = vmatmul.mubr.f32.gmra.mrb[0].mxu0 %v219
      %v2816 = vpop.f32.mrb[0].mxu0
      %v2817 = vadd.f32 0.0, %v2816
      %v2818 = vpop.f32.mrb[0].mxu0
      %2819 = vmatprep.mubr.f32.mxu0 0.0
      %2820 = vmatmul.mubr.f32.gmra.mrb[0].mxu0 %v220
      %v2821 = vpop.f32.mrb[0].mxu0
      %v2822 = vadd.f32 0.0, %v2821
      %v2823 = vpop.f32.mrb[0].mxu0
      %2824 = vmatprep.mubr.f32.mxu0 0.0
      %2825 = vmatmul.mubr.f32.gmra.mrb[0].mxu0 %v221
      %v2826 = vpop.f32.mrb[0].mxu0
      %v2827 = vadd.f32 0.0, %v2826
      %v2828 = vpop.f32.mrb[0].mxu0
      %2829 = vmatprep.mubr.f32.mxu0 0.0
      %2830 = vmatmul.mubr.f32.gmra.mrb[0].mxu0 %v222
      %v2831 = vpop.f32.mrb[0].mxu0
      %v2832 = vadd.f32 0.0, %v2831
      %v2833 = vpop.f32.mrb[0].mxu0
      %2834 = vmatprep.mubr.f32.mxu0 0.0
      %2835 = vmatmul.mubr.f32.gmra.mrb[0].mxu0 %v223
      %v2836 = vpop.f32.mrb[0].mxu0
      %v2837 = vadd.f32 0.0, %v2836
      %v2838 = vpop.f32.mrb[0].mxu0
      %2839 = vmatprep.mubr.f32.mxu0 0.0
      %2840 = vmatmul.mubr.f32.gmra.mrb[0].mxu0 %v224
      %v2841 = vpop.f32.mrb[0].mxu0
      %v2842 = vadd.f32 0.0, %v2841
      %v2843 = vpop.f32.mrb[0].mxu0
      %2844 = vmatprep.mubr.f32.mxu0 0.0
      %2845 = vmatmul.mubr.f32.gmra.mrb[0].mxu0 %v225
      %v2846 = vpop.f32.mrb[0].mxu0
      %v2847 = vadd.f32 0.0, %v2846
      %v2848 = vpop.f32.mrb[0].mxu0
      %2849 = vmatprep.mubr.f32.mxu0 0.0
      %2850 = vmatmul.mubr.f32.gmra.mrb[0].mxu0 %v226
      %v2851 = vpop.f32.mrb[0].mxu0
      %v2852 = vadd.f32 0.0, %v2851
      %v2853 = vpop.f32.mrb[0].mxu0
      %2854 = vmatprep.mubr.f32.mxu0 0.0
      %2855 = vmatmul.mubr.f32.gmra.mrb[0].mxu0 %v227
      %v2856 = vpop.f32.mrb[0].mxu0
      %v2857 = vadd.f32 0.0, %v2856
      %v2858 = vpop.f32.mrb[0].mxu0
      %2859 = vmatprep.mubr.f32.mxu0 0.0
      %2860 = vmatmul.mubr.f32.gmra.mrb[0].mxu0 %v228
      %v2861 = vpop.f32.mrb[0].mxu0
      %v2862 = vadd.f32 0.0, %v2861
      %v2863 = vpop.f32.mrb[0].mxu0
      %2864 = vmatprep.mubr.f32.mxu0 0.0
      %2865 = vmatmul.mubr.f32.gmra.mrb[0].mxu0 %v229
      %v2866 = vpop.f32.mrb[0].mxu0
      %v2867 = vadd.f32 0.0, %v2866
      %v2868 = vpop.f32.mrb[0].mxu0
      %2869 = vmatprep.mubr.f32.mxu0 0.0
      %2870 = vmatmul.mubr.f32.gmra.mrb[0].mxu0 %v230
      %v2871 = vpop.f32.mrb[0].mxu0
      %v2872 = vadd.f32 0.0, %v2871
      %v2873 = vpop.f32.mrb[0].mxu0
      %2874 = vmatprep.mubr.f32.mxu0 0.0
      %2875 = vmatmul.mubr.f32.gmra.mrb[0].mxu0 %v231
      %v2876 = vpop.f32.mrb[0].mxu0
      %v2877 = vadd.f32 0.0, %v2876
      %v2878 = vpop.f32.mrb[0].mxu0
      %2879 = vmatprep.mubr.f32.mxu0 0.0
      %2880 = vmatmul.mubr.f32.gmra.mrb[0].mxu0 %v232
      %v2881 = vpop.f32.mrb[0].mxu0
      %v2882 = vadd.f32 0.0, %v2881
      %v2883 = vpop.f32.mrb[0].mxu0
      %2884 = vdwg.mxu0
      %v2885 = vsub.f32 %v2662, %v2807
      %v2886 = vsub.f32 %v2667, %v2812
      %v2887 = vsub.f32 %v2672, %v2817
      %v2888 = vsub.f32 %v2677, %v2822
      %v2889 = vsub.f32 %v2682, %v2827
      %v2890 = vsub.f32 %v2687, %v2832
      %v2891 = vsub.f32 %v2692, %v2837
      %v2892 = vsub.f32 %v2697, %v2842
      %v2893 = vsub.f32 %v2702, %v2847
      %v2894 = vsub.f32 %v2707, %v2852
      %v2895 = vsub.f32 %v2712, %v2857
      %v2896 = vsub.f32 %v2717, %v2862
      %v2897 = vsub.f32 %v2722, %v2867
      %v2898 = vsub.f32 %v2727, %v2872
      %v2899 = vsub.f32 %v2732, %v2877
      %v2900 = vsub.f32 %v2737, %v2882
      %v2901 = vmul.f32 %v2885, %v2885
      %v2902 = vmul.f32 %v2886, %v2886
      %v2903 = vmul.f32 %v2887, %v2887
      %v2904 = vmul.f32 %v2888, %v2888
      %v2905 = vmul.f32 %v2889, %v2889
      %v2906 = vmul.f32 %v2890, %v2890
      %v2907 = vmul.f32 %v2891, %v2891
      %v2908 = vmul.f32 %v2892, %v2892
      %v2909 = vmul.f32 %v2893, %v2893
      %v2910 = vmul.f32 %v2894, %v2894
      %v2911 = vmul.f32 %v2895, %v2895
      %v2912 = vmul.f32 %v2896, %v2896
      %v2913 = vmul.f32 %v2897, %v2897
      %v2914 = vmul.f32 %v2898, %v2898
      %v2915 = vmul.f32 %v2899, %v2899
      %v2916 = vmul.f32 %v2900, %v2900
      %v2917 = vld [vmem:[%s2 + $0x3] ss:$0 sm:$0xff]
      %v2918 = vld [vmem:[%s2 + $0x4] ss:$0 sm:$0xff]
      %2919 = vmatprep.subr.mxu0 0.0
      %2920 = vmatpush1.msra.mxu0 %v2901
      %2921 = vmatprep.subr.mxu0 0.0
      %2922 = vmatpush1.msra.mxu0 %v2902
      %2923 = vmatprep.subr.mxu0 0.0
      %2924 = vmatpush1.msra.mxu0 %v2903
      %2925 = vmatprep.subr.mxu0 0.0
      %2926 = vmatpush1.msra.mxu0 %v2904
      %2927 = vmatprep.subr.mxu0 0.0
      %2928 = vmatpush1.msra.mxu0 %v2905
      %2929 = vmatprep.subr.mxu0 0.0
      %2930 = vmatpush1.msra.mxu0 %v2906
      %2931 = vmatprep.subr.mxu0 0.0
      %2932 = vmatpush1.msra.mxu0 %v2907
      %2933 = vmatprep.subr.mxu0 0.0
      %2934 = vmatpush1.msra.mxu0 %v2908
      %2935 = vmatprep.subr.mxu0 0.0
      %2936 = vmatpush1.msra.mxu0 %v2909
      %2937 = vmatprep.subr.mxu0 0.0
      %2938 = vmatpush1.msra.mxu0 %v2910
      %2939 = vmatprep.subr.mxu0 0.0
      %2940 = vmatpush1.msra.mxu0 %v2911
      %2941 = vmatprep.subr.mxu0 0.0
      %2942 = vmatpush1.msra.mxu0 %v2912
      %2943 = vmatprep.subr.mxu0 0.0
      %2944 = vmatpush1.msra.mxu0 %v2913
      %2945 = vmatprep.subr.mxu0 0.0
      %2946 = vmatpush1.msra.mxu0 %v2914
      %2947 = vmatprep.subr.mxu0 0.0
      %2948 = vmatpush1.msra.mxu0 %v2915
      %2949 = vmatprep.subr.mxu0 0.0
      %2950 = vmatpush1.msra.mxu0 %v2916
      %2951 = vmatprep.subr.mxu0 0.0
      %2952 = vmatpush1.msra.mxu0 0.0
      %2953 = vmatprep.subr.mxu0 0.0
      %2954 = vmatpush1.msra.mxu0 0.0
      %2955 = vmatprep.subr.mxu0 0.0
      %2956 = vmatpush1.msra.mxu0 0.0
      %2957 = vmatprep.subr.mxu0 0.0
      %2958 = vmatpush1.msra.mxu0 0.0
      %2959 = vmatprep.subr.mxu0 0.0
      %2960 = vmatpush1.msra.mxu0 0.0
      %2961 = vmatprep.subr.mxu0 0.0
      %2962 = vmatpush1.msra.mxu0 0.0
      %2963 = vmatprep.subr.mxu0 0.0
      %2964 = vmatpush1.msra.mxu0 0.0
      %2965 = vmatprep.subr.mxu0 0.0
      %2966 = vmatpush1.msra.mxu0 0.0
      %2967 = vmatprep.subr.mxu0 0.0
      %2968 = vmatpush1.msra.mxu0 0.0
      %2969 = vmatprep.subr.mxu0 0.0
      %2970 = vmatpush1.msra.mxu0 0.0
      %2971 = vmatprep.subr.mxu0 0.0
      %2972 = vmatpush1.msra.mxu0 0.0
      %2973 = vmatprep.subr.mxu0 0.0
      %2974 = vmatpush1.msra.mxu0 0.0
      %2975 = vmatprep.subr.mxu0 0.0
      %2976 = vmatpush1.msra.mxu0 0.0
      %2977 = vmatprep.subr.mxu0 0.0
      %2978 = vmatpush1.msra.mxu0 0.0
      %2979 = vmatprep.subr.mxu0 0.0
      %2980 = vmatpush1.msra.mxu0 0.0
      %2981 = vmatprep.subr.mxu0 0.0
      %2982 = vmatpush1.msra.mxu0 0.0
      %2983 = vmatprep.mubr.f32.mxu0 0.0
      %2984 = vmatmul.mubr.f32.gmra.mrb[0].mxu0 %v217
      %v2985 = vpop.f32.mrb[0].mxu0
      %v2986 = vadd.f32 1e-05, %v2985
      %v2987 = vpop.f32.mrb[0].mxu0
      %2988 = vmatprep.mubr.f32.mxu0 0.0
      %2989 = vmatmul.mubr.f32.gmra.mrb[0].mxu0 %v218
      %v2990 = vpop.f32.mrb[0].mxu0
      %v2991 = vadd.f32 1e-05, %v2990
      %v2992 = vpop.f32.mrb[0].mxu0
      %2993 = vmatprep.mubr.f32.mxu0 0.0
      %2994 = vmatmul.mubr.f32.gmra.mrb[0].mxu0 %v219
      %v2995 = vpop.f32.mrb[0].mxu0
      %v2996 = vadd.f32 1e-05, %v2995
      %v2997 = vpop.f32.mrb[0].mxu0
      %2998 = vmatprep.mubr.f32.mxu0 0.0
      %2999 = vmatmul.mubr.f32.gmra.mrb[0].mxu0 %v220
      %v3000 = vpop.f32.mrb[0].mxu0
      %v3001 = vadd.f32 1e-05, %v3000
      %v3002 = vpop.f32.mrb[0].mxu0
      %3003 = vmatprep.mubr.f32.mxu0 0.0
      %3004 = vmatmul.mubr.f32.gmra.mrb[0].mxu0 %v221
      %v3005 = vpop.f32.mrb[0].mxu0
      %v3006 = vadd.f32 1e-05, %v3005
      %v3007 = vpop.f32.mrb[0].mxu0
      %3008 = vmatprep.mubr.f32.mxu0 0.0
      %3009 = vmatmul.mubr.f32.gmra.mrb[0].mxu0 %v222
      %v3010 = vpop.f32.mrb[0].mxu0
      %v3011 = vadd.f32 1e-05, %v3010
      %v3012 = vpop.f32.mrb[0].mxu0
      %3013 = vmatprep.mubr.f32.mxu0 0.0
      %3014 = vmatmul.mubr.f32.gmra.mrb[0].mxu0 %v223
      %v3015 = vpop.f32.mrb[0].mxu0
      %v3016 = vadd.f32 1e-05, %v3015
      %v3017 = vpop.f32.mrb[0].mxu0
      %3018 = vmatprep.mubr.f32.mxu0 0.0
      %3019 = vmatmul.mubr.f32.gmra.mrb[0].mxu0 %v224
      %v3020 = vpop.f32.mrb[0].mxu0
      %v3021 = vadd.f32 1e-05, %v3020
      %v3022 = vpop.f32.mrb[0].mxu0
      %3023 = vmatprep.mubr.f32.mxu0 0.0
      %3024 = vmatmul.mubr.f32.gmra.mrb[0].mxu0 %v225
      %v3025 = vpop.f32.mrb[0].mxu0
      %v3026 = vadd.f32 1e-05, %v3025
      %v3027 = vpop.f32.mrb[0].mxu0
      %3028 = vmatprep.mubr.f32.mxu0 0.0
      %3029 = vmatmul.mubr.f32.gmra.mrb[0].mxu0 %v226
      %v3030 = vpop.f32.mrb[0].mxu0
      %v3031 = vadd.f32 1e-05, %v3030
      %v3032 = vpop.f32.mrb[0].mxu0
      %3033 = vmatprep.mubr.f32.mxu0 0.0
      %3034 = vmatmul.mubr.f32.gmra.mrb[0].mxu0 %v227
      %v3035 = vpop.f32.mrb[0].mxu0
      %v3036 = vadd.f32 1e-05, %v3035
      %v3037 = vpop.f32.mrb[0].mxu0
      %3038 = vmatprep.mubr.f32.mxu0 0.0
      %3039 = vmatmul.mubr.f32.gmra.mrb[0].mxu0 %v228
      %v3040 = vpop.f32.mrb[0].mxu0
      %v3041 = vadd.f32 1e-05, %v3040
      %v3042 = vpop.f32.mrb[0].mxu0
      %3043 = vmatprep.mubr.f32.mxu0 0.0
      %3044 = vmatmul.mubr.f32.gmra.mrb[0].mxu0 %v229
      %v3045 = vpop.f32.mrb[0].mxu0
      %v3046 = vadd.f32 1e-05, %v3045
      %v3047 = vpop.f32.mrb[0].mxu0
      %3048 = vmatprep.mubr.f32.mxu0 0.0
      %3049 = vmatmul.mubr.f32.gmra.mrb[0].mxu0 %v230
      %v3050 = vpop.f32.mrb[0].mxu0
      %v3051 = vadd.f32 1e-05, %v3050
      %v3052 = vpop.f32.mrb[0].mxu0
      %3053 = vmatprep.mubr.f32.mxu0 0.0
      %3054 = vmatmul.mubr.f32.gmra.mrb[0].mxu0 %v231
      %v3055 = vpop.f32.mrb[0].mxu0
      %v3056 = vadd.f32 1e-05, %v3055
      %v3057 = vpop.f32.mrb[0].mxu0
      %3058 = vmatprep.mubr.f32.mxu0 0.0
      %3059 = vmatmul.mubr.f32.gmra.mrb[0].mxu0 %v232
      %v3060 = vpop.f32.mrb[0].mxu0
      %v3061 = vadd.f32 1e-05, %v3060
      %v3062 = vpop.f32.mrb[0].mxu0
      %3063 = vdwg.mxu0
      %v3064 = vrsqrt.pop %v2986
      %v3065 = vrsqrt.pop %v2991
      %v3066 = vrsqrt.pop %v2996
      %v3067 = vrsqrt.pop %v3001
      %v3068 = vrsqrt.pop %v3006
      %v3069 = vrsqrt.pop %v3011
      %v3070 = vrsqrt.pop %v3016
      %v3071 = vrsqrt.pop %v3021
      %v3072 = vrsqrt.pop %v3026
      %v3073 = vrsqrt.pop %v3031
      %v3074 = vrsqrt.pop %v3036
      %v3075 = vrsqrt.pop %v3041
      %v3076 = vrsqrt.pop %v3046
      %v3077 = vrsqrt.pop %v3051
      %v3078 = vrsqrt.pop %v3056
      %v3079 = vrsqrt.pop %v3061
      %v3080 = vmul.f32 %v2885, %v3064
      %v3081 = vmul.f32 %v2886, %v3065
      %v3082 = vmul.f32 %v2887, %v3066
      %v3083 = vmul.f32 %v2888, %v3067
      %v3084 = vmul.f32 %v2889, %v3068
      %v3085 = vmul.f32 %v2890, %v3069
      %v3086 = vmul.f32 %v2891, %v3070
      %v3087 = vmul.f32 %v2892, %v3071
      %v3088 = vmul.f32 %v2893, %v3072
      %v3089 = vmul.f32 %v2894, %v3073
      %v3090 = vmul.f32 %v2895, %v3074
      %v3091 = vmul.f32 %v2896, %v3075
      %v3092 = vmul.f32 %v2897, %v3076
      %v3093 = vmul.f32 %v2898, %v3077
      %v3094 = vmul.f32 %v2899, %v3078
      %v3095 = vmul.f32 %v2900, %v3079
      %v3096 = vmul.f32 %v3080, %v2917
      %v3097 = vmul.f32 %v3081, %v2917
      %v3098 = vmul.f32 %v3082, %v2917
      %v3099 = vmul.f32 %v3083, %v2917
      %v3100 = vmul.f32 %v3084, %v2917
      %v3101 = vmul.f32 %v3085, %v2917
      %v3102 = vmul.f32 %v3086, %v2917
      %v3103 = vmul.f32 %v3087, %v2917
      %v3104 = vmul.f32 %v3088, %v2917
      %v3105 = vmul.f32 %v3089, %v2917
      %v3106 = vmul.f32 %v3090, %v2917
      %v3107 = vmul.f32 %v3091, %v2917
      %v3108 = vmul.f32 %v3092, %v2917
      %v3109 = vmul.f32 %v3093, %v2917
      %v3110 = vmul.f32 %v3094, %v2917
      %v3111 = vmul.f32 %v3095, %v2917
      %v3112 = vadd.f32 %v3096, %v2918
      %v3113 = vadd.f32 %v3097, %v2918
      %v3114 = vadd.f32 %v3098, %v2918
      %v3115 = vadd.f32 %v3099, %v2918
      %v3116 = vadd.f32 %v3100, %v2918
      %v3117 = vadd.f32 %v3101, %v2918
      %v3118 = vadd.f32 %v3102, %v2918
      %v3119 = vadd.f32 %v3103, %v2918
      %v3120 = vadd.f32 %v3104, %v2918
      %v3121 = vadd.f32 %v3105, %v2918
      %v3122 = vadd.f32 %v3106, %v2918
      %v3123 = vadd.f32 %v3107, %v2918
      %v3124 = vadd.f32 %v3108, %v2918
      %v3125 = vadd.f32 %v3109, %v2918
      %v3126 = vadd.f32 %v3110, %v2918
      %v3127 = vadd.f32 %v3111, %v2918
      %v3128 = vmul.f32 %v3112, 0.5
      %v3129 = vmul.f32 %v3113, 0.5
      %v3130 = vmul.f32 %v3114, 0.5
      %v3131 = vmul.f32 %v3115, 0.5
      %v3132 = vmul.f32 %v3116, 0.5
      %v3133 = vmul.f32 %v3117, 0.5
      %v3134 = vmul.f32 %v3118, 0.5
      %v3135 = vmul.f32 %v3119, 0.5
      %v3136 = vmul.f32 %v3120, 0.5
      %v3137 = vmul.f32 %v3121, 0.5
      %v3138 = vmul.f32 %v3122, 0.5
      %v3139 = vmul.f32 %v3123, 0.5
      %v3140 = vmul.f32 %v3124, 0.5
      %v3141 = vmul.f32 %v3125, 0.5
      %v3142 = vmul.f32 %v3126, 0.5
      %v3143 = vmul.f32 %v3127, 0.5
      %v3144 = vmul.f32 %v3112, 0.70710677
      %v3145 = vmul.f32 %v3113, 0.70710677
      %v3146 = vmul.f32 %v3114, 0.70710677
      %v3147 = vmul.f32 %v3115, 0.70710677
      %v3148 = vmul.f32 %v3116, 0.70710677
      %v3149 = vmul.f32 %v3117, 0.70710677
      %v3150 = vmul.f32 %v3118, 0.70710677
      %v3151 = vmul.f32 %v3119, 0.70710677
      %v3152 = vmul.f32 %v3120, 0.70710677
      %v3153 = vmul.f32 %v3121, 0.70710677
      %v3154 = vmul.f32 %v3122, 0.70710677
      %v3155 = vmul.f32 %v3123, 0.70710677
      %v3156 = vmul.f32 %v3124, 0.70710677
      %v3157 = vmul.f32 %v3125, 0.70710677
      %v3158 = vmul.f32 %v3126, 0.70710677
      %v3159 = vmul.f32 %v3127, 0.70710677
      %v3160 = verf.f32.pop %v3144
      %v3161 = verf.f32.pop %v3145
      %v3162 = verf.f32.pop %v3146
      %v3163 = verf.f32.pop %v3147
      %v3164 = verf.f32.pop %v3148
      %v3165 = verf.f32.pop %v3149
      %v3166 = verf.f32.pop %v3150
      %v3167 = verf.f32.pop %v3151
      %v3168 = verf.f32.pop %v3152
      %v3169 = verf.f32.pop %v3153
      %v3170 = verf.f32.pop %v3154
      %v3171 = verf.f32.pop %v3155
      %v3172 = verf.f32.pop %v3156
      %v3173 = verf.f32.pop %v3157
      %v3174 = verf.f32.pop %v3158
      %v3175 = verf.f32.pop %v3159
      %v3176 = vadd.f32 %v3160, 1.0
      %v3177 = vadd.f32 %v3161, 1.0
      %v3178 = vadd.f32 %v3162, 1.0
      %v3179 = vadd.f32 %v3163, 1.0
      %v3180 = vadd.f32 %v3164, 1.0
      %v3181 = vadd.f32 %v3165, 1.0
      %v3182 = vadd.f32 %v3166, 1.0
      %v3183 = vadd.f32 %v3167, 1.0
      %v3184 = vadd.f32 %v3168, 1.0
      %v3185 = vadd.f32 %v3169, 1.0
      %v3186 = vadd.f32 %v3170, 1.0
      %v3187 = vadd.f32 %v3171, 1.0
      %v3188 = vadd.f32 %v3172, 1.0
      %v3189 = vadd.f32 %v3173, 1.0
      %v3190 = vadd.f32 %v3174, 1.0
      %v3191 = vadd.f32 %v3175, 1.0
      %v3192 = vmul.f32 %v3128, %v3176
      %v3193 = vmul.f32 %v3129, %v3177
      %v3194 = vmul.f32 %v3130, %v3178
      %v3195 = vmul.f32 %v3131, %v3179
      %v3196 = vmul.f32 %v3132, %v3180
      %v3197 = vmul.f32 %v3133, %v3181
      %v3198 = vmul.f32 %v3134, %v3182
      %v3199 = vmul.f32 %v3135, %v3183
      %v3200 = vmul.f32 %v3136, %v3184
      %v3201 = vmul.f32 %v3137, %v3185
      %v3202 = vmul.f32 %v3138, %v3186
      %v3203 = vmul.f32 %v3139, %v3187
      %v3204 = vmul.f32 %v3140, %v3188
      %v3205 = vmul.f32 %v3141, %v3189
      %v3206 = vmul.f32 %v3142, %v3190
      %v3207 = vmul.f32 %v3143, %v3191
      %v3208 = vmul.f32 %v3192, 0.7072136
      %v3209 = vmul.f32 %v3193, 0.7072136
      %v3210 = vmul.f32 %v3194, 0.7072136
      %v3211 = vmul.f32 %v3195, 0.7072136
      %v3212 = vmul.f32 %v3196, 0.7072136
      %v3213 = vmul.f32 %v3197, 0.7072136
      %v3214 = vmul.f32 %v3198, 0.7072136
      %v3215 = vmul.f32 %v3199, 0.7072136
      %v3216 = vmul.f32 %v3200, 0.7072136
      %v3217 = vmul.f32 %v3201, 0.7072136
      %v3218 = vmul.f32 %v3202, 0.7072136
      %v3219 = vmul.f32 %v3203, 0.7072136
      %v3220 = vmul.f32 %v3204, 0.7072136
      %v3221 = vmul.f32 %v3205, 0.7072136
      %v3222 = vmul.f32 %v3206, 0.7072136
      %v3223 = vmul.f32 %v3207, 0.7072136
      %v3224 = vld [vmem:[%s1 + $0x1c0] sm:$0xff]
      %v3225 = vld [vmem:[%s1 + $0x1d0] sm:$0xff]
      %v3226 = vld [vmem:[%s1 + $0x1e0] sm:$0xff]
      %v3227 = vld [vmem:[%s1 + $0x1f0] sm:$0xff]
      %v3229 = vsel %vm255, %v3208, 0
      %v3232 = vsel %vm255, %v3209, 0
      %v3235 = vsel %vm255, %v3210, 0
      %v3238 = vsel %vm255, %v3211, 0
      %v3241 = vsel %vm255, %v3212, 0
      %v3244 = vsel %vm255, %v3213, 0
      %v3247 = vsel %vm255, %v3214, 0
      %v3250 = vsel %vm255, %v3215, 0
      %v3253 = vsel %vm255, %v3216, 0
      %v3256 = vsel %vm255, %v3217, 0
      %v3259 = vsel %vm255, %v3218, 0
      %v3262 = vsel %vm255, %v3219, 0
      %v3265 = vsel %vm255, %v3220, 0
      %v3268 = vsel %vm255, %v3221, 0
      %v3271 = vsel %vm255, %v3222, 0
      %v3274 = vsel %vm255, %v3223, 0
      %3276 = vmatprep.subr.mxu0 0.0
      %3277 = vmatpush1.msra.mxu0 %v3224
      %3278 = vmatprep.subr.mxu0 0.0
      %3279 = vmatpush1.msra.mxu0 %v3225
      %3280 = vmatprep.subr.mxu0 0.0
      %3281 = vmatpush1.msra.mxu0 %v3226
      %3282 = vmatprep.subr.mxu0 0.0
      %3283 = vmatpush1.msra.mxu0 %v3227
      %3284 = vmatprep.subr.mxu0 0.0
      %3285 = vmatpush1.msra.mxu0 0.0
      %3286 = vmatprep.subr.mxu0 0.0
      %3287 = vmatpush1.msra.mxu0 0.0
      %3288 = vmatprep.subr.mxu0 0.0
      %3289 = vmatpush1.msra.mxu0 0.0
      %3290 = vmatprep.subr.mxu0 0.0
      %3291 = vmatpush1.msra.mxu0 0.0
      %3292 = vmatprep.subr.mxu0 0.0
      %3293 = vmatpush1.msra.mxu0 0.0
      %3294 = vmatprep.subr.mxu0 0.0
      %3295 = vmatpush1.msra.mxu0 0.0
      %3296 = vmatprep.subr.mxu0 0.0
      %3297 = vmatpush1.msra.mxu0 0.0
      %3298 = vmatprep.subr.mxu0 0.0
      %3299 = vmatpush1.msra.mxu0 0.0
      %3300 = vmatprep.subr.mxu0 0.0
      %3301 = vmatpush1.msra.mxu0 0.0
      %3302 = vmatprep.subr.mxu0 0.0
      %3303 = vmatpush1.msra.mxu0 0.0
      %3304 = vmatprep.subr.mxu0 0.0
      %3305 = vmatpush1.msra.mxu0 0.0
      %3306 = vmatprep.subr.mxu0 0.0
      %3307 = vmatpush1.msra.mxu0 0.0
      %3308 = vmatprep.subr.mxu0 0.0
      %3309 = vmatpush1.msra.mxu0 0.0
      %3310 = vmatprep.subr.mxu0 0.0
      %3311 = vmatpush1.msra.mxu0 0.0
      %3312 = vmatprep.subr.mxu0 0.0
      %3313 = vmatpush1.msra.mxu0 0.0
      %3314 = vmatprep.subr.mxu0 0.0
      %3315 = vmatpush1.msra.mxu0 0.0
      %3316 = vmatprep.subr.mxu0 0.0
      %3317 = vmatpush1.msra.mxu0 0.0
      %3318 = vmatprep.subr.mxu0 0.0
      %3319 = vmatpush1.msra.mxu0 0.0
      %3320 = vmatprep.subr.mxu0 0.0
      %3321 = vmatpush1.msra.mxu0 0.0
      %3322 = vmatprep.subr.mxu0 0.0
      %3323 = vmatpush1.msra.mxu0 0.0
      %3324 = vmatprep.subr.mxu0 0.0
      %3325 = vmatpush1.msra.mxu0 0.0
      %3326 = vmatprep.subr.mxu0 0.0
      %3327 = vmatpush1.msra.mxu0 0.0
      %3328 = vmatprep.subr.mxu0 0.0
      %3329 = vmatpush1.msra.mxu0 0.0
      %3330 = vmatprep.subr.mxu0 0.0
      %3331 = vmatpush1.msra.mxu0 0.0
      %3332 = vmatprep.subr.mxu0 0.0
      %3333 = vmatpush1.msra.mxu0 0.0
      %3334 = vmatprep.subr.mxu0 0.0
      %3335 = vmatpush1.msra.mxu0 0.0
      %3336 = vmatprep.subr.mxu0 0.0
      %3337 = vmatpush1.msra.mxu0 0.0
      %3338 = vmatprep.subr.mxu0 0.0
      %3339 = vmatpush1.msra.mxu0 0.0
      %3340 = vmatprep.mubr.f32.mxu0 0.0
      %3341 = vmatmul.mubr.f32.gmra.mrb[0].mxu0 %v3229
      %v3342 = vpop.f32.mrb[0].mxu0
      %v3343 = vadd.f32 %v373, %v3342
      %v3344 = vpop.f32.mrb[0].mxu0
      %3345 = vmatprep.mubr.f32.mxu0 0.0
      %3346 = vmatmul.mubr.f32.gmra.mrb[0].mxu0 %v3232
      %v3347 = vpop.f32.mrb[0].mxu0
      %v3348 = vadd.f32 %v379, %v3347
      %v3349 = vpop.f32.mrb[0].mxu0
      %3350 = vmatprep.mubr.f32.mxu0 0.0
      %3351 = vmatmul.mubr.f32.gmra.mrb[0].mxu0 %v3235
      %v3352 = vpop.f32.mrb[0].mxu0
      %v3353 = vadd.f32 %v385, %v3352
      %v3354 = vpop.f32.mrb[0].mxu0
      %3355 = vmatprep.mubr.f32.mxu0 0.0
      %3356 = vmatmul.mubr.f32.gmra.mrb[0].mxu0 %v3238
      %v3357 = vpop.f32.mrb[0].mxu0
      %v3358 = vadd.f32 %v391, %v3357
      %v3359 = vpop.f32.mrb[0].mxu0
      %3360 = vmatprep.mubr.f32.mxu0 0.0
      %3361 = vmatmul.mubr.f32.gmra.mrb[0].mxu0 %v3241
      %v3362 = vpop.f32.mrb[0].mxu0
      %v3363 = vadd.f32 %v397, %v3362
      %v3364 = vpop.f32.mrb[0].mxu0
      %3365 = vmatprep.mubr.f32.mxu0 0.0
      %3366 = vmatmul.mubr.f32.gmra.mrb[0].mxu0 %v3244
      %v3367 = vpop.f32.mrb[0].mxu0
      %v3368 = vadd.f32 %v403, %v3367
      %v3369 = vpop.f32.mrb[0].mxu0
      %3370 = vmatprep.mubr.f32.mxu0 0.0
      %3371 = vmatmul.mubr.f32.gmra.mrb[0].mxu0 %v3247
      %v3372 = vpop.f32.mrb[0].mxu0
      %v3373 = vadd.f32 %v409, %v3372
      %v3374 = vpop.f32.mrb[0].mxu0
      %3375 = vmatprep.mubr.f32.mxu0 0.0
      %3376 = vmatmul.mubr.f32.gmra.mrb[0].mxu0 %v3250
      %v3377 = vpop.f32.mrb[0].mxu0
      %v3378 = vadd.f32 %v415, %v3377
      %v3379 = vpop.f32.mrb[0].mxu0
      %3380 = vmatprep.mubr.f32.mxu0 0.0
      %3381 = vmatmul.mubr.f32.gmra.mrb[0].mxu0 %v3253
      %v3382 = vpop.f32.mrb[0].mxu0
      %v3383 = vadd.f32 %v421, %v3382
      %v3384 = vpop.f32.mrb[0].mxu0
      %3385 = vmatprep.mubr.f32.mxu0 0.0
      %3386 = vmatmul.mubr.f32.gmra.mrb[0].mxu0 %v3256
      %v3387 = vpop.f32.mrb[0].mxu0
      %v3388 = vadd.f32 %v427, %v3387
      %v3389 = vpop.f32.mrb[0].mxu0
      %3390 = vmatprep.mubr.f32.mxu0 0.0
      %3391 = vmatmul.mubr.f32.gmra.mrb[0].mxu0 %v3259
      %v3392 = vpop.f32.mrb[0].mxu0
      %v3393 = vadd.f32 %v433, %v3392
      %v3394 = vpop.f32.mrb[0].mxu0
      %3395 = vmatprep.mubr.f32.mxu0 0.0
      %3396 = vmatmul.mubr.f32.gmra.mrb[0].mxu0 %v3262
      %v3397 = vpop.f32.mrb[0].mxu0
      %v3398 = vadd.f32 %v439, %v3397
      %v3399 = vpop.f32.mrb[0].mxu0
      %3400 = vmatprep.mubr.f32.mxu0 0.0
      %3401 = vmatmul.mubr.f32.gmra.mrb[0].mxu0 %v3265
      %v3402 = vpop.f32.mrb[0].mxu0
      %v3403 = vadd.f32 %v445, %v3402
      %v3404 = vpop.f32.mrb[0].mxu0
      %3405 = vmatprep.mubr.f32.mxu0 0.0
      %3406 = vmatmul.mubr.f32.gmra.mrb[0].mxu0 %v3268
      %v3407 = vpop.f32.mrb[0].mxu0
      %v3408 = vadd.f32 %v451, %v3407
      %v3409 = vpop.f32.mrb[0].mxu0
      %3410 = vmatprep.mubr.f32.mxu0 0.0
      %3411 = vmatmul.mubr.f32.gmra.mrb[0].mxu0 %v3271
      %v3412 = vpop.f32.mrb[0].mxu0
      %v3413 = vadd.f32 %v457, %v3412
      %v3414 = vpop.f32.mrb[0].mxu0
      %3415 = vmatprep.mubr.f32.mxu0 0.0
      %3416 = vmatmul.mubr.f32.gmra.mrb[0].mxu0 %v3274
      %v3417 = vpop.f32.mrb[0].mxu0
      %v3418 = vadd.f32 %v463, %v3417
      %v3419 = vpop.f32.mrb[0].mxu0
      %3420 = vdwg.mxu0
      %3421 = vmatprep.subr.mxu0 0.0
      %3422 = vmatpush1.msra.mxu0 %v3343
      %3423 = vmatprep.subr.mxu0 0.0
      %3424 = vmatpush1.msra.mxu0 %v3348
      %3425 = vmatprep.subr.mxu0 0.0
      %3426 = vmatpush1.msra.mxu0 %v3353
      %3427 = vmatprep.subr.mxu0 0.0
      %3428 = vmatpush1.msra.mxu0 %v3358
      %3429 = vmatprep.subr.mxu0 0.0
      %3430 = vmatpush1.msra.mxu0 %v3363
      %3431 = vmatprep.subr.mxu0 0.0
      %3432 = vmatpush1.msra.mxu0 %v3368
      %3433 = vmatprep.subr.mxu0 0.0
      %3434 = vmatpush1.msra.mxu0 %v3373
      %3435 = vmatprep.subr.mxu0 0.0
      %3436 = vmatpush1.msra.mxu0 %v3378
      %3437 = vmatprep.subr.mxu0 0.0
      %3438 = vmatpush1.msra.mxu0 %v3383
      %3439 = vmatprep.subr.mxu0 0.0
      %3440 = vmatpush1.msra.mxu0 %v3388
      %3441 = vmatprep.subr.mxu0 0.0
      %3442 = vmatpush1.msra.mxu0 %v3393
      %3443 = vmatprep.subr.mxu0 0.0
      %3444 = vmatpush1.msra.mxu0 %v3398
      %3445 = vmatprep.subr.mxu0 0.0
      %3446 = vmatpush1.msra.mxu0 %v3403
      %3447 = vmatprep.subr.mxu0 0.0
      %3448 = vmatpush1.msra.mxu0 %v3408
      %3449 = vmatprep.subr.mxu0 0.0
      %3450 = vmatpush1.msra.mxu0 %v3413
      %3451 = vmatprep.subr.mxu0 0.0
      %3452 = vmatpush1.msra.mxu0 %v3418
      %3453 = vmatprep.subr.mxu0 0.0
      %3454 = vmatpush1.msra.mxu0 0.0
      %3455 = vmatprep.subr.mxu0 0.0
      %3456 = vmatpush1.msra.mxu0 0.0
      %3457 = vmatprep.subr.mxu0 0.0
      %3458 = vmatpush1.msra.mxu0 0.0
      %3459 = vmatprep.subr.mxu0 0.0
      %3460 = vmatpush1.msra.mxu0 0.0
      %3461 = vmatprep.subr.mxu0 0.0
      %3462 = vmatpush1.msra.mxu0 0.0
      %3463 = vmatprep.subr.mxu0 0.0
      %3464 = vmatpush1.msra.mxu0 0.0
      %3465 = vmatprep.subr.mxu0 0.0
      %3466 = vmatpush1.msra.mxu0 0.0
      %3467 = vmatprep.subr.mxu0 0.0
      %3468 = vmatpush1.msra.mxu0 0.0
      %3469 = vmatprep.subr.mxu0 0.0
      %3470 = vmatpush1.msra.mxu0 0.0
      %3471 = vmatprep.subr.mxu0 0.0
      %3472 = vmatpush1.msra.mxu0 0.0
      %3473 = vmatprep.subr.mxu0 0.0
      %3474 = vmatpush1.msra.mxu0 0.0
      %3475 = vmatprep.subr.mxu0 0.0
      %3476 = vmatpush1.msra.mxu0 0.0
      %3477 = vmatprep.subr.mxu0 0.0
      %3478 = vmatpush1.msra.mxu0 0.0
      %3479 = vmatprep.subr.mxu0 0.0
      %3480 = vmatpush1.msra.mxu0 0.0
      %3481 = vmatprep.subr.mxu0 0.0
      %3482 = vmatpush1.msra.mxu0 0.0
      %3483 = vmatprep.subr.mxu0 0.0
      %3484 = vmatpush1.msra.mxu0 0.0
      %3485 = vmatprep.mubr.f32.mxu0 0.0
      %3486 = vmatmul.mubr.f32.gmra.mrb[0].mxu0 %v217
      %v3487 = vpop.f32.mrb[0].mxu0
      %v3488 = vadd.f32 0.0, %v3487
      %v3489 = vpop.f32.mrb[0].mxu0
      %3490 = vmatprep.mubr.f32.mxu0 0.0
      %3491 = vmatmul.mubr.f32.gmra.mrb[0].mxu0 %v218
      %v3492 = vpop.f32.mrb[0].mxu0
      %v3493 = vadd.f32 0.0, %v3492
      %v3494 = vpop.f32.mrb[0].mxu0
      %3495 = vmatprep.mubr.f32.mxu0 0.0
      %3496 = vmatmul.mubr.f32.gmra.mrb[0].mxu0 %v219
      %v3497 = vpop.f32.mrb[0].mxu0
      %v3498 = vadd.f32 0.0, %v3497
      %v3499 = vpop.f32.mrb[0].mxu0
      %3500 = vmatprep.mubr.f32.mxu0 0.0
      %3501 = vmatmul.mubr.f32.gmra.mrb[0].mxu0 %v220
      %v3502 = vpop.f32.mrb[0].mxu0
      %v3503 = vadd.f32 0.0, %v3502
      %v3504 = vpop.f32.mrb[0].mxu0
      %3505 = vmatprep.mubr.f32.mxu0 0.0
      %3506 = vmatmul.mubr.f32.gmra.mrb[0].mxu0 %v221
      %v3507 = vpop.f32.mrb[0].mxu0
      %v3508 = vadd.f32 0.0, %v3507
      %v3509 = vpop.f32.mrb[0].mxu0
      %3510 = vmatprep.mubr.f32.mxu0 0.0
      %3511 = vmatmul.mubr.f32.gmra.mrb[0].mxu0 %v222
      %v3512 = vpop.f32.mrb[0].mxu0
      %v3513 = vadd.f32 0.0, %v3512
      %v3514 = vpop.f32.mrb[0].mxu0
      %3515 = vmatprep.mubr.f32.mxu0 0.0
      %3516 = vmatmul.mubr.f32.gmra.mrb[0].mxu0 %v223
      %v3517 = vpop.f32.mrb[0].mxu0
      %v3518 = vadd.f32 0.0, %v3517
      %v3519 = vpop.f32.mrb[0].mxu0
      %3520 = vmatprep.mubr.f32.mxu0 0.0
      %3521 = vmatmul.mubr.f32.gmra.mrb[0].mxu0 %v224
      %v3522 = vpop.f32.mrb[0].mxu0
      %v3523 = vadd.f32 0.0, %v3522
      %v3524 = vpop.f32.mrb[0].mxu0
      %3525 = vmatprep.mubr.f32.mxu0 0.0
      %3526 = vmatmul.mubr.f32.gmra.mrb[0].mxu0 %v225
      %v3527 = vpop.f32.mrb[0].mxu0
      %v3528 = vadd.f32 0.0, %v3527
      %v3529 = vpop.f32.mrb[0].mxu0
      %3530 = vmatprep.mubr.f32.mxu0 0.0
      %3531 = vmatmul.mubr.f32.gmra.mrb[0].mxu0 %v226
      %v3532 = vpop.f32.mrb[0].mxu0
      %v3533 = vadd.f32 0.0, %v3532
      %v3534 = vpop.f32.mrb[0].mxu0
      %3535 = vmatprep.mubr.f32.mxu0 0.0
      %3536 = vmatmul.mubr.f32.gmra.mrb[0].mxu0 %v227
      %v3537 = vpop.f32.mrb[0].mxu0
      %v3538 = vadd.f32 0.0, %v3537
      %v3539 = vpop.f32.mrb[0].mxu0
      %3540 = vmatprep.mubr.f32.mxu0 0.0
      %3541 = vmatmul.mubr.f32.gmra.mrb[0].mxu0 %v228
      %v3542 = vpop.f32.mrb[0].mxu0
      %v3543 = vadd.f32 0.0, %v3542
      %v3544 = vpop.f32.mrb[0].mxu0
      %3545 = vmatprep.mubr.f32.mxu0 0.0
      %3546 = vmatmul.mubr.f32.gmra.mrb[0].mxu0 %v229
      %v3547 = vpop.f32.mrb[0].mxu0
      %v3548 = vadd.f32 0.0, %v3547
      %v3549 = vpop.f32.mrb[0].mxu0
      %3550 = vmatprep.mubr.f32.mxu0 0.0
      %3551 = vmatmul.mubr.f32.gmra.mrb[0].mxu0 %v230
      %v3552 = vpop.f32.mrb[0].mxu0
      %v3553 = vadd.f32 0.0, %v3552
      %v3554 = vpop.f32.mrb[0].mxu0
      %3555 = vmatprep.mubr.f32.mxu0 0.0
      %3556 = vmatmul.mubr.f32.gmra.mrb[0].mxu0 %v231
      %v3557 = vpop.f32.mrb[0].mxu0
      %v3558 = vadd.f32 0.0, %v3557
      %v3559 = vpop.f32.mrb[0].mxu0
      %3560 = vmatprep.mubr.f32.mxu0 0.0
      %3561 = vmatmul.mubr.f32.gmra.mrb[0].mxu0 %v232
      %v3562 = vpop.f32.mrb[0].mxu0
      %v3563 = vadd.f32 0.0, %v3562
      %v3564 = vpop.f32.mrb[0].mxu0
      %3565 = vdwg.mxu0
      %v3566 = vsub.f32 %v3343, %v3488
      %v3567 = vsub.f32 %v3348, %v3493
      %v3568 = vsub.f32 %v3353, %v3498
      %v3569 = vsub.f32 %v3358, %v3503
      %v3570 = vsub.f32 %v3363, %v3508
      %v3571 = vsub.f32 %v3368, %v3513
      %v3572 = vsub.f32 %v3373, %v3518
      %v3573 = vsub.f32 %v3378, %v3523
      %v3574 = vsub.f32 %v3383, %v3528
      %v3575 = vsub.f32 %v3388, %v3533
      %v3576 = vsub.f32 %v3393, %v3538
      %v3577 = vsub.f32 %v3398, %v3543
      %v3578 = vsub.f32 %v3403, %v3548
      %v3579 = vsub.f32 %v3408, %v3553
      %v3580 = vsub.f32 %v3413, %v3558
      %v3581 = vsub.f32 %v3418, %v3563
      %v3582 = vmul.f32 %v3566, %v3566
      %v3583 = vmul.f32 %v3567, %v3567
      %v3584 = vmul.f32 %v3568, %v3568
      %v3585 = vmul.f32 %v3569, %v3569
      %v3586 = vmul.f32 %v3570, %v3570
      %v3587 = vmul.f32 %v3571, %v3571
      %v3588 = vmul.f32 %v3572, %v3572
      %v3589 = vmul.f32 %v3573, %v3573
      %v3590 = vmul.f32 %v3574, %v3574
      %v3591 = vmul.f32 %v3575, %v3575
      %v3592 = vmul.f32 %v3576, %v3576
      %v3593 = vmul.f32 %v3577, %v3577
      %v3594 = vmul.f32 %v3578, %v3578
      %v3595 = vmul.f32 %v3579, %v3579
      %v3596 = vmul.f32 %v3580, %v3580
      %v3597 = vmul.f32 %v3581, %v3581
      %v3598 = vld [vmem:[%s2 + $0x5] ss:$0 sm:$0xff]
      %v3599 = vld [vmem:[%s2 + $0x6] ss:$0 sm:$0xff]
      %3600 = vmatprep.subr.mxu0 0.0
      %3601 = vmatpush1.msra.mxu0 %v3582
      %3602 = vmatprep.subr.mxu0 0.0
      %3603 = vmatpush1.msra.mxu0 %v3583
      %3604 = vmatprep.subr.mxu0 0.0
      %3605 = vmatpush1.msra.mxu0 %v3584
      %3606 = vmatprep.subr.mxu0 0.0
      %3607 = vmatpush1.msra.mxu0 %v3585
      %3608 = vmatprep.subr.mxu0 0.0
      %3609 = vmatpush1.msra.mxu0 %v3586
      %3610 = vmatprep.subr.mxu0 0.0
      %3611 = vmatpush1.msra.mxu0 %v3587
      %3612 = vmatprep.subr.mxu0 0.0
      %3613 = vmatpush1.msra.mxu0 %v3588
      %3614 = vmatprep.subr.mxu0 0.0
      %3615 = vmatpush1.msra.mxu0 %v3589
      %3616 = vmatprep.subr.mxu0 0.0
      %3617 = vmatpush1.msra.mxu0 %v3590
      %3618 = vmatprep.subr.mxu0 0.0
      %3619 = vmatpush1.msra.mxu0 %v3591
      %3620 = vmatprep.subr.mxu0 0.0
      %3621 = vmatpush1.msra.mxu0 %v3592
      %3622 = vmatprep.subr.mxu0 0.0
      %3623 = vmatpush1.msra.mxu0 %v3593
      %3624 = vmatprep.subr.mxu0 0.0
      %3625 = vmatpush1.msra.mxu0 %v3594
      %3626 = vmatprep.subr.mxu0 0.0
      %3627 = vmatpush1.msra.mxu0 %v3595
      %3628 = vmatprep.subr.mxu0 0.0
      %3629 = vmatpush1.msra.mxu0 %v3596
      %3630 = vmatprep.subr.mxu0 0.0
      %3631 = vmatpush1.msra.mxu0 %v3597
      %3632 = vmatprep.subr.mxu0 0.0
      %3633 = vmatpush1.msra.mxu0 0.0
      %3634 = vmatprep.subr.mxu0 0.0
      %3635 = vmatpush1.msra.mxu0 0.0
      %3636 = vmatprep.subr.mxu0 0.0
      %3637 = vmatpush1.msra.mxu0 0.0
      %3638 = vmatprep.subr.mxu0 0.0
      %3639 = vmatpush1.msra.mxu0 0.0
      %3640 = vmatprep.subr.mxu0 0.0
      %3641 = vmatpush1.msra.mxu0 0.0
      %3642 = vmatprep.subr.mxu0 0.0
      %3643 = vmatpush1.msra.mxu0 0.0
      %3644 = vmatprep.subr.mxu0 0.0
      %3645 = vmatpush1.msra.mxu0 0.0
      %3646 = vmatprep.subr.mxu0 0.0
      %3647 = vmatpush1.msra.mxu0 0.0
      %3648 = vmatprep.subr.mxu0 0.0
      %3649 = vmatpush1.msra.mxu0 0.0
      %3650 = vmatprep.subr.mxu0 0.0
      %3651 = vmatpush1.msra.mxu0 0.0
      %3652 = vmatprep.subr.mxu0 0.0
      %3653 = vmatpush1.msra.mxu0 0.0
      %3654 = vmatprep.subr.mxu0 0.0
      %3655 = vmatpush1.msra.mxu0 0.0
      %3656 = vmatprep.subr.mxu0 0.0
      %3657 = vmatpush1.msra.mxu0 0.0
      %3658 = vmatprep.subr.mxu0 0.0
      %3659 = vmatpush1.msra.mxu0 0.0
      %3660 = vmatprep.subr.mxu0 0.0
      %3661 = vmatpush1.msra.mxu0 0.0
      %3662 = vmatprep.subr.mxu0 0.0
      %3663 = vmatpush1.msra.mxu0 0.0
      %3664 = vmatprep.mubr.f32.mxu0 0.0
      %3665 = vmatmul.mubr.f32.gmra.mrb[0].mxu0 %v217
      %v3666 = vpop.f32.mrb[0].mxu0
      %v3667 = vadd.f32 1e-05, %v3666
      %v3668 = vpop.f32.mrb[0].mxu0
      %3669 = vmatprep.mubr.f32.mxu0 0.0
      %3670 = vmatmul.mubr.f32.gmra.mrb[0].mxu0 %v218
      %v3671 = vpop.f32.mrb[0].mxu0
      %v3672 = vadd.f32 1e-05, %v3671
      %v3673 = vpop.f32.mrb[0].mxu0
      %3674 = vmatprep.mubr.f32.mxu0 0.0
      %3675 = vmatmul.mubr.f32.gmra.mrb[0].mxu0 %v219
      %v3676 = vpop.f32.mrb[0].mxu0
      %v3677 = vadd.f32 1e-05, %v3676
      %v3678 = vpop.f32.mrb[0].mxu0
      %3679 = vmatprep.mubr.f32.mxu0 0.0
      %3680 = vmatmul.mubr.f32.gmra.mrb[0].mxu0 %v220
      %v3681 = vpop.f32.mrb[0].mxu0
      %v3682 = vadd.f32 1e-05, %v3681
      %v3683 = vpop.f32.mrb[0].mxu0
      %3684 = vmatprep.mubr.f32.mxu0 0.0
      %3685 = vmatmul.mubr.f32.gmra.mrb[0].mxu0 %v221
      %v3686 = vpop.f32.mrb[0].mxu0
      %v3687 = vadd.f32 1e-05, %v3686
      %v3688 = vpop.f32.mrb[0].mxu0
      %3689 = vmatprep.mubr.f32.mxu0 0.0
      %3690 = vmatmul.mubr.f32.gmra.mrb[0].mxu0 %v222
      %v3691 = vpop.f32.mrb[0].mxu0
      %v3692 = vadd.f32 1e-05, %v3691
      %v3693 = vpop.f32.mrb[0].mxu0
      %3694 = vmatprep.mubr.f32.mxu0 0.0
      %3695 = vmatmul.mubr.f32.gmra.mrb[0].mxu0 %v223
      %v3696 = vpop.f32.mrb[0].mxu0
      %v3697 = vadd.f32 1e-05, %v3696
      %v3698 = vpop.f32.mrb[0].mxu0
      %3699 = vmatprep.mubr.f32.mxu0 0.0
      %3700 = vmatmul.mubr.f32.gmra.mrb[0].mxu0 %v224
      %v3701 = vpop.f32.mrb[0].mxu0
      %v3702 = vadd.f32 1e-05, %v3701
      %v3703 = vpop.f32.mrb[0].mxu0
      %3704 = vmatprep.mubr.f32.mxu0 0.0
      %3705 = vmatmul.mubr.f32.gmra.mrb[0].mxu0 %v225
      %v3706 = vpop.f32.mrb[0].mxu0
      %v3707 = vadd.f32 1e-05, %v3706
      %v3708 = vpop.f32.mrb[0].mxu0
      %3709 = vmatprep.mubr.f32.mxu0 0.0
      %3710 = vmatmul.mubr.f32.gmra.mrb[0].mxu0 %v226
      %v3711 = vpop.f32.mrb[0].mxu0
      %v3712 = vadd.f32 1e-05, %v3711
      %v3713 = vpop.f32.mrb[0].mxu0
      %3714 = vmatprep.mubr.f32.mxu0 0.0
      %3715 = vmatmul.mubr.f32.gmra.mrb[0].mxu0 %v227
      %v3716 = vpop.f32.mrb[0].mxu0
      %v3717 = vadd.f32 1e-05, %v3716
      %v3718 = vpop.f32.mrb[0].mxu0
      %3719 = vmatprep.mubr.f32.mxu0 0.0
      %3720 = vmatmul.mubr.f32.gmra.mrb[0].mxu0 %v228
      %v3721 = vpop.f32.mrb[0].mxu0
      %v3722 = vadd.f32 1e-05, %v3721
      %v3723 = vpop.f32.mrb[0].mxu0
      %3724 = vmatprep.mubr.f32.mxu0 0.0
      %3725 = vmatmul.mubr.f32.gmra.mrb[0].mxu0 %v229
      %v3726 = vpop.f32.mrb[0].mxu0
      %v3727 = vadd.f32 1e-05, %v3726
      %v3728 = vpop.f32.mrb[0].mxu0
      %3729 = vmatprep.mubr.f32.mxu0 0.0
      %3730 = vmatmul.mubr.f32.gmra.mrb[0].mxu0 %v230
      %v3731 = vpop.f32.mrb[0].mxu0
      %v3732 = vadd.f32 1e-05, %v3731
      %v3733 = vpop.f32.mrb[0].mxu0
      %3734 = vmatprep.mubr.f32.mxu0 0.0
      %3735 = vmatmul.mubr.f32.gmra.mrb[0].mxu0 %v231
      %v3736 = vpop.f32.mrb[0].mxu0
      %v3737 = vadd.f32 1e-05, %v3736
      %v3738 = vpop.f32.mrb[0].mxu0
      %3739 = vmatprep.mubr.f32.mxu0 0.0
      %3740 = vmatmul.mubr.f32.gmra.mrb[0].mxu0 %v232
      %v3741 = vpop.f32.mrb[0].mxu0
      %v3742 = vadd.f32 1e-05, %v3741
      %v3743 = vpop.f32.mrb[0].mxu0
      %3744 = vdwg.mxu0
      %v3745 = vrsqrt.pop %v3667
      %v3746 = vrsqrt.pop %v3672
      %v3747 = vrsqrt.pop %v3677
      %v3748 = vrsqrt.pop %v3682
      %v3749 = vrsqrt.pop %v3687
      %v3750 = vrsqrt.pop %v3692
      %v3751 = vrsqrt.pop %v3697
      %v3752 = vrsqrt.pop %v3702
      %v3753 = vrsqrt.pop %v3707
      %v3754 = vrsqrt.pop %v3712
      %v3755 = vrsqrt.pop %v3717
      %v3756 = vrsqrt.pop %v3722
      %v3757 = vrsqrt.pop %v3727
      %v3758 = vrsqrt.pop %v3732
      %v3759 = vrsqrt.pop %v3737
      %v3760 = vrsqrt.pop %v3742
      %v3761 = vmul.f32 %v3566, %v3745
      %v3762 = vmul.f32 %v3567, %v3746
      %v3763 = vmul.f32 %v3568, %v3747
      %v3764 = vmul.f32 %v3569, %v3748
      %v3765 = vmul.f32 %v3570, %v3749
      %v3766 = vmul.f32 %v3571, %v3750
      %v3767 = vmul.f32 %v3572, %v3751
      %v3768 = vmul.f32 %v3573, %v3752
      %v3769 = vmul.f32 %v3574, %v3753
      %v3770 = vmul.f32 %v3575, %v3754
      %v3771 = vmul.f32 %v3576, %v3755
      %v3772 = vmul.f32 %v3577, %v3756
      %v3773 = vmul.f32 %v3578, %v3757
      %v3774 = vmul.f32 %v3579, %v3758
      %v3775 = vmul.f32 %v3580, %v3759
      %v3776 = vmul.f32 %v3581, %v3760
      %v3777 = vmul.f32 %v3761, %v3598
      %v3778 = vmul.f32 %v3762, %v3598
      %v3779 = vmul.f32 %v3763, %v3598
      %v3780 = vmul.f32 %v3764, %v3598
      %v3781 = vmul.f32 %v3765, %v3598
      %v3782 = vmul.f32 %v3766, %v3598
      %v3783 = vmul.f32 %v3767, %v3598
      %v3784 = vmul.f32 %v3768, %v3598
      %v3785 = vmul.f32 %v3769, %v3598
      %v3786 = vmul.f32 %v3770, %v3598
      %v3787 = vmul.f32 %v3771, %v3598
      %v3788 = vmul.f32 %v3772, %v3598
      %v3789 = vmul.f32 %v3773, %v3598
      %v3790 = vmul.f32 %v3774, %v3598
      %v3791 = vmul.f32 %v3775, %v3598
      %v3792 = vmul.f32 %v3776, %v3598
      %v3793 = vadd.f32 %v3777, %v3599
      %v3794 = vadd.f32 %v3778, %v3599
      %v3795 = vadd.f32 %v3779, %v3599
      %v3796 = vadd.f32 %v3780, %v3599
      %v3797 = vadd.f32 %v3781, %v3599
      %v3798 = vadd.f32 %v3782, %v3599
      %v3799 = vadd.f32 %v3783, %v3599
      %v3800 = vadd.f32 %v3784, %v3599
      %v3801 = vadd.f32 %v3785, %v3599
      %v3802 = vadd.f32 %v3786, %v3599
      %v3803 = vadd.f32 %v3787, %v3599
      %v3804 = vadd.f32 %v3788, %v3599
      %v3805 = vadd.f32 %v3789, %v3599
      %v3806 = vadd.f32 %v3790, %v3599
      %v3807 = vadd.f32 %v3791, %v3599
      %v3808 = vadd.f32 %v3792, %v3599
      %v3809 = vmul.f32 %v3793, 0.5
      %v3810 = vmul.f32 %v3794, 0.5
      %v3811 = vmul.f32 %v3795, 0.5
      %v3812 = vmul.f32 %v3796, 0.5
      %v3813 = vmul.f32 %v3797, 0.5
      %v3814 = vmul.f32 %v3798, 0.5
      %v3815 = vmul.f32 %v3799, 0.5
      %v3816 = vmul.f32 %v3800, 0.5
      %v3817 = vmul.f32 %v3801, 0.5
      %v3818 = vmul.f32 %v3802, 0.5
      %v3819 = vmul.f32 %v3803, 0.5
      %v3820 = vmul.f32 %v3804, 0.5
      %v3821 = vmul.f32 %v3805, 0.5
      %v3822 = vmul.f32 %v3806, 0.5
      %v3823 = vmul.f32 %v3807, 0.5
      %v3824 = vmul.f32 %v3808, 0.5
      %v3825 = vmul.f32 %v3793, 0.70710677
      %v3826 = vmul.f32 %v3794, 0.70710677
      %v3827 = vmul.f32 %v3795, 0.70710677
      %v3828 = vmul.f32 %v3796, 0.70710677
      %v3829 = vmul.f32 %v3797, 0.70710677
      %v3830 = vmul.f32 %v3798, 0.70710677
      %v3831 = vmul.f32 %v3799, 0.70710677
      %v3832 = vmul.f32 %v3800, 0.70710677
      %v3833 = vmul.f32 %v3801, 0.70710677
      %v3834 = vmul.f32 %v3802, 0.70710677
      %v3835 = vmul.f32 %v3803, 0.70710677
      %v3836 = vmul.f32 %v3804, 0.70710677
      %v3837 = vmul.f32 %v3805, 0.70710677
      %v3838 = vmul.f32 %v3806, 0.70710677
      %v3839 = vmul.f32 %v3807, 0.70710677
      %v3840 = vmul.f32 %v3808, 0.70710677
      %v3841 = verf.f32.pop %v3825
      %v3842 = verf.f32.pop %v3826
      %v3843 = verf.f32.pop %v3827
      %v3844 = verf.f32.pop %v3828
      %v3845 = verf.f32.pop %v3829
      %v3846 = verf.f32.pop %v3830
      %v3847 = verf.f32.pop %v3831
      %v3848 = verf.f32.pop %v3832
      %v3849 = verf.f32.pop %v3833
      %v3850 = verf.f32.pop %v3834
      %v3851 = verf.f32.pop %v3835
      %v3852 = verf.f32.pop %v3836
      %v3853 = verf.f32.pop %v3837
      %v3854 = verf.f32.pop %v3838
      %v3855 = verf.f32.pop %v3839
      %v3856 = verf.f32.pop %v3840
      %v3857 = vadd.f32 %v3841, 1.0
      %v3858 = vadd.f32 %v3842, 1.0
      %v3859 = vadd.f32 %v3843, 1.0
      %v3860 = vadd.f32 %v3844, 1.0
      %v3861 = vadd.f32 %v3845, 1.0
      %v3862 = vadd.f32 %v3846, 1.0
      %v3863 = vadd.f32 %v3847, 1.0
      %v3864 = vadd.f32 %v3848, 1.0
      %v3865 = vadd.f32 %v3849, 1.0
      %v3866 = vadd.f32 %v3850, 1.0
      %v3867 = vadd.f32 %v3851, 1.0
      %v3868 = vadd.f32 %v3852, 1.0
      %v3869 = vadd.f32 %v3853, 1.0
      %v3870 = vadd.f32 %v3854, 1.0
      %v3871 = vadd.f32 %v3855, 1.0
      %v3872 = vadd.f32 %v3856, 1.0
      %v3873 = vmul.f32 %v3809, %v3857
      %v3874 = vmul.f32 %v3810, %v3858
      %v3875 = vmul.f32 %v3811, %v3859
      %v3876 = vmul.f32 %v3812, %v3860
      %v3877 = vmul.f32 %v3813, %v3861
      %v3878 = vmul.f32 %v3814, %v3862
      %v3879 = vmul.f32 %v3815, %v3863
      %v3880 = vmul.f32 %v3816, %v3864
      %v3881 = vmul.f32 %v3817, %v3865
      %v3882 = vmul.f32 %v3818, %v3866
      %v3883 = vmul.f32 %v3819, %v3867
      %v3884 = vmul.f32 %v3820, %v3868
      %v3885 = vmul.f32 %v3821, %v3869
      %v3886 = vmul.f32 %v3822, %v3870
      %v3887 = vmul.f32 %v3823, %v3871
      %v3888 = vmul.f32 %v3824, %v3872
      %v3889 = vadd.f32 %v3873, %v3208
      %v3890 = vadd.f32 %v3874, %v3209
      %v3891 = vadd.f32 %v3875, %v3210
      %v3892 = vadd.f32 %v3876, %v3211
      %v3893 = vadd.f32 %v3877, %v3212
      %v3894 = vadd.f32 %v3878, %v3213
      %v3895 = vadd.f32 %v3879, %v3214
      %v3896 = vadd.f32 %v3880, %v3215
      %v3897 = vadd.f32 %v3881, %v3216
      %v3898 = vadd.f32 %v3882, %v3217
      %v3899 = vadd.f32 %v3883, %v3218
      %v3900 = vadd.f32 %v3884, %v3219
      %v3901 = vadd.f32 %v3885, %v3220
      %v3902 = vadd.f32 %v3886, %v3221
      %v3903 = vadd.f32 %v3887, %v3222
      %v3904 = vadd.f32 %v3888, %v3223
      %v3905 = vmul.f32 %v3889, 0.7072136
      %v3906 = vmul.f32 %v3890, 0.7072136
      %v3907 = vmul.f32 %v3891, 0.7072136
      %v3908 = vmul.f32 %v3892, 0.7072136
      %v3909 = vmul.f32 %v3893, 0.7072136
      %v3910 = vmul.f32 %v3894, 0.7072136
      %v3911 = vmul.f32 %v3895, 0.7072136
      %v3912 = vmul.f32 %v3896, 0.7072136
      %v3913 = vmul.f32 %v3897, 0.7072136
      %v3914 = vmul.f32 %v3898, 0.7072136
      %v3915 = vmul.f32 %v3899, 0.7072136
      %v3916 = vmul.f32 %v3900, 0.7072136
      %v3917 = vmul.f32 %v3901, 0.7072136
      %v3918 = vmul.f32 %v3902, 0.7072136
      %v3919 = vmul.f32 %v3903, 0.7072136
      %v3920 = vmul.f32 %v3904, 0.7072136
      %v3921 = vld [vmem:[%s1 + $0x200] sm:$0xff]
      %v3922 = vld [vmem:[%s1 + $0x210] sm:$0xff]
      %v3923 = vld [vmem:[%s1 + $0x220] sm:$0xff]
      %v3924 = vld [vmem:[%s1 + $0x230] sm:$0xff]
      %3941 = vrot.lane.b32.xlu0 %v373, 96
      %v3942 = vpop.permute.xlu0 %3941
      %3943 = vrot.lane.b32.xlu0 %v379, 96
      %v3944 = vpop.permute.xlu0 %3943
      %3945 = vrot.lane.b32.xlu0 %v385, 96
      %v3946 = vpop.permute.xlu0 %3945
      %3947 = vrot.lane.b32.xlu0 %v391, 96
      %v3948 = vpop.permute.xlu0 %3947
      %3949 = vrot.lane.b32.xlu0 %v397, 96
      %v3950 = vpop.permute.xlu0 %3949
      %3951 = vrot.lane.b32.xlu0 %v403, 96
      %v3952 = vpop.permute.xlu0 %3951
      %3953 = vrot.lane.b32.xlu0 %v409, 96
      %v3954 = vpop.permute.xlu0 %3953
      %3955 = vrot.lane.b32.xlu0 %v415, 96
      %v3956 = vpop.permute.xlu0 %3955
      %3957 = vrot.lane.b32.xlu0 %v421, 96
      %v3958 = vpop.permute.xlu0 %3957
      %3959 = vrot.lane.b32.xlu0 %v427, 96
      %v3960 = vpop.permute.xlu0 %3959
      %3961 = vrot.lane.b32.xlu0 %v433, 96
      %v3962 = vpop.permute.xlu0 %3961
      %3963 = vrot.lane.b32.xlu0 %v439, 96
      %v3964 = vpop.permute.xlu0 %3963
      %3965 = vrot.lane.b32.xlu0 %v445, 96
      %v3966 = vpop.permute.xlu0 %3965
      %3967 = vrot.lane.b32.xlu0 %v451, 96
      %v3968 = vpop.permute.xlu0 %3967
      %3969 = vrot.lane.b32.xlu0 %v457, 96
      %v3970 = vpop.permute.xlu0 %3969
      %3971 = vrot.lane.b32.xlu0 %v463, 96
      %v3972 = vpop.permute.xlu0 %3971
      %v3990 = vsel %vm255, %v3905, 0
      %v3993 = vsel %vm255, %v3906, 0
      %v3996 = vsel %vm255, %v3907, 0
      %v3999 = vsel %vm255, %v3908, 0
      %v4002 = vsel %vm255, %v3909, 0
      %v4005 = vsel %vm255, %v3910, 0
      %v4008 = vsel %vm255, %v3911, 0
      %v4011 = vsel %vm255, %v3912, 0
      %v4014 = vsel %vm255, %v3913, 0
      %v4017 = vsel %vm255, %v3914, 0
      %v4020 = vsel %vm255, %v3915, 0
      %v4023 = vsel %vm255, %v3916, 0
      %v4026 = vsel %vm255, %v3917, 0
      %v4029 = vsel %vm255, %v3918, 0
      %v4032 = vsel %vm255, %v3919, 0
      %v4035 = vsel %vm255, %v3920, 0
      %4037 = vmatprep.subr.mxu0 0.0
      %4038 = vmatpush1.msra.mxu0 %v3921
      %4039 = vmatprep.subr.mxu0 0.0
      %4040 = vmatpush1.msra.mxu0 %v3922
      %4041 = vmatprep.subr.mxu0 0.0
      %4042 = vmatpush1.msra.mxu0 %v3923
      %4043 = vmatprep.subr.mxu0 0.0
      %4044 = vmatpush1.msra.mxu0 %v3924
      %4045 = vmatprep.subr.mxu0 0.0
      %4046 = vmatpush1.msra.mxu0 0.0
      %4047 = vmatprep.subr.mxu0 0.0
      %4048 = vmatpush1.msra.mxu0 0.0
      %4049 = vmatprep.subr.mxu0 0.0
      %4050 = vmatpush1.msra.mxu0 0.0
      %4051 = vmatprep.subr.mxu0 0.0
      %4052 = vmatpush1.msra.mxu0 0.0
      %4053 = vmatprep.subr.mxu0 0.0
      %4054 = vmatpush1.msra.mxu0 0.0
      %4055 = vmatprep.subr.mxu0 0.0
      %4056 = vmatpush1.msra.mxu0 0.0
      %4057 = vmatprep.subr.mxu0 0.0
      %4058 = vmatpush1.msra.mxu0 0.0
      %4059 = vmatprep.subr.mxu0 0.0
      %4060 = vmatpush1.msra.mxu0 0.0
      %4061 = vmatprep.subr.mxu0 0.0
      %4062 = vmatpush1.msra.mxu0 0.0
      %4063 = vmatprep.subr.mxu0 0.0
      %4064 = vmatpush1.msra.mxu0 0.0
      %4065 = vmatprep.subr.mxu0 0.0
      %4066 = vmatpush1.msra.mxu0 0.0
      %4067 = vmatprep.subr.mxu0 0.0
      %4068 = vmatpush1.msra.mxu0 0.0
      %4069 = vmatprep.subr.mxu0 0.0
      %4070 = vmatpush1.msra.mxu0 0.0
      %4071 = vmatprep.subr.mxu0 0.0
      %4072 = vmatpush1.msra.mxu0 0.0
      %4073 = vmatprep.subr.mxu0 0.0
      %4074 = vmatpush1.msra.mxu0 0.0
      %4075 = vmatprep.subr.mxu0 0.0
      %4076 = vmatpush1.msra.mxu0 0.0
      %4077 = vmatprep.subr.mxu0 0.0
      %4078 = vmatpush1.msra.mxu0 0.0
      %4079 = vmatprep.subr.mxu0 0.0
      %4080 = vmatpush1.msra.mxu0 0.0
      %4081 = vmatprep.subr.mxu0 0.0
      %4082 = vmatpush1.msra.mxu0 0.0
      %4083 = vmatprep.subr.mxu0 0.0
      %4084 = vmatpush1.msra.mxu0 0.0
      %4085 = vmatprep.subr.mxu0 0.0
      %4086 = vmatpush1.msra.mxu0 0.0
      %4087 = vmatprep.subr.mxu0 0.0
      %4088 = vmatpush1.msra.mxu0 0.0
      %4089 = vmatprep.subr.mxu0 0.0
      %4090 = vmatpush1.msra.mxu0 0.0
      %4091 = vmatprep.subr.mxu0 0.0
      %4092 = vmatpush1.msra.mxu0 0.0
      %4093 = vmatprep.subr.mxu0 0.0
      %4094 = vmatpush1.msra.mxu0 0.0
      %4095 = vmatprep.subr.mxu0 0.0
      %4096 = vmatpush1.msra.mxu0 0.0
      %4097 = vmatprep.subr.mxu0 0.0
      %4098 = vmatpush1.msra.mxu0 0.0
      %4099 = vmatprep.subr.mxu0 0.0
      %4100 = vmatpush1.msra.mxu0 0.0
      %4101 = vmatprep.mubr.f32.mxu0 0.0
      %4102 = vmatmul.mubr.f32.gmra.mrb[0].mxu0 %v3990
      %v4103 = vpop.f32.mrb[0].mxu0
      %v4104 = vadd.f32 %v3942, %v4103
      %v4105 = vpop.f32.mrb[0].mxu0
      %4106 = vmatprep.mubr.f32.mxu0 0.0
      %4107 = vmatmul.mubr.f32.gmra.mrb[0].mxu0 %v3993
      %v4108 = vpop.f32.mrb[0].mxu0
      %v4109 = vadd.f32 %v3944, %v4108
      %v4110 = vpop.f32.mrb[0].mxu0
      %4111 = vmatprep.mubr.f32.mxu0 0.0
      %4112 = vmatmul.mubr.f32.gmra.mrb[0].mxu0 %v3996
      %v4113 = vpop.f32.mrb[0].mxu0
      %v4114 = vadd.f32 %v3946, %v4113
      %v4115 = vpop.f32.mrb[0].mxu0
      %4116 = vmatprep.mubr.f32.mxu0 0.0
      %4117 = vmatmul.mubr.f32.gmra.mrb[0].mxu0 %v3999
      %v4118 = vpop.f32.mrb[0].mxu0
      %v4119 = vadd.f32 %v3948, %v4118
      %v4120 = vpop.f32.mrb[0].mxu0
      %4121 = vmatprep.mubr.f32.mxu0 0.0
      %4122 = vmatmul.mubr.f32.gmra.mrb[0].mxu0 %v4002
      %v4123 = vpop.f32.mrb[0].mxu0
      %v4124 = vadd.f32 %v3950, %v4123
      %v4125 = vpop.f32.mrb[0].mxu0
      %4126 = vmatprep.mubr.f32.mxu0 0.0
      %4127 = vmatmul.mubr.f32.gmra.mrb[0].mxu0 %v4005
      %v4128 = vpop.f32.mrb[0].mxu0
      %v4129 = vadd.f32 %v3952, %v4128
      %v4130 = vpop.f32.mrb[0].mxu0
      %4131 = vmatprep.mubr.f32.mxu0 0.0
      %4132 = vmatmul.mubr.f32.gmra.mrb[0].mxu0 %v4008
      %v4133 = vpop.f32.mrb[0].mxu0
      %v4134 = vadd.f32 %v3954, %v4133
      %v4135 = vpop.f32.mrb[0].mxu0
      %4136 = vmatprep.mubr.f32.mxu0 0.0
      %4137 = vmatmul.mubr.f32.gmra.mrb[0].mxu0 %v4011
      %v4138 = vpop.f32.mrb[0].mxu0
      %v4139 = vadd.f32 %v3956, %v4138
      %v4140 = vpop.f32.mrb[0].mxu0
      %4141 = vmatprep.mubr.f32.mxu0 0.0
      %4142 = vmatmul.mubr.f32.gmra.mrb[0].mxu0 %v4014
      %v4143 = vpop.f32.mrb[0].mxu0
      %v4144 = vadd.f32 %v3958, %v4143
      %v4145 = vpop.f32.mrb[0].mxu0
      %4146 = vmatprep.mubr.f32.mxu0 0.0
      %4147 = vmatmul.mubr.f32.gmra.mrb[0].mxu0 %v4017
      %v4148 = vpop.f32.mrb[0].mxu0
      %v4149 = vadd.f32 %v3960, %v4148
      %v4150 = vpop.f32.mrb[0].mxu0
      %4151 = vmatprep.mubr.f32.mxu0 0.0
      %4152 = vmatmul.mubr.f32.gmra.mrb[0].mxu0 %v4020
      %v4153 = vpop.f32.mrb[0].mxu0
      %v4154 = vadd.f32 %v3962, %v4153
      %v4155 = vpop.f32.mrb[0].mxu0
      %4156 = vmatprep.mubr.f32.mxu0 0.0
      %4157 = vmatmul.mubr.f32.gmra.mrb[0].mxu0 %v4023
      %v4158 = vpop.f32.mrb[0].mxu0
      %v4159 = vadd.f32 %v3964, %v4158
      %v4160 = vpop.f32.mrb[0].mxu0
      %4161 = vmatprep.mubr.f32.mxu0 0.0
      %4162 = vmatmul.mubr.f32.gmra.mrb[0].mxu0 %v4026
      %v4163 = vpop.f32.mrb[0].mxu0
      %v4164 = vadd.f32 %v3966, %v4163
      %v4165 = vpop.f32.mrb[0].mxu0
      %4166 = vmatprep.mubr.f32.mxu0 0.0
      %4167 = vmatmul.mubr.f32.gmra.mrb[0].mxu0 %v4029
      %v4168 = vpop.f32.mrb[0].mxu0
      %v4169 = vadd.f32 %v3968, %v4168
      %v4170 = vpop.f32.mrb[0].mxu0
      %4171 = vmatprep.mubr.f32.mxu0 0.0
      %4172 = vmatmul.mubr.f32.gmra.mrb[0].mxu0 %v4032
      %v4173 = vpop.f32.mrb[0].mxu0
      %v4174 = vadd.f32 %v3970, %v4173
      %v4175 = vpop.f32.mrb[0].mxu0
      %4176 = vmatprep.mubr.f32.mxu0 0.0
      %4177 = vmatmul.mubr.f32.gmra.mrb[0].mxu0 %v4035
      %v4178 = vpop.f32.mrb[0].mxu0
      %v4179 = vadd.f32 %v3972, %v4178
      %v4180 = vpop.f32.mrb[0].mxu0
      %4181 = vdwg.mxu0
      %4182 = vmatprep.subr.mxu0 0.0
      %4183 = vmatpush1.msra.mxu0 %v4104
      %4184 = vmatprep.subr.mxu0 0.0
      %4185 = vmatpush1.msra.mxu0 %v4109
      %4186 = vmatprep.subr.mxu0 0.0
      %4187 = vmatpush1.msra.mxu0 %v4114
      %4188 = vmatprep.subr.mxu0 0.0
      %4189 = vmatpush1.msra.mxu0 %v4119
      %4190 = vmatprep.subr.mxu0 0.0
      %4191 = vmatpush1.msra.mxu0 %v4124
      %4192 = vmatprep.subr.mxu0 0.0
      %4193 = vmatpush1.msra.mxu0 %v4129
      %4194 = vmatprep.subr.mxu0 0.0
      %4195 = vmatpush1.msra.mxu0 %v4134
      %4196 = vmatprep.subr.mxu0 0.0
      %4197 = vmatpush1.msra.mxu0 %v4139
      %4198 = vmatprep.subr.mxu0 0.0
      %4199 = vmatpush1.msra.mxu0 %v4144
      %4200 = vmatprep.subr.mxu0 0.0
      %4201 = vmatpush1.msra.mxu0 %v4149
      %4202 = vmatprep.subr.mxu0 0.0
      %4203 = vmatpush1.msra.mxu0 %v4154
      %4204 = vmatprep.subr.mxu0 0.0
      %4205 = vmatpush1.msra.mxu0 %v4159
      %4206 = vmatprep.subr.mxu0 0.0
      %4207 = vmatpush1.msra.mxu0 %v4164
      %4208 = vmatprep.subr.mxu0 0.0
      %4209 = vmatpush1.msra.mxu0 %v4169
      %4210 = vmatprep.subr.mxu0 0.0
      %4211 = vmatpush1.msra.mxu0 %v4174
      %4212 = vmatprep.subr.mxu0 0.0
      %4213 = vmatpush1.msra.mxu0 %v4179
      %4214 = vmatprep.subr.mxu0 0.0
      %4215 = vmatpush1.msra.mxu0 0.0
      %4216 = vmatprep.subr.mxu0 0.0
      %4217 = vmatpush1.msra.mxu0 0.0
      %4218 = vmatprep.subr.mxu0 0.0
      %4219 = vmatpush1.msra.mxu0 0.0
      %4220 = vmatprep.subr.mxu0 0.0
      %4221 = vmatpush1.msra.mxu0 0.0
      %4222 = vmatprep.subr.mxu0 0.0
      %4223 = vmatpush1.msra.mxu0 0.0
      %4224 = vmatprep.subr.mxu0 0.0
      %4225 = vmatpush1.msra.mxu0 0.0
      %4226 = vmatprep.subr.mxu0 0.0
      %4227 = vmatpush1.msra.mxu0 0.0
      %4228 = vmatprep.subr.mxu0 0.0
      %4229 = vmatpush1.msra.mxu0 0.0
      %4230 = vmatprep.subr.mxu0 0.0
      %4231 = vmatpush1.msra.mxu0 0.0
      %4232 = vmatprep.subr.mxu0 0.0
      %4233 = vmatpush1.msra.mxu0 0.0
      %4234 = vmatprep.subr.mxu0 0.0
      %4235 = vmatpush1.msra.mxu0 0.0
      %4236 = vmatprep.subr.mxu0 0.0
      %4237 = vmatpush1.msra.mxu0 0.0
      %4238 = vmatprep.subr.mxu0 0.0
      %4239 = vmatpush1.msra.mxu0 0.0
      %4240 = vmatprep.subr.mxu0 0.0
      %4241 = vmatpush1.msra.mxu0 0.0
      %4242 = vmatprep.subr.mxu0 0.0
      %4243 = vmatpush1.msra.mxu0 0.0
      %4244 = vmatprep.subr.mxu0 0.0
      %4245 = vmatpush1.msra.mxu0 0.0
      %4246 = vmatprep.mubr.f32.mxu0 0.0
      %4247 = vmatmul.mubr.f32.gmra.mrb[0].mxu0 %v217
      %v4248 = vpop.f32.mrb[0].mxu0
      %v4249 = vadd.f32 0.0, %v4248
      %v4250 = vpop.f32.mrb[0].mxu0
      %4251 = vmatprep.mubr.f32.mxu0 0.0
      %4252 = vmatmul.mubr.f32.gmra.mrb[0].mxu0 %v218
      %v4253 = vpop.f32.mrb[0].mxu0
      %v4254 = vadd.f32 0.0, %v4253
      %v4255 = vpop.f32.mrb[0].mxu0
      %4256 = vmatprep.mubr.f32.mxu0 0.0
      %4257 = vmatmul.mubr.f32.gmra.mrb[0].mxu0 %v219
      %v4258 = vpop.f32.mrb[0].mxu0
      %v4259 = vadd.f32 0.0, %v4258
      %v4260 = vpop.f32.mrb[0].mxu0
      %4261 = vmatprep.mubr.f32.mxu0 0.0
      %4262 = vmatmul.mubr.f32.gmra.mrb[0].mxu0 %v220
      %v4263 = vpop.f32.mrb[0].mxu0
      %v4264 = vadd.f32 0.0, %v4263
      %v4265 = vpop.f32.mrb[0].mxu0
      %4266 = vmatprep.mubr.f32.mxu0 0.0
      %4267 = vmatmul.mubr.f32.gmra.mrb[0].mxu0 %v221
      %v4268 = vpop.f32.mrb[0].mxu0
      %v4269 = vadd.f32 0.0, %v4268
      %v4270 = vpop.f32.mrb[0].mxu0
      %4271 = vmatprep.mubr.f32.mxu0 0.0
      %4272 = vmatmul.mubr.f32.gmra.mrb[0].mxu0 %v222
      %v4273 = vpop.f32.mrb[0].mxu0
      %v4274 = vadd.f32 0.0, %v4273
      %v4275 = vpop.f32.mrb[0].mxu0
      %4276 = vmatprep.mubr.f32.mxu0 0.0
      %4277 = vmatmul.mubr.f32.gmra.mrb[0].mxu0 %v223
      %v4278 = vpop.f32.mrb[0].mxu0
      %v4279 = vadd.f32 0.0, %v4278
      %v4280 = vpop.f32.mrb[0].mxu0
      %4281 = vmatprep.mubr.f32.mxu0 0.0
      %4282 = vmatmul.mubr.f32.gmra.mrb[0].mxu0 %v224
      %v4283 = vpop.f32.mrb[0].mxu0
      %v4284 = vadd.f32 0.0, %v4283
      %v4285 = vpop.f32.mrb[0].mxu0
      %4286 = vmatprep.mubr.f32.mxu0 0.0
      %4287 = vmatmul.mubr.f32.gmra.mrb[0].mxu0 %v225
      %v4288 = vpop.f32.mrb[0].mxu0
      %v4289 = vadd.f32 0.0, %v4288
      %v4290 = vpop.f32.mrb[0].mxu0
      %4291 = vmatprep.mubr.f32.mxu0 0.0
      %4292 = vmatmul.mubr.f32.gmra.mrb[0].mxu0 %v226
      %v4293 = vpop.f32.mrb[0].mxu0
      %v4294 = vadd.f32 0.0, %v4293
      %v4295 = vpop.f32.mrb[0].mxu0
      %4296 = vmatprep.mubr.f32.mxu0 0.0
      %4297 = vmatmul.mubr.f32.gmra.mrb[0].mxu0 %v227
      %v4298 = vpop.f32.mrb[0].mxu0
      %v4299 = vadd.f32 0.0, %v4298
      %v4300 = vpop.f32.mrb[0].mxu0
      %4301 = vmatprep.mubr.f32.mxu0 0.0
      %4302 = vmatmul.mubr.f32.gmra.mrb[0].mxu0 %v228
      %v4303 = vpop.f32.mrb[0].mxu0
      %v4304 = vadd.f32 0.0, %v4303
      %v4305 = vpop.f32.mrb[0].mxu0
      %4306 = vmatprep.mubr.f32.mxu0 0.0
      %4307 = vmatmul.mubr.f32.gmra.mrb[0].mxu0 %v229
      %v4308 = vpop.f32.mrb[0].mxu0
      %v4309 = vadd.f32 0.0, %v4308
      %v4310 = vpop.f32.mrb[0].mxu0
      %4311 = vmatprep.mubr.f32.mxu0 0.0
      %4312 = vmatmul.mubr.f32.gmra.mrb[0].mxu0 %v230
      %v4313 = vpop.f32.mrb[0].mxu0
      %v4314 = vadd.f32 0.0, %v4313
      %v4315 = vpop.f32.mrb[0].mxu0
      %4316 = vmatprep.mubr.f32.mxu0 0.0
      %4317 = vmatmul.mubr.f32.gmra.mrb[0].mxu0 %v231
      %v4318 = vpop.f32.mrb[0].mxu0
      %v4319 = vadd.f32 0.0, %v4318
      %v4320 = vpop.f32.mrb[0].mxu0
      %4321 = vmatprep.mubr.f32.mxu0 0.0
      %4322 = vmatmul.mubr.f32.gmra.mrb[0].mxu0 %v232
      %v4323 = vpop.f32.mrb[0].mxu0
      %v4324 = vadd.f32 0.0, %v4323
      %v4325 = vpop.f32.mrb[0].mxu0
      %4326 = vdwg.mxu0
      %v4327 = vsub.f32 %v4104, %v4249
      %v4328 = vsub.f32 %v4109, %v4254
      %v4329 = vsub.f32 %v4114, %v4259
      %v4330 = vsub.f32 %v4119, %v4264
      %v4331 = vsub.f32 %v4124, %v4269
      %v4332 = vsub.f32 %v4129, %v4274
      %v4333 = vsub.f32 %v4134, %v4279
      %v4334 = vsub.f32 %v4139, %v4284
      %v4335 = vsub.f32 %v4144, %v4289
      %v4336 = vsub.f32 %v4149, %v4294
      %v4337 = vsub.f32 %v4154, %v4299
      %v4338 = vsub.f32 %v4159, %v4304
      %v4339 = vsub.f32 %v4164, %v4309
      %v4340 = vsub.f32 %v4169, %v4314
      %v4341 = vsub.f32 %v4174, %v4319
      %v4342 = vsub.f32 %v4179, %v4324
      %v4343 = vmul.f32 %v4327, %v4327
      %v4344 = vmul.f32 %v4328, %v4328
      %v4345 = vmul.f32 %v4329, %v4329
      %v4346 = vmul.f32 %v4330, %v4330
      %v4347 = vmul.f32 %v4331, %v4331
      %v4348 = vmul.f32 %v4332, %v4332
      %v4349 = vmul.f32 %v4333, %v4333
      %v4350 = vmul.f32 %v4334, %v4334
      %v4351 = vmul.f32 %v4335, %v4335
      %v4352 = vmul.f32 %v4336, %v4336
      %v4353 = vmul.f32 %v4337, %v4337
      %v4354 = vmul.f32 %v4338, %v4338
      %v4355 = vmul.f32 %v4339, %v4339
      %v4356 = vmul.f32 %v4340, %v4340
      %v4357 = vmul.f32 %v4341, %v4341
      %v4358 = vmul.f32 %v4342, %v4342
      %v4359 = vld [vmem:[%s2 + $0x7] ss:$0 sm:$0xff]
      %v4360 = vld [vmem:[%s2 + $0x10] ss:$0 sm:$0xff]
      %4361 = vmatprep.subr.mxu0 0.0
      %4362 = vmatpush1.msra.mxu0 %v4343
      %4363 = vmatprep.subr.mxu0 0.0
      %4364 = vmatpush1.msra.mxu0 %v4344
      %4365 = vmatprep.subr.mxu0 0.0
      %4366 = vmatpush1.msra.mxu0 %v4345
      %4367 = vmatprep.subr.mxu0 0.0
      %4368 = vmatpush1.msra.mxu0 %v4346
      %4369 = vmatprep.subr.mxu0 0.0
      %4370 = vmatpush1.msra.mxu0 %v4347
      %4371 = vmatprep.subr.mxu0 0.0
      %4372 = vmatpush1.msra.mxu0 %v4348
      %4373 = vmatprep.subr.mxu0 0.0
      %4374 = vmatpush1.msra.mxu0 %v4349
      %4375 = vmatprep.subr.mxu0 0.0
      %4376 = vmatpush1.msra.mxu0 %v4350
      %4377 = vmatprep.subr.mxu0 0.0
      %4378 = vmatpush1.msra.mxu0 %v4351
      %4379 = vmatprep.subr.mxu0 0.0
      %4380 = vmatpush1.msra.mxu0 %v4352
      %4381 = vmatprep.subr.mxu0 0.0
      %4382 = vmatpush1.msra.mxu0 %v4353
      %4383 = vmatprep.subr.mxu0 0.0
      %4384 = vmatpush1.msra.mxu0 %v4354
      %4385 = vmatprep.subr.mxu0 0.0
      %4386 = vmatpush1.msra.mxu0 %v4355
      %4387 = vmatprep.subr.mxu0 0.0
      %4388 = vmatpush1.msra.mxu0 %v4356
      %4389 = vmatprep.subr.mxu0 0.0
      %4390 = vmatpush1.msra.mxu0 %v4357
      %4391 = vmatprep.subr.mxu0 0.0
      %4392 = vmatpush1.msra.mxu0 %v4358
      %4393 = vmatprep.subr.mxu0 0.0
      %4394 = vmatpush1.msra.mxu0 0.0
      %4395 = vmatprep.subr.mxu0 0.0
      %4396 = vmatpush1.msra.mxu0 0.0
      %4397 = vmatprep.subr.mxu0 0.0
      %4398 = vmatpush1.msra.mxu0 0.0
      %4399 = vmatprep.subr.mxu0 0.0
      %4400 = vmatpush1.msra.mxu0 0.0
      %4401 = vmatprep.subr.mxu0 0.0
      %4402 = vmatpush1.msra.mxu0 0.0
      %4403 = vmatprep.subr.mxu0 0.0
      %4404 = vmatpush1.msra.mxu0 0.0
      %4405 = vmatprep.subr.mxu0 0.0
      %4406 = vmatpush1.msra.mxu0 0.0
      %4407 = vmatprep.subr.mxu0 0.0
      %4408 = vmatpush1.msra.mxu0 0.0
      %4409 = vmatprep.subr.mxu0 0.0
      %4410 = vmatpush1.msra.mxu0 0.0
      %4411 = vmatprep.subr.mxu0 0.0
      %4412 = vmatpush1.msra.mxu0 0.0
      %4413 = vmatprep.subr.mxu0 0.0
      %4414 = vmatpush1.msra.mxu0 0.0
      %4415 = vmatprep.subr.mxu0 0.0
      %4416 = vmatpush1.msra.mxu0 0.0
      %4417 = vmatprep.subr.mxu0 0.0
      %4418 = vmatpush1.msra.mxu0 0.0
      %4419 = vmatprep.subr.mxu0 0.0
      %4420 = vmatpush1.msra.mxu0 0.0
      %4421 = vmatprep.subr.mxu0 0.0
      %4422 = vmatpush1.msra.mxu0 0.0
      %4423 = vmatprep.subr.mxu0 0.0
      %4424 = vmatpush1.msra.mxu0 0.0
      %4425 = vmatprep.mubr.f32.mxu0 0.0
      %4426 = vmatmul.mubr.f32.gmra.mrb[0].mxu0 %v217
      %v4427 = vpop.f32.mrb[0].mxu0
      %v4428 = vadd.f32 1e-05, %v4427
      %v4429 = vpop.f32.mrb[0].mxu0
      %4430 = vmatprep.mubr.f32.mxu0 0.0
      %4431 = vmatmul.mubr.f32.gmra.mrb[0].mxu0 %v218
      %v4432 = vpop.f32.mrb[0].mxu0
      %v4433 = vadd.f32 1e-05, %v4432
      %v4434 = vpop.f32.mrb[0].mxu0
      %4435 = vmatprep.mubr.f32.mxu0 0.0
      %4436 = vmatmul.mubr.f32.gmra.mrb[0].mxu0 %v219
      %v4437 = vpop.f32.mrb[0].mxu0
      %v4438 = vadd.f32 1e-05, %v4437
      %v4439 = vpop.f32.mrb[0].mxu0
      %4440 = vmatprep.mubr.f32.mxu0 0.0
      %4441 = vmatmul.mubr.f32.gmra.mrb[0].mxu0 %v220
      %v4442 = vpop.f32.mrb[0].mxu0
      %v4443 = vadd.f32 1e-05, %v4442
      %v4444 = vpop.f32.mrb[0].mxu0
      %4445 = vmatprep.mubr.f32.mxu0 0.0
      %4446 = vmatmul.mubr.f32.gmra.mrb[0].mxu0 %v221
      %v4447 = vpop.f32.mrb[0].mxu0
      %v4448 = vadd.f32 1e-05, %v4447
      %v4449 = vpop.f32.mrb[0].mxu0
      %4450 = vmatprep.mubr.f32.mxu0 0.0
      %4451 = vmatmul.mubr.f32.gmra.mrb[0].mxu0 %v222
      %v4452 = vpop.f32.mrb[0].mxu0
      %v4453 = vadd.f32 1e-05, %v4452
      %v4454 = vpop.f32.mrb[0].mxu0
      %4455 = vmatprep.mubr.f32.mxu0 0.0
      %4456 = vmatmul.mubr.f32.gmra.mrb[0].mxu0 %v223
      %v4457 = vpop.f32.mrb[0].mxu0
      %v4458 = vadd.f32 1e-05, %v4457
      %v4459 = vpop.f32.mrb[0].mxu0
      %4460 = vmatprep.mubr.f32.mxu0 0.0
      %4461 = vmatmul.mubr.f32.gmra.mrb[0].mxu0 %v224
      %v4462 = vpop.f32.mrb[0].mxu0
      %v4463 = vadd.f32 1e-05, %v4462
      %v4464 = vpop.f32.mrb[0].mxu0
      %4465 = vmatprep.mubr.f32.mxu0 0.0
      %4466 = vmatmul.mubr.f32.gmra.mrb[0].mxu0 %v225
      %v4467 = vpop.f32.mrb[0].mxu0
      %v4468 = vadd.f32 1e-05, %v4467
      %v4469 = vpop.f32.mrb[0].mxu0
      %4470 = vmatprep.mubr.f32.mxu0 0.0
      %4471 = vmatmul.mubr.f32.gmra.mrb[0].mxu0 %v226
      %v4472 = vpop.f32.mrb[0].mxu0
      %v4473 = vadd.f32 1e-05, %v4472
      %v4474 = vpop.f32.mrb[0].mxu0
      %4475 = vmatprep.mubr.f32.mxu0 0.0
      %4476 = vmatmul.mubr.f32.gmra.mrb[0].mxu0 %v227
      %v4477 = vpop.f32.mrb[0].mxu0
      %v4478 = vadd.f32 1e-05, %v4477
      %v4479 = vpop.f32.mrb[0].mxu0
      %4480 = vmatprep.mubr.f32.mxu0 0.0
      %4481 = vmatmul.mubr.f32.gmra.mrb[0].mxu0 %v228
      %v4482 = vpop.f32.mrb[0].mxu0
      %v4483 = vadd.f32 1e-05, %v4482
      %v4484 = vpop.f32.mrb[0].mxu0
      %4485 = vmatprep.mubr.f32.mxu0 0.0
      %4486 = vmatmul.mubr.f32.gmra.mrb[0].mxu0 %v229
      %v4487 = vpop.f32.mrb[0].mxu0
      %v4488 = vadd.f32 1e-05, %v4487
      %v4489 = vpop.f32.mrb[0].mxu0
      %4490 = vmatprep.mubr.f32.mxu0 0.0
      %4491 = vmatmul.mubr.f32.gmra.mrb[0].mxu0 %v230
      %v4492 = vpop.f32.mrb[0].mxu0
      %v4493 = vadd.f32 1e-05, %v4492
      %v4494 = vpop.f32.mrb[0].mxu0
      %4495 = vmatprep.mubr.f32.mxu0 0.0
      %4496 = vmatmul.mubr.f32.gmra.mrb[0].mxu0 %v231
      %v4497 = vpop.f32.mrb[0].mxu0
      %v4498 = vadd.f32 1e-05, %v4497
      %v4499 = vpop.f32.mrb[0].mxu0
      %4500 = vmatprep.mubr.f32.mxu0 0.0
      %4501 = vmatmul.mubr.f32.gmra.mrb[0].mxu0 %v232
      %v4502 = vpop.f32.mrb[0].mxu0
      %v4503 = vadd.f32 1e-05, %v4502
      %v4504 = vpop.f32.mrb[0].mxu0
      %4505 = vdwg.mxu0
      %v4506 = vrsqrt.pop %v4428
      %v4507 = vrsqrt.pop %v4433
      %v4508 = vrsqrt.pop %v4438
      %v4509 = vrsqrt.pop %v4443
      %v4510 = vrsqrt.pop %v4448
      %v4511 = vrsqrt.pop %v4453
      %v4512 = vrsqrt.pop %v4458
      %v4513 = vrsqrt.pop %v4463
      %v4514 = vrsqrt.pop %v4468
      %v4515 = vrsqrt.pop %v4473
      %v4516 = vrsqrt.pop %v4478
      %v4517 = vrsqrt.pop %v4483
      %v4518 = vrsqrt.pop %v4488
      %v4519 = vrsqrt.pop %v4493
      %v4520 = vrsqrt.pop %v4498
      %v4521 = vrsqrt.pop %v4503
      %v4522 = vmul.f32 %v4327, %v4506
      %v4523 = vmul.f32 %v4328, %v4507
      %v4524 = vmul.f32 %v4329, %v4508
      %v4525 = vmul.f32 %v4330, %v4509
      %v4526 = vmul.f32 %v4331, %v4510
      %v4527 = vmul.f32 %v4332, %v4511
      %v4528 = vmul.f32 %v4333, %v4512
      %v4529 = vmul.f32 %v4334, %v4513
      %v4530 = vmul.f32 %v4335, %v4514
      %v4531 = vmul.f32 %v4336, %v4515
      %v4532 = vmul.f32 %v4337, %v4516
      %v4533 = vmul.f32 %v4338, %v4517
      %v4534 = vmul.f32 %v4339, %v4518
      %v4535 = vmul.f32 %v4340, %v4519
      %v4536 = vmul.f32 %v4341, %v4520
      %v4537 = vmul.f32 %v4342, %v4521
      %v4538 = vmul.f32 %v4522, %v4359
      %v4539 = vmul.f32 %v4523, %v4359
      %v4540 = vmul.f32 %v4524, %v4359
      %v4541 = vmul.f32 %v4525, %v4359
      %v4542 = vmul.f32 %v4526, %v4359
      %v4543 = vmul.f32 %v4527, %v4359
      %v4544 = vmul.f32 %v4528, %v4359
      %v4545 = vmul.f32 %v4529, %v4359
      %v4546 = vmul.f32 %v4530, %v4359
      %v4547 = vmul.f32 %v4531, %v4359
      %v4548 = vmul.f32 %v4532, %v4359
      %v4549 = vmul.f32 %v4533, %v4359
      %v4550 = vmul.f32 %v4534, %v4359
      %v4551 = vmul.f32 %v4535, %v4359
      %v4552 = vmul.f32 %v4536, %v4359
      %v4553 = vmul.f32 %v4537, %v4359
      %v4554 = vadd.f32 %v4538, %v4360
      %v4555 = vadd.f32 %v4539, %v4360
      %v4556 = vadd.f32 %v4540, %v4360
      %v4557 = vadd.f32 %v4541, %v4360
      %v4558 = vadd.f32 %v4542, %v4360
      %v4559 = vadd.f32 %v4543, %v4360
      %v4560 = vadd.f32 %v4544, %v4360
      %v4561 = vadd.f32 %v4545, %v4360
      %v4562 = vadd.f32 %v4546, %v4360
      %v4563 = vadd.f32 %v4547, %v4360
      %v4564 = vadd.f32 %v4548, %v4360
      %v4565 = vadd.f32 %v4549, %v4360
      %v4566 = vadd.f32 %v4550, %v4360
      %v4567 = vadd.f32 %v4551, %v4360
      %v4568 = vadd.f32 %v4552, %v4360
      %v4569 = vadd.f32 %v4553, %v4360
      %v4570 = vmul.f32 %v4554, 0.5
      %v4571 = vmul.f32 %v4555, 0.5
      %v4572 = vmul.f32 %v4556, 0.5
      %v4573 = vmul.f32 %v4557, 0.5
      %v4574 = vmul.f32 %v4558, 0.5
      %v4575 = vmul.f32 %v4559, 0.5
      %v4576 = vmul.f32 %v4560, 0.5
      %v4577 = vmul.f32 %v4561, 0.5
      %v4578 = vmul.f32 %v4562, 0.5
      %v4579 = vmul.f32 %v4563, 0.5
      %v4580 = vmul.f32 %v4564, 0.5
      %v4581 = vmul.f32 %v4565, 0.5
      %v4582 = vmul.f32 %v4566, 0.5
      %v4583 = vmul.f32 %v4567, 0.5
      %v4584 = vmul.f32 %v4568, 0.5
      %v4585 = vmul.f32 %v4569, 0.5
      %v4586 = vmul.f32 %v4554, 0.70710677
      %v4587 = vmul.f32 %v4555, 0.70710677
      %v4588 = vmul.f32 %v4556, 0.70710677
      %v4589 = vmul.f32 %v4557, 0.70710677
      %v4590 = vmul.f32 %v4558, 0.70710677
      %v4591 = vmul.f32 %v4559, 0.70710677
      %v4592 = vmul.f32 %v4560, 0.70710677
      %v4593 = vmul.f32 %v4561, 0.70710677
      %v4594 = vmul.f32 %v4562, 0.70710677
      %v4595 = vmul.f32 %v4563, 0.70710677
      %v4596 = vmul.f32 %v4564, 0.70710677
      %v4597 = vmul.f32 %v4565, 0.70710677
      %v4598 = vmul.f32 %v4566, 0.70710677
      %v4599 = vmul.f32 %v4567, 0.70710677
      %v4600 = vmul.f32 %v4568, 0.70710677
      %v4601 = vmul.f32 %v4569, 0.70710677
      %v4602 = verf.f32.pop %v4586
      %v4603 = verf.f32.pop %v4587
      %v4604 = verf.f32.pop %v4588
      %v4605 = verf.f32.pop %v4589
      %v4606 = verf.f32.pop %v4590
      %v4607 = verf.f32.pop %v4591
      %v4608 = verf.f32.pop %v4592
      %v4609 = verf.f32.pop %v4593
      %v4610 = verf.f32.pop %v4594
      %v4611 = verf.f32.pop %v4595
      %v4612 = verf.f32.pop %v4596
      %v4613 = verf.f32.pop %v4597
      %v4614 = verf.f32.pop %v4598
      %v4615 = verf.f32.pop %v4599
      %v4616 = verf.f32.pop %v4600
      %v4617 = verf.f32.pop %v4601
      %v4618 = vadd.f32 %v4602, 1.0
      %v4619 = vadd.f32 %v4603, 1.0
      %v4620 = vadd.f32 %v4604, 1.0
      %v4621 = vadd.f32 %v4605, 1.0
      %v4622 = vadd.f32 %v4606, 1.0
      %v4623 = vadd.f32 %v4607, 1.0
      %v4624 = vadd.f32 %v4608, 1.0
      %v4625 = vadd.f32 %v4609, 1.0
      %v4626 = vadd.f32 %v4610, 1.0
      %v4627 = vadd.f32 %v4611, 1.0
      %v4628 = vadd.f32 %v4612, 1.0
      %v4629 = vadd.f32 %v4613, 1.0
      %v4630 = vadd.f32 %v4614, 1.0
      %v4631 = vadd.f32 %v4615, 1.0
      %v4632 = vadd.f32 %v4616, 1.0
      %v4633 = vadd.f32 %v4617, 1.0
      %v4634 = vmul.f32 %v4570, %v4618
      %v4635 = vmul.f32 %v4571, %v4619
      %v4636 = vmul.f32 %v4572, %v4620
      %v4637 = vmul.f32 %v4573, %v4621
      %v4638 = vmul.f32 %v4574, %v4622
      %v4639 = vmul.f32 %v4575, %v4623
      %v4640 = vmul.f32 %v4576, %v4624
      %v4641 = vmul.f32 %v4577, %v4625
      %v4642 = vmul.f32 %v4578, %v4626
      %v4643 = vmul.f32 %v4579, %v4627
      %v4644 = vmul.f32 %v4580, %v4628
      %v4645 = vmul.f32 %v4581, %v4629
      %v4646 = vmul.f32 %v4582, %v4630
      %v4647 = vmul.f32 %v4583, %v4631
      %v4648 = vmul.f32 %v4584, %v4632
      %v4649 = vmul.f32 %v4585, %v4633
      %v4650 = vadd.f32 %v4634, %v3905
      %v4651 = vadd.f32 %v4635, %v3906
      %v4652 = vadd.f32 %v4636, %v3907
      %v4653 = vadd.f32 %v4637, %v3908
      %v4654 = vadd.f32 %v4638, %v3909
      %v4655 = vadd.f32 %v4639, %v3910
      %v4656 = vadd.f32 %v4640, %v3911
      %v4657 = vadd.f32 %v4641, %v3912
      %v4658 = vadd.f32 %v4642, %v3913
      %v4659 = vadd.f32 %v4643, %v3914
      %v4660 = vadd.f32 %v4644, %v3915
      %v4661 = vadd.f32 %v4645, %v3916
      %v4662 = vadd.f32 %v4646, %v3917
      %v4663 = vadd.f32 %v4647, %v3918
      %v4664 = vadd.f32 %v4648, %v3919
      %v4665 = vadd.f32 %v4649, %v3920
      %v4666 = vld [vmem:[%s1 + $0x240] sm:$0xff]
      %v4667 = vld [vmem:[%s1 + $0x250] sm:$0xff]
      %v4668 = vld [vmem:[%s1 + $0x260] sm:$0xff]
      %v4669 = vld [vmem:[%s1 + $0x270] sm:$0xff]
      %4670 = vrot.lane.b32.xlu0 %v373, 64
      %v4671 = vpop.permute.xlu0 %4670
      %4672 = vrot.lane.b32.xlu0 %v379, 64
      %v4673 = vpop.permute.xlu0 %4672
      %4674 = vrot.lane.b32.xlu0 %v385, 64
      %v4675 = vpop.permute.xlu0 %4674
      %4676 = vrot.lane.b32.xlu0 %v391, 64
      %v4677 = vpop.permute.xlu0 %4676
      %4678 = vrot.lane.b32.xlu0 %v397, 64
      %v4679 = vpop.permute.xlu0 %4678
      %4680 = vrot.lane.b32.xlu0 %v403, 64
      %v4681 = vpop.permute.xlu0 %4680
      %4682 = vrot.lane.b32.xlu0 %v409, 64
      %v4683 = vpop.permute.xlu0 %4682
      %4684 = vrot.lane.b32.xlu0 %v415, 64
      %v4685 = vpop.permute.xlu0 %4684
      %4686 = vrot.lane.b32.xlu0 %v421, 64
      %v4687 = vpop.permute.xlu0 %4686
      %4688 = vrot.lane.b32.xlu0 %v427, 64
      %v4689 = vpop.permute.xlu0 %4688
      %4690 = vrot.lane.b32.xlu0 %v433, 64
      %v4691 = vpop.permute.xlu0 %4690
      %4692 = vrot.lane.b32.xlu0 %v439, 64
      %v4693 = vpop.permute.xlu0 %4692
      %4694 = vrot.lane.b32.xlu0 %v445, 64
      %v4695 = vpop.permute.xlu0 %4694
      %4696 = vrot.lane.b32.xlu0 %v451, 64
      %v4697 = vpop.permute.xlu0 %4696
      %4698 = vrot.lane.b32.xlu0 %v457, 64
      %v4699 = vpop.permute.xlu0 %4698
      %4700 = vrot.lane.b32.xlu0 %v463, 64
      %v4701 = vpop.permute.xlu0 %4700
      %v4719 = vsel %vm255, %v4650, 0
      %v4722 = vsel %vm255, %v4651, 0
      %v4725 = vsel %vm255, %v4652, 0
      %v4728 = vsel %vm255, %v4653, 0
      %v4731 = vsel %vm255, %v4654, 0
      %v4734 = vsel %vm255, %v4655, 0
      %v4737 = vsel %vm255, %v4656, 0
      %v4740 = vsel %vm255, %v4657, 0
      %v4743 = vsel %vm255, %v4658, 0
      %v4746 = vsel %vm255, %v4659, 0
      %v4749 = vsel %vm255, %v4660, 0
      %v4752 = vsel %vm255, %v4661, 0
      %v4755 = vsel %vm255, %v4662, 0
      %v4758 = vsel %vm255, %v4663, 0
      %v4761 = vsel %vm255, %v4664, 0
      %v4764 = vsel %vm255, %v4665, 0
      %4766 = vmatprep.subr.mxu0 0.0
      %4767 = vmatpush1.msra.mxu0 %v4666
      %4768 = vmatprep.subr.mxu0 0.0
      %4769 = vmatpush1.msra.mxu0 %v4667
      %4770 = vmatprep.subr.mxu0 0.0
      %4771 = vmatpush1.msra.mxu0 %v4668
      %4772 = vmatprep.subr.mxu0 0.0
      %4773 = vmatpush1.msra.mxu0 %v4669
      %4774 = vmatprep.subr.mxu0 0.0
      %4775 = vmatpush1.msra.mxu0 0.0
      %4776 = vmatprep.subr.mxu0 0.0
      %4777 = vmatpush1.msra.mxu0 0.0
      %4778 = vmatprep.subr.mxu0 0.0
      %4779 = vmatpush1.msra.mxu0 0.0
      %4780 = vmatprep.subr.mxu0 0.0
      %4781 = vmatpush1.msra.mxu0 0.0
      %4782 = vmatprep.subr.mxu0 0.0
      %4783 = vmatpush1.msra.mxu0 0.0
      %4784 = vmatprep.subr.mxu0 0.0
      %4785 = vmatpush1.msra.mxu0 0.0
      %4786 = vmatprep.subr.mxu0 0.0
      %4787 = vmatpush1.msra.mxu0 0.0
      %4788 = vmatprep.subr.mxu0 0.0
      %4789 = vmatpush1.msra.mxu0 0.0
      %4790 = vmatprep.subr.mxu0 0.0
      %4791 = vmatpush1.msra.mxu0 0.0
      %4792 = vmatprep.subr.mxu0 0.0
      %4793 = vmatpush1.msra.mxu0 0.0
      %4794 = vmatprep.subr.mxu0 0.0
      %4795 = vmatpush1.msra.mxu0 0.0
      %4796 = vmatprep.subr.mxu0 0.0
      %4797 = vmatpush1.msra.mxu0 0.0
      %4798 = vmatprep.subr.mxu0 0.0
      %4799 = vmatpush1.msra.mxu0 0.0
      %4800 = vmatprep.subr.mxu0 0.0
      %4801 = vmatpush1.msra.mxu0 0.0
      %4802 = vmatprep.subr.mxu0 0.0
      %4803 = vmatpush1.msra.mxu0 0.0
      %4804 = vmatprep.subr.mxu0 0.0
      %4805 = vmatpush1.msra.mxu0 0.0
      %4806 = vmatprep.subr.mxu0 0.0
      %4807 = vmatpush1.msra.mxu0 0.0
      %4808 = vmatprep.subr.mxu0 0.0
      %4809 = vmatpush1.msra.mxu0 0.0
      %4810 = vmatprep.subr.mxu0 0.0
      %4811 = vmatpush1.msra.mxu0 0.0
      %4812 = vmatprep.subr.mxu0 0.0
      %4813 = vmatpush1.msra.mxu0 0.0
      %4814 = vmatprep.subr.mxu0 0.0
      %4815 = vmatpush1.msra.mxu0 0.0
      %4816 = vmatprep.subr.mxu0 0.0
      %4817 = vmatpush1.msra.mxu0 0.0
      %4818 = vmatprep.subr.mxu0 0.0
      %4819 = vmatpush1.msra.mxu0 0.0
      %4820 = vmatprep.subr.mxu0 0.0
      %4821 = vmatpush1.msra.mxu0 0.0
      %4822 = vmatprep.subr.mxu0 0.0
      %4823 = vmatpush1.msra.mxu0 0.0
      %4824 = vmatprep.subr.mxu0 0.0
      %4825 = vmatpush1.msra.mxu0 0.0
      %4826 = vmatprep.subr.mxu0 0.0
      %4827 = vmatpush1.msra.mxu0 0.0
      %4828 = vmatprep.subr.mxu0 0.0
      %4829 = vmatpush1.msra.mxu0 0.0
      %4830 = vmatprep.mubr.f32.mxu0 0.0
      %4831 = vmatmul.mubr.f32.gmra.mrb[0].mxu0 %v4719
      %v4832 = vpop.f32.mrb[0].mxu0
      %v4833 = vadd.f32 %v4671, %v4832
      %v4834 = vpop.f32.mrb[0].mxu0
      %4835 = vmatprep.mubr.f32.mxu0 0.0
      %4836 = vmatmul.mubr.f32.gmra.mrb[0].mxu0 %v4722
      %v4837 = vpop.f32.mrb[0].mxu0
      %v4838 = vadd.f32 %v4673, %v4837
      %v4839 = vpop.f32.mrb[0].mxu0
      %4840 = vmatprep.mubr.f32.mxu0 0.0
      %4841 = vmatmul.mubr.f32.gmra.mrb[0].mxu0 %v4725
      %v4842 = vpop.f32.mrb[0].mxu0
      %v4843 = vadd.f32 %v4675, %v4842
      %v4844 = vpop.f32.mrb[0].mxu0
      %4845 = vmatprep.mubr.f32.mxu0 0.0
      %4846 = vmatmul.mubr.f32.gmra.mrb[0].mxu0 %v4728
      %v4847 = vpop.f32.mrb[0].mxu0
      %v4848 = vadd.f32 %v4677, %v4847
      %v4849 = vpop.f32.mrb[0].mxu0
      %4850 = vmatprep.mubr.f32.mxu0 0.0
      %4851 = vmatmul.mubr.f32.gmra.mrb[0].mxu0 %v4731
      %v4852 = vpop.f32.mrb[0].mxu0
      %v4853 = vadd.f32 %v4679, %v4852
      %v4854 = vpop.f32.mrb[0].mxu0
      %4855 = vmatprep.mubr.f32.mxu0 0.0
      %4856 = vmatmul.mubr.f32.gmra.mrb[0].mxu0 %v4734
      %v4857 = vpop.f32.mrb[0].mxu0
      %v4858 = vadd.f32 %v4681, %v4857
      %v4859 = vpop.f32.mrb[0].mxu0
      %4860 = vmatprep.mubr.f32.mxu0 0.0
      %4861 = vmatmul.mubr.f32.gmra.mrb[0].mxu0 %v4737
      %v4862 = vpop.f32.mrb[0].mxu0
      %v4863 = vadd.f32 %v4683, %v4862
      %v4864 = vpop.f32.mrb[0].mxu0
      %4865 = vmatprep.mubr.f32.mxu0 0.0
      %4866 = vmatmul.mubr.f32.gmra.mrb[0].mxu0 %v4740
      %v4867 = vpop.f32.mrb[0].mxu0
      %v4868 = vadd.f32 %v4685, %v4867
      %v4869 = vpop.f32.mrb[0].mxu0
      %4870 = vmatprep.mubr.f32.mxu0 0.0
      %4871 = vmatmul.mubr.f32.gmra.mrb[0].mxu0 %v4743
      %v4872 = vpop.f32.mrb[0].mxu0
      %v4873 = vadd.f32 %v4687, %v4872
      %v4874 = vpop.f32.mrb[0].mxu0
      %4875 = vmatprep.mubr.f32.mxu0 0.0
      %4876 = vmatmul.mubr.f32.gmra.mrb[0].mxu0 %v4746
      %v4877 = vpop.f32.mrb[0].mxu0
      %v4878 = vadd.f32 %v4689, %v4877
      %v4879 = vpop.f32.mrb[0].mxu0
      %4880 = vmatprep.mubr.f32.mxu0 0.0
      %4881 = vmatmul.mubr.f32.gmra.mrb[0].mxu0 %v4749
      %v4882 = vpop.f32.mrb[0].mxu0
      %v4883 = vadd.f32 %v4691, %v4882
      %v4884 = vpop.f32.mrb[0].mxu0
      %4885 = vmatprep.mubr.f32.mxu0 0.0
      %4886 = vmatmul.mubr.f32.gmra.mrb[0].mxu0 %v4752
      %v4887 = vpop.f32.mrb[0].mxu0
      %v4888 = vadd.f32 %v4693, %v4887
      %v4889 = vpop.f32.mrb[0].mxu0
      %4890 = vmatprep.mubr.f32.mxu0 0.0
      %4891 = vmatmul.mubr.f32.gmra.mrb[0].mxu0 %v4755
      %v4892 = vpop.f32.mrb[0].mxu0
      %v4893 = vadd.f32 %v4695, %v4892
      %v4894 = vpop.f32.mrb[0].mxu0
      %4895 = vmatprep.mubr.f32.mxu0 0.0
      %4896 = vmatmul.mubr.f32.gmra.mrb[0].mxu0 %v4758
      %v4897 = vpop.f32.mrb[0].mxu0
      %v4898 = vadd.f32 %v4697, %v4897
      %v4899 = vpop.f32.mrb[0].mxu0
      %4900 = vmatprep.mubr.f32.mxu0 0.0
      %4901 = vmatmul.mubr.f32.gmra.mrb[0].mxu0 %v4761
      %v4902 = vpop.f32.mrb[0].mxu0
      %v4903 = vadd.f32 %v4699, %v4902
      %v4904 = vpop.f32.mrb[0].mxu0
      %4905 = vmatprep.mubr.f32.mxu0 0.0
      %4906 = vmatmul.mubr.f32.gmra.mrb[0].mxu0 %v4764
      %v4907 = vpop.f32.mrb[0].mxu0
      %v4908 = vadd.f32 %v4701, %v4907
      %v4909 = vpop.f32.mrb[0].mxu0
      %4910 = vdwg.mxu0
      %vm4911 = vcmask 64512
      %4912 = vst.msk [vmem:[%s199] sm:$0xff] %vm4911, %v4833
      %4913 = vst.msk [vmem:[%s199 + $0x8] sm:$0xff] %vm4911, %v4838
      %4914 = vst.msk [vmem:[%s199 + $0x10] sm:$0xff] %vm4911, %v4843
      %4915 = vst.msk [vmem:[%s199 + $0x18] sm:$0xff] %vm4911, %v4848
      %4916 = vst.msk [vmem:[%s199 + $0x20] sm:$0xff] %vm4911, %v4853
      %4917 = vst.msk [vmem:[%s199 + $0x28] sm:$0xff] %vm4911, %v4858
      %4918 = vst.msk [vmem:[%s199 + $0x30] sm:$0xff] %vm4911, %v4863
      %4919 = vst.msk [vmem:[%s199 + $0x38] sm:$0xff] %vm4911, %v4868
      %4920 = vst.msk [vmem:[%s199 + $0x40] sm:$0xff] %vm4911, %v4873
      %4921 = vst.msk [vmem:[%s199 + $0x48] sm:$0xff] %vm4911, %v4878
      %4922 = vst.msk [vmem:[%s199 + $0x50] sm:$0xff] %vm4911, %v4883
      %4923 = vst.msk [vmem:[%s199 + $0x58] sm:$0xff] %vm4911, %v4888
      %4924 = vst.msk [vmem:[%s199 + $0x60] sm:$0xff] %vm4911, %v4893
      %4925 = vst.msk [vmem:[%s199 + $0x68] sm:$0xff] %vm4911, %v4898
      %4926 = vst.msk [vmem:[%s199 + $0x70] sm:$0xff] %vm4911, %v4903
      %4927 = vst.msk [vmem:[%s199 + $0x78] sm:$0xff] %vm4911, %v4908
      %s4928 = smul.u32 16, %s15
      %p4929 = scmp.lt.s32.totalorder %s4928, 63
      %s4930 = scalar_select %p4929, %s4928, 63
      %s4931 = smul.addr %s4930, 8
      %s4932 = scalar_lea.vmem %s4, %s4931
      // Predicated region
      $region37: #{model_mlp_forward.1} parent=35 // pred_check
        %p4933 = pneg %p122
      $region38: #{model_mlp_forward.1} parent=35 // pred_check_branch
        %4935 = sbr.rel (%p4933) target = $region40
      $region39: #{model_mlp_forward.1} parent=35 // pred_region
        %s4936 = smul.u32 16, %s15
      $region40: #{model_mlp_forward.1} parent=35 // pred_fallthru
        _
    $region36: #{model_mlp_forward.1} parent=5 // pred_fallthru
      _
    %p4937 = scmp.le.s32.totalorder 2, %s10
    // Predicated region
    $region41: #{model_mlp_forward.1} parent=5 // pred_check
      %p4938 = pneg %p4937
    $region42: #{model_mlp_forward.1} parent=5 // pred_check_branch
      %4940 = sbr.rel (%p4938) target = $region44
    $region43: #{model_mlp_forward.1} parent=5 // pred_region
      %s4941 = ssub.s32 %s10, 2
      // Predicated region
      $region45: #{model_mlp_forward.1} parent=43 // pred_check
        %p4942 = pneg %p128
      $region46: #{model_mlp_forward.1} parent=43 // pred_check_branch
        %4944 = sbr.rel (%p4942) target = $region48
      $region47: #{model_mlp_forward.1} parent=43 // pred_region
        %s4945 = smul.u32 16, %s16
        %p4946 = scmp.lt.s32.totalorder %s4945, 63
        %s4947 = scalar_select %p4946, %s4945, 63
        %s4948 = smul.addr %s4947, 8
        %s4949 = scalar_lea.vmem %s4, %s4948
      $region48: #{model_mlp_forward.1} parent=43 // pred_fallthru
        _
    $region44: #{model_mlp_forward.1} parent=5 // pred_fallthru
      _
  $region6: #{model_mlp_forward.1} parent=0 // loop_footer
    %s14 = sadd.s32 1, %s10
  $region7: #{model_mlp_forward.1} parent=0 // loop_footer_branch
    %9 = sbr.rel target = $region3
  $region8: #{model_mlp_forward.1} parent=0 // loop_exit
    _

</llo_original>
